<compile_context>
chip_gen: v7x
topology: tpu7x:2x2x1
jax: 0.10.0
libtpu: 0.0.40
codegen_flags: <defaults>
</compile_context>

<pallas_src>
import jax
import jax.numpy as jnp
from jax import lax
from jax.experimental import pallas as pl
from jax.experimental.pallas import tpu as pltpu

N_IN = 75        # input feature size per frame
N_EMB = 100      # n_embeddings
WIN = 7          # sliding_window_size (conv kernel size)
N_CONV = 60      # n_conv_filters
N_HID = 20       # n_rnn_hidden
N_CLS = 2


def _kernel(lens_ref,                         # (B_tile, 1) int32 VMEM
            x_ref,                            # (T, B_tile, 75) VMEM (time-major)
            w_eff_ref, b_eff_ref,             # (7, 75, 60), (1, 60)  fused mat+conv
            w_ihf_ref, b_ihf_ref,             # fwd RNN input proj (60, 20), (1, 20)
            w_hhf_ref, b_hhf_ref,             # fwd RNN recurrent  (20, 20), (1, 20)
            w_ihb_ref, b_bwd_ref,             # bwd RNN input proj (60, 20), (1, 20)
            w_clsf_ref, w_clsb_ref, b_cls_ref,  # classifier (20,2),(20,2),(1,2)
            out_ref,                          # (B_tile, 2)
            pre_f_ref, pre_b_ref):            # scratch (T_out, B_tile, 20) x2
    T, Bt, _ = x_ref.shape
    T_out = T - WIN + 1

    # ---- Conv1d with the embedding Linear pre-fused into its weights ------
    # conv[t] = sum_k x[t+k] @ W_eff[k] + b_eff  (time-major: the k-shift is a
    # cheap leading-dim slice; every matmul has M = T_out*Bt rows).
    conv = jnp.broadcast_to(b_eff_ref[...], (T_out * Bt, N_CONV))
    for k in range(WIN):                       # static unroll, WIN = 7
        xk = x_ref[pl.ds(k, T_out), :, :]      # (T_out, Bt, 75)
        conv = conv + jnp.dot(xk.reshape(T_out * Bt, N_IN), w_eff_ref[k],
                              preferred_element_type=jnp.float32)

    # ---- RNN input projections hoisted out of the recurrence --------------
    pre_f = jnp.dot(conv, w_ihf_ref[...],
                    preferred_element_type=jnp.float32) + b_ihf_ref[...]
    pre_b = jnp.dot(conv, w_ihb_ref[...],
                    preferred_element_type=jnp.float32) + b_bwd_ref[...]
    pre_f_ref[...] = pre_f.reshape(T_out, Bt, N_HID)   # layout-preserving (Bt%8==0)
    pre_b_ref[...] = pre_b.reshape(T_out, Bt, N_HID)

    # Valid length after the conv: L = lens - WIN + 1, per sample in the tile.
    L = lens_ref[...] - (WIN - 1)              # (Bt, 1) int32

    w_hhf = w_hhf_ref[...]
    b_hhf = b_hhf_ref[...]

    def step(t, carry):
        h, hb = carry                                          # (Bt, 20) each
        h_new = jnp.tanh(pre_f_ref[t]
                         + jnp.dot(h, w_hhf, preferred_element_type=jnp.float32)
                         + b_hhf)
        h = jnp.where(t < L, h_new, h)          # masked forward carry
        hb = jnp.where(t == L - 1, pre_b_ref[t], hb)  # bwd pre-act @ last step
        return h, hb

    h0 = jnp.zeros((Bt, N_HID), jnp.float32)
    h_fwd, hb_pre = lax.fori_loop(0, T_out, step, (h0, h0), unroll=True)

    # Backward direction at the last valid step = one step from h0 = 0
    # (W_hh_reverse @ 0 == 0, so only the input projection + biases matter).
    h_bwd = jnp.tanh(hb_pre)

    # Classifier: st = [h_fwd, h_bwd]; split W_cls to avoid a lane-concat.
    logits = (jnp.dot(h_fwd, w_clsf_ref[...], preferred_element_type=jnp.float32)
              + jnp.dot(h_bwd, w_clsb_ref[...], preferred_element_type=jnp.float32)
              + b_cls_ref[...])
    out_ref[...] = logits                       # single (Bt, 2) store per tile


def _full_spec(arr):
    nd = arr.ndim
    return pl.BlockSpec(arr.shape, lambda i, nd=nd: (0,) * nd)


def _round_up(n, m):
    return ((n + m - 1) // m) * m


def init_params(key):
    ks = jax.random.split(key, 16)
    s = 0.1
    p = {
        # already transposed to "x @ W" layout
        "w_mat": jax.random.normal(ks[0], (N_IN, N_EMB), jnp.float32) * s,
        "b_mat": jax.random.normal(ks[1], (1, N_EMB), jnp.float32) * s,
        # conv weight as (k, in, out)
        "w_conv": jax.random.normal(ks[2], (WIN, N_EMB, N_CONV), jnp.float32) * s,
        "b_conv": jax.random.normal(ks[3], (1, N_CONV), jnp.float32) * s,
        # forward RNN direction
        "w_ihf": jax.random.normal(ks[4], (N_CONV, N_HID), jnp.float32) * s,
        "b_ihf": jax.random.normal(ks[5], (1, N_HID), jnp.float32) * s,
        "w_hhf": jax.random.normal(ks[6], (N_HID, N_HID), jnp.float32) * s,
        "b_hhf": jax.random.normal(ks[7], (1, N_HID), jnp.float32) * s,
        # reverse RNN direction (w_hhb is initialized but never affects the
        # output: the reverse hidden used is one step from h0 = 0)
        "w_ihb": jax.random.normal(ks[8], (N_CONV, N_HID), jnp.float32) * s,
        "b_ihb": jax.random.normal(ks[9], (1, N_HID), jnp.float32) * s,
        "w_hhb": jax.random.normal(ks[10], (N_HID, N_HID), jnp.float32) * s,
        "b_hhb": jax.random.normal(ks[11], (1, N_HID), jnp.float32) * s,
        # classifier
        "w_cls": jax.random.normal(ks[12], (2 * N_HID, N_CLS), jnp.float32) * s,
        "b_cls": jax.random.normal(ks[13], (1, N_CLS), jnp.float32) * s,
    }
    return p


@jax.jit
def model_forward(x, x_lens, params):
    """x: (B, T, 75) float32, x_lens: (B,) int with WIN <= len <= T."""
    B, T, _ = x.shape
    assert T >= WIN, "sequence length must be >= sliding window size"
    T_out = T - WIN + 1

    # ---- fold the embedding Linear into the conv (tiny wrapper-side prep) --
    w_eff = jnp.einsum("fe,keo->kfo", params["w_mat"], params["w_conv"])  # (7,75,60)
    b_eff = params["b_conv"] + jnp.einsum(
        "e,keo->o", params["b_mat"][0], params["w_conv"])[None, :]        # (1,60)
    b_bwd = params["b_ihb"] + params["b_hhb"]                             # (1,20)
    w_clsf = params["w_cls"][:N_HID]                                      # (20,2)
    w_clsb = params["w_cls"][N_HID:]                                      # (20,2)

    weights = [w_eff, b_eff,
               params["w_ihf"], params["b_ihf"],
               params["w_hhf"], params["b_hhf"],
               params["w_ihb"], b_bwd,
               w_clsf, w_clsb, params["b_cls"]]

    # ---- batch tiling: process B_tile samples per grid step ---------------
    B_tile = min(128, _round_up(B, 8))
    B_pad = _round_up(B, B_tile)

    x_tm = jnp.transpose(x.astype(jnp.float32), (1, 0, 2))     # (T, B, 75)
    lens = x_lens.astype(jnp.int32)
    if B_pad != B:
        x_tm = jnp.pad(x_tm, ((0, 0), (0, B_pad - B), (0, 0)))
        lens = jnp.pad(lens, (0, B_pad - B), constant_values=WIN)  # L = 1 for pads
    lens = lens.reshape(B_pad, 1)

    lens_spec = pl.BlockSpec((B_tile, 1), lambda i: (i, 0))
    x_spec = pl.BlockSpec((T, B_tile, N_IN), lambda i: (0, i, 0))
    out_spec = pl.BlockSpec((B_tile, N_CLS), lambda i: (i, 0))

    grid_spec = pltpu.PrefetchScalarGridSpec(
        num_scalar_prefetch=0,
        grid=(B_pad // B_tile,),
        in_specs=[lens_spec, x_spec] + [_full_spec(w) for w in weights],
        out_specs=out_spec,
        scratch_shapes=[pltpu.VMEM((T_out, B_tile, N_HID), jnp.float32),
                        pltpu.VMEM((T_out, B_tile, N_HID), jnp.float32)],
    )
    out = pl.pallas_call(
        _kernel,
        out_shape=jax.ShapeDtypeStruct((B_pad, N_CLS), jnp.float32),
        grid_spec=grid_spec,
        compiler_params=pltpu.CompilerParams(
            dimension_semantics=("parallel",)),   # batch tiles independent
    )(lens, x_tm, *weights)
    return out[:B]                                              # (B, 2) logits


def _reference_forward(x, x_lens, p):
    """Pure-JAX mirror of the PyTorch forward, for a correctness check."""
    B, T, _ = x.shape
    T_out = T - WIN + 1
    emb = x @ p["w_mat"] + p["b_mat"]                           # (B, T, 100)
    conv = jnp.zeros((B, T_out, N_CONV), jnp.float32) + p["b_conv"]
    for k in range(WIN):
        conv = conv + emb[:, k:k + T_out, :] @ p["w_conv"][k]
    L = x_lens.astype(jnp.int32) - (WIN - 1)                    # (B,)

    w_ihf, b_ihf = p["w_ihf"], p["b_ihf"][0]
    w_hhf, b_hhf = p["w_hhf"], p["b_hhf"][0]

    def per_sample(conv_b, l):
        valid = jnp.arange(T_out) < l

        def scan_step(h, inp):
            x_t, v = inp
            h_new = jnp.tanh(x_t @ w_ihf + b_ihf + h @ w_hhf + b_hhf)
            return jnp.where(v, h_new, h), None

        h_fwd, _ = lax.scan(scan_step, jnp.zeros((N_HID,), jnp.float32),
                            (conv_b, valid))
        x_last = conv_b[l - 1]
        h_bwd = jnp.tanh(x_last @ p["w_ihb"] + p["b_ihb"][0] + p["b_hhb"][0])
        st = jnp.concatenate([h_fwd, h_bwd])
        return st @ p["w_cls"] + p["b_cls"][0]

    return jax.vmap(per_sample)(conv, L)


if __name__ == "__main__":
    key = jax.random.PRNGKey(0)
    k_x, _ = jax.random.split(key)

    B, T = 2, 16
    x = jax.random.normal(k_x, (B, T, N_IN), jnp.float32)
    x_lens = jnp.array([16, 12], dtype=jnp.int32)   # original (pre-conv) lengths

    params = init_params(jax.random.PRNGKey(42))

    logits = model_forward(x, x_lens, params)
    jax.block_until_ready(logits)
    assert logits.shape == (B, 2) and logits.dtype == jnp.float32

    # sanity-check against a pure-JAX reference (loose tol covers MXU rounding)
    ref = _reference_forward(x, x_lens, params)
    err = float(jnp.max(jnp.abs(logits - ref)))
    assert err < 1e-2, f"kernel/reference mismatch: max abs err = {err}"

    print("KERNEL_OK")
</pallas_src>

<mosaic_0001>
module attributes {stable_mosaic.version = 11 : i64} {
  func.func @_kernel(%arg0: i32, %arg1: memref<8x1xi32, #tpu.memory_space<vmem>>, %arg2: memref<16x8x75xf32, #tpu.memory_space<vmem>>, %arg3: memref<7x75x60xf32, #tpu.memory_space<vmem>>, %arg4: memref<1x60xf32, #tpu.memory_space<vmem>>, %arg5: memref<60x20xf32, #tpu.memory_space<vmem>>, %arg6: memref<1x20xf32, #tpu.memory_space<vmem>>, %arg7: memref<20x20xf32, #tpu.memory_space<vmem>>, %arg8: memref<1x20xf32, #tpu.memory_space<vmem>>, %arg9: memref<60x20xf32, #tpu.memory_space<vmem>>, %arg10: memref<1x20xf32, #tpu.memory_space<vmem>>, %arg11: memref<20x2xf32, #tpu.memory_space<vmem>>, %arg12: memref<20x2xf32, #tpu.memory_space<vmem>>, %arg13: memref<1x2xf32, #tpu.memory_space<vmem>>, %arg14: memref<8x2xf32, #tpu.memory_space<vmem>>, %arg15: memref<10x8x20xf32, #tpu.memory_space<vmem>>, %arg16: memref<10x8x20xf32, #tpu.memory_space<vmem>>) attributes {dimension_semantics = [#tpu.dimension_semantics<parallel>], iteration_bounds = array<i64: 1>, scalar_prefetch = 0 : i64, scratch_operands = 2 : i64, tpu.core_type = #tpu.core_type<tc>, window_params = [{transform_indices = @transform_0, window_bounds = array<i64: 8, 1>}, {transform_indices = @transform_1, window_bounds = array<i64: 16, 8, 75>}, {pipeline_mode = #tpu.pipeline_mode<synchronous>, transform_indices = @transform_2, window_bounds = array<i64: 7, 75, 60>}, {pipeline_mode = #tpu.pipeline_mode<synchronous>, transform_indices = @transform_3, window_bounds = array<i64: 1, 60>}, {pipeline_mode = #tpu.pipeline_mode<synchronous>, transform_indices = @transform_4, window_bounds = array<i64: 60, 20>}, {pipeline_mode = #tpu.pipeline_mode<synchronous>, transform_indices = @transform_5, window_bounds = array<i64: 1, 20>}, {pipeline_mode = #tpu.pipeline_mode<synchronous>, transform_indices = @transform_6, window_bounds = array<i64: 20, 20>}, {pipeline_mode = #tpu.pipeline_mode<synchronous>, transform_indices = @transform_7, window_bounds = array<i64: 1, 20>}, {pipeline_mode = #tpu.pipeline_mode<synchronous>, transform_indices = @transform_8, window_bounds = array<i64: 60, 20>}, {pipeline_mode = #tpu.pipeline_mode<synchronous>, transform_indices = @transform_9, window_bounds = array<i64: 1, 20>}, {pipeline_mode = #tpu.pipeline_mode<synchronous>, transform_indices = @transform_10, window_bounds = array<i64: 20, 2>}, {pipeline_mode = #tpu.pipeline_mode<synchronous>, transform_indices = @transform_11, window_bounds = array<i64: 20, 2>}, {pipeline_mode = #tpu.pipeline_mode<synchronous>, transform_indices = @transform_12, window_bounds = array<i64: 1, 2>}, {transform_indices = @transform_13, window_bounds = array<i64: 8, 2>}]} {
    %c0 = arith.constant 0 : index
    %c0_0 = arith.constant 0 : index
    %0 = vector.load %arg4[%c0, %c0_0] : memref<1x60xf32, #tpu.memory_space<vmem>>, vector<1x60xf32>
    %1 = vector.shape_cast %0 : vector<1x60xf32> to vector<1x60xf32>
    %2 = vector.broadcast %1 : vector<1x60xf32> to vector<80x60xf32>
    %c0_1 = arith.constant 0 : index
    %c0_2 = arith.constant 0 : index
    %c0_3 = arith.constant 0 : index
    %3 = vector.load %arg2[%c0_1, %c0_2, %c0_3] : memref<16x8x75xf32, #tpu.memory_space<vmem>>, vector<10x8x75xf32>
    %4 = vector.shape_cast %3 : vector<10x8x75xf32> to vector<80x75xf32>
    %c0_4 = arith.constant 0 : index
    %c0_5 = arith.constant 0 : index
    %c0_6 = arith.constant 0 : index
    %5 = vector.load %arg3[%c0_4, %c0_5, %c0_6] : memref<7x75x60xf32, #tpu.memory_space<vmem>>, vector<1x75x60xf32>
    %6 = vector.shape_cast %5 : vector<1x75x60xf32> to vector<75x60xf32>
    %cst = arith.constant dense<0.000000e+00> : vector<80x60xf32>
    %7 = tpu.matmul %4, %6, %cst {dimension_numbers = #tpu.dot_dimension_numbers<[1], [0], [0], [1], [0, 0, 1, 1], [], []>} : vector<80x75xf32>, vector<75x60xf32>, vector<80x60xf32> -> vector<80x60xf32>
    %8 = arith.addf %2, %7 : vector<80x60xf32>
    %c1 = arith.constant 1 : index
    %c0_7 = arith.constant 0 : index
    %c0_8 = arith.constant 0 : index
    %9 = vector.load %arg2[%c1, %c0_7, %c0_8] : memref<16x8x75xf32, #tpu.memory_space<vmem>>, vector<10x8x75xf32>
    %10 = vector.shape_cast %9 : vector<10x8x75xf32> to vector<80x75xf32>
    %c1_9 = arith.constant 1 : index
    %c0_10 = arith.constant 0 : index
    %c0_11 = arith.constant 0 : index
    %11 = vector.load %arg3[%c1_9, %c0_10, %c0_11] : memref<7x75x60xf32, #tpu.memory_space<vmem>>, vector<1x75x60xf32>
    %12 = vector.shape_cast %11 : vector<1x75x60xf32> to vector<75x60xf32>
    %cst_12 = arith.constant dense<0.000000e+00> : vector<80x60xf32>
    %13 = tpu.matmul %10, %12, %cst_12 {dimension_numbers = #tpu.dot_dimension_numbers<[1], [0], [0], [1], [0, 0, 1, 1], [], []>} : vector<80x75xf32>, vector<75x60xf32>, vector<80x60xf32> -> vector<80x60xf32>
    %14 = arith.addf %8, %13 : vector<80x60xf32>
    %c2 = arith.constant 2 : index
    %c0_13 = arith.constant 0 : index
    %c0_14 = arith.constant 0 : index
    %15 = vector.load %arg2[%c2, %c0_13, %c0_14] : memref<16x8x75xf32, #tpu.memory_space<vmem>>, vector<10x8x75xf32>
    %16 = vector.shape_cast %15 : vector<10x8x75xf32> to vector<80x75xf32>
    %c2_15 = arith.constant 2 : index
    %c0_16 = arith.constant 0 : index
    %c0_17 = arith.constant 0 : index
    %17 = vector.load %arg3[%c2_15, %c0_16, %c0_17] : memref<7x75x60xf32, #tpu.memory_space<vmem>>, vector<1x75x60xf32>
    %18 = vector.shape_cast %17 : vector<1x75x60xf32> to vector<75x60xf32>
    %cst_18 = arith.constant dense<0.000000e+00> : vector<80x60xf32>
    %19 = tpu.matmul %16, %18, %cst_18 {dimension_numbers = #tpu.dot_dimension_numbers<[1], [0], [0], [1], [0, 0, 1, 1], [], []>} : vector<80x75xf32>, vector<75x60xf32>, vector<80x60xf32> -> vector<80x60xf32>
    %20 = arith.addf %14, %19 : vector<80x60xf32>
    %c3 = arith.constant 3 : index
    %c0_19 = arith.constant 0 : index
    %c0_20 = arith.constant 0 : index
    %21 = vector.load %arg2[%c3, %c0_19, %c0_20] : memref<16x8x75xf32, #tpu.memory_space<vmem>>, vector<10x8x75xf32>
    %22 = vector.shape_cast %21 : vector<10x8x75xf32> to vector<80x75xf32>
    %c3_21 = arith.constant 3 : index
    %c0_22 = arith.constant 0 : index
    %c0_23 = arith.constant 0 : index
    %23 = vector.load %arg3[%c3_21, %c0_22, %c0_23] : memref<7x75x60xf32, #tpu.memory_space<vmem>>, vector<1x75x60xf32>
    %24 = vector.shape_cast %23 : vector<1x75x60xf32> to vector<75x60xf32>
    %cst_24 = arith.constant dense<0.000000e+00> : vector<80x60xf32>
    %25 = tpu.matmul %22, %24, %cst_24 {dimension_numbers = #tpu.dot_dimension_numbers<[1], [0], [0], [1], [0, 0, 1, 1], [], []>} : vector<80x75xf32>, vector<75x60xf32>, vector<80x60xf32> -> vector<80x60xf32>
    %26 = arith.addf %20, %25 : vector<80x60xf32>
    %c4 = arith.constant 4 : index
    %c0_25 = arith.constant 0 : index
    %c0_26 = arith.constant 0 : index
    %27 = vector.load %arg2[%c4, %c0_25, %c0_26] : memref<16x8x75xf32, #tpu.memory_space<vmem>>, vector<10x8x75xf32>
    %28 = vector.shape_cast %27 : vector<10x8x75xf32> to vector<80x75xf32>
    %c4_27 = arith.constant 4 : index
    %c0_28 = arith.constant 0 : index
    %c0_29 = arith.constant 0 : index
    %29 = vector.load %arg3[%c4_27, %c0_28, %c0_29] : memref<7x75x60xf32, #tpu.memory_space<vmem>>, vector<1x75x60xf32>
    %30 = vector.shape_cast %29 : vector<1x75x60xf32> to vector<75x60xf32>
    %cst_30 = arith.constant dense<0.000000e+00> : vector<80x60xf32>
    %31 = tpu.matmul %28, %30, %cst_30 {dimension_numbers = #tpu.dot_dimension_numbers<[1], [0], [0], [1], [0, 0, 1, 1], [], []>} : vector<80x75xf32>, vector<75x60xf32>, vector<80x60xf32> -> vector<80x60xf32>
    %32 = arith.addf %26, %31 : vector<80x60xf32>
    %c5 = arith.constant 5 : index
    %c0_31 = arith.constant 0 : index
    %c0_32 = arith.constant 0 : index
    %33 = vector.load %arg2[%c5, %c0_31, %c0_32] : memref<16x8x75xf32, #tpu.memory_space<vmem>>, vector<10x8x75xf32>
    %34 = vector.shape_cast %33 : vector<10x8x75xf32> to vector<80x75xf32>
    %c5_33 = arith.constant 5 : index
    %c0_34 = arith.constant 0 : index
    %c0_35 = arith.constant 0 : index
    %35 = vector.load %arg3[%c5_33, %c0_34, %c0_35] : memref<7x75x60xf32, #tpu.memory_space<vmem>>, vector<1x75x60xf32>
    %36 = vector.shape_cast %35 : vector<1x75x60xf32> to vector<75x60xf32>
    %cst_36 = arith.constant dense<0.000000e+00> : vector<80x60xf32>
    %37 = tpu.matmul %34, %36, %cst_36 {dimension_numbers = #tpu.dot_dimension_numbers<[1], [0], [0], [1], [0, 0, 1, 1], [], []>} : vector<80x75xf32>, vector<75x60xf32>, vector<80x60xf32> -> vector<80x60xf32>
    %38 = arith.addf %32, %37 : vector<80x60xf32>
    %c6 = arith.constant 6 : index
    %c0_37 = arith.constant 0 : index
    %c0_38 = arith.constant 0 : index
    %39 = vector.load %arg2[%c6, %c0_37, %c0_38] : memref<16x8x75xf32, #tpu.memory_space<vmem>>, vector<10x8x75xf32>
    %40 = vector.shape_cast %39 : vector<10x8x75xf32> to vector<80x75xf32>
    %c6_39 = arith.constant 6 : index
    %c0_40 = arith.constant 0 : index
    %c0_41 = arith.constant 0 : index
    %41 = vector.load %arg3[%c6_39, %c0_40, %c0_41] : memref<7x75x60xf32, #tpu.memory_space<vmem>>, vector<1x75x60xf32>
    %42 = vector.shape_cast %41 : vector<1x75x60xf32> to vector<75x60xf32>
    %cst_42 = arith.constant dense<0.000000e+00> : vector<80x60xf32>
    %43 = tpu.matmul %40, %42, %cst_42 {dimension_numbers = #tpu.dot_dimension_numbers<[1], [0], [0], [1], [0, 0, 1, 1], [], []>} : vector<80x75xf32>, vector<75x60xf32>, vector<80x60xf32> -> vector<80x60xf32>
    %44 = arith.addf %38, %43 : vector<80x60xf32>
    %c0_43 = arith.constant 0 : index
    %c0_44 = arith.constant 0 : index
    %45 = vector.load %arg5[%c0_43, %c0_44] : memref<60x20xf32, #tpu.memory_space<vmem>>, vector<60x20xf32>
    %cst_45 = arith.constant dense<0.000000e+00> : vector<80x20xf32>
    %46 = tpu.matmul %44, %45, %cst_45 {dimension_numbers = #tpu.dot_dimension_numbers<[1], [0], [0], [1], [0, 0, 1, 1], [], []>} : vector<80x60xf32>, vector<60x20xf32>, vector<80x20xf32> -> vector<80x20xf32>
    %c0_46 = arith.constant 0 : index
    %c0_47 = arith.constant 0 : index
    %47 = vector.load %arg6[%c0_46, %c0_47] : memref<1x20xf32, #tpu.memory_space<vmem>>, vector<1x20xf32>
    %48 = vector.broadcast %47 : vector<1x20xf32> to vector<80x20xf32>
    %49 = arith.addf %46, %48 : vector<80x20xf32>
    %c0_48 = arith.constant 0 : index
    %c0_49 = arith.constant 0 : index
    %50 = vector.load %arg9[%c0_48, %c0_49] : memref<60x20xf32, #tpu.memory_space<vmem>>, vector<60x20xf32>
    %cst_50 = arith.constant dense<0.000000e+00> : vector<80x20xf32>
    %51 = tpu.matmul %44, %50, %cst_50 {dimension_numbers = #tpu.dot_dimension_numbers<[1], [0], [0], [1], [0, 0, 1, 1], [], []>} : vector<80x60xf32>, vector<60x20xf32>, vector<80x20xf32> -> vector<80x20xf32>
    %c0_51 = arith.constant 0 : index
    %c0_52 = arith.constant 0 : index
    %52 = vector.load %arg10[%c0_51, %c0_52] : memref<1x20xf32, #tpu.memory_space<vmem>>, vector<1x20xf32>
    %53 = vector.broadcast %52 : vector<1x20xf32> to vector<80x20xf32>
    %54 = arith.addf %51, %53 : vector<80x20xf32>
    %55 = vector.shape_cast %49 : vector<80x20xf32> to vector<10x8x20xf32>
    %c0_53 = arith.constant 0 : index
    %c0_54 = arith.constant 0 : index
    %c0_55 = arith.constant 0 : index
    %56 = vector.load %arg15[%c0_53, %c0_54, %c0_55] : memref<10x8x20xf32, #tpu.memory_space<vmem>>, vector<10x8x20xf32>
    tpu.vector_store %arg15[%c0_53, %c0_54, %c0_55], %55 {strides = array<i32>} : memref<10x8x20xf32, #tpu.memory_space<vmem>>, vector<10x8x20xf32>,
    %57 = vector.shape_cast %54 : vector<80x20xf32> to vector<10x8x20xf32>
    %c0_56 = arith.constant 0 : index
    %c0_57 = arith.constant 0 : index
    %c0_58 = arith.constant 0 : index
    %58 = vector.load %arg16[%c0_56, %c0_57, %c0_58] : memref<10x8x20xf32, #tpu.memory_space<vmem>>, vector<10x8x20xf32>
    tpu.vector_store %arg16[%c0_56, %c0_57, %c0_58], %57 {strides = array<i32>} : memref<10x8x20xf32, #tpu.memory_space<vmem>>, vector<10x8x20xf32>,
    %c0_59 = arith.constant 0 : index
    %c0_60 = arith.constant 0 : index
    %59 = vector.load %arg1[%c0_59, %c0_60] : memref<8x1xi32, #tpu.memory_space<vmem>>, vector<8x1xi32>
    %c6_i32 = arith.constant 6 : i32
    %60 = vector.broadcast %c6_i32 : i32 to vector<8x1xi32>
    %61 = arith.subi %59, %60 : vector<8x1xi32>
    %c0_61 = arith.constant 0 : index
    %c0_62 = arith.constant 0 : index
    %62 = vector.load %arg7[%c0_61, %c0_62] : memref<20x20xf32, #tpu.memory_space<vmem>>, vector<20x20xf32>
    %c0_63 = arith.constant 0 : index
    %c0_64 = arith.constant 0 : index
    %63 = vector.load %arg8[%c0_63, %c0_64] : memref<1x20xf32, #tpu.memory_space<vmem>>, vector<1x20xf32>
    %cst_65 = arith.constant 0.000000e+00 : f32
    %64 = vector.broadcast %cst_65 : f32 to vector<8x20xf32>
    %c0_i32 = arith.constant 0 : i32
    %65 = arith.index_cast %c0_i32 : i32 to index
    %c0_66 = arith.constant 0 : index
    %c0_67 = arith.constant 0 : index
    %66 = vector.load %arg15[%65, %c0_66, %c0_67] : memref<10x8x20xf32, #tpu.memory_space<vmem>>, vector<1x8x20xf32>
    %67 = vector.shape_cast %66 : vector<1x8x20xf32> to vector<8x20xf32>
    %cst_68 = arith.constant dense<0.000000e+00> : vector<8x20xf32>
    %68 = tpu.matmul %64, %62, %cst_68 {dimension_numbers = #tpu.dot_dimension_numbers<[1], [0], [0], [1], [0, 0, 1, 1], [], []>} : vector<8x20xf32>, vector<20x20xf32>, vector<8x20xf32> -> vector<8x20xf32>
    %69 = arith.addf %67, %68 : vector<8x20xf32>
    %70 = vector.broadcast %63 : vector<1x20xf32> to vector<8x20xf32>
    %71 = arith.addf %69, %70 : vector<8x20xf32>
    %72 = math.tanh %71 : vector<8x20xf32>
    %73 = vector.broadcast %c0_i32 : i32 to vector<8x1xi32>
    %74 = arith.cmpi slt, %73, %61 : vector<8x1xi32>
    %75 = vector.shape_cast %74 : vector<8x1xi1> to vector<8x1xi1>
    %76 = vector.broadcast %75 : vector<8x1xi1> to vector<8x20xi1>
    %77 = arith.select %76, %72, %64 : vector<8x20xi1>, vector<8x20xf32>
    %c1_i32 = arith.constant 1 : i32
    %78 = vector.broadcast %c1_i32 : i32 to vector<8x1xi32>
    %79 = arith.subi %61, %78 : vector<8x1xi32>
    %80 = vector.broadcast %c0_i32 : i32 to vector<8x1xi32>
    %81 = arith.cmpi eq, %80, %79 : vector<8x1xi32>
    %82 = arith.index_cast %c0_i32 : i32 to index
    %c0_69 = arith.constant 0 : index
    %c0_70 = arith.constant 0 : index
    %83 = vector.load %arg16[%82, %c0_69, %c0_70] : memref<10x8x20xf32, #tpu.memory_space<vmem>>, vector<1x8x20xf32>
    %84 = vector.shape_cast %83 : vector<1x8x20xf32> to vector<8x20xf32>
    %85 = vector.shape_cast %81 : vector<8x1xi1> to vector<8x1xi1>
    %86 = vector.broadcast %85 : vector<8x1xi1> to vector<8x20xi1>
    %87 = arith.select %86, %84, %64 : vector<8x20xi1>, vector<8x20xf32>
    %c1_i32_71 = arith.constant 1 : i32
    %88 = arith.index_cast %c1_i32_71 : i32 to index
    %c0_72 = arith.constant 0 : index
    %c0_73 = arith.constant 0 : index
    %89 = vector.load %arg15[%88, %c0_72, %c0_73] : memref<10x8x20xf32, #tpu.memory_space<vmem>>, vector<1x8x20xf32>
    %90 = vector.shape_cast %89 : vector<1x8x20xf32> to vector<8x20xf32>
    %cst_74 = arith.constant dense<0.000000e+00> : vector<8x20xf32>
    %91 = tpu.matmul %77, %62, %cst_74 {dimension_numbers = #tpu.dot_dimension_numbers<[1], [0], [0], [1], [0, 0, 1, 1], [], []>} : vector<8x20xf32>, vector<20x20xf32>, vector<8x20xf32> -> vector<8x20xf32>
    %92 = arith.addf %90, %91 : vector<8x20xf32>
    %93 = vector.broadcast %63 : vector<1x20xf32> to vector<8x20xf32>
    %94 = arith.addf %92, %93 : vector<8x20xf32>
    %95 = math.tanh %94 : vector<8x20xf32>
    %96 = vector.broadcast %c1_i32_71 : i32 to vector<8x1xi32>
    %97 = arith.cmpi slt, %96, %61 : vector<8x1xi32>
    %98 = vector.shape_cast %97 : vector<8x1xi1> to vector<8x1xi1>
    %99 = vector.broadcast %98 : vector<8x1xi1> to vector<8x20xi1>
    %100 = arith.select %99, %95, %77 : vector<8x20xi1>, vector<8x20xf32>
    %c1_i32_75 = arith.constant 1 : i32
    %101 = vector.broadcast %c1_i32_75 : i32 to vector<8x1xi32>
    %102 = arith.subi %61, %101 : vector<8x1xi32>
    %103 = vector.broadcast %c1_i32_71 : i32 to vector<8x1xi32>
    %104 = arith.cmpi eq, %103, %102 : vector<8x1xi32>
    %105 = arith.index_cast %c1_i32_71 : i32 to index
    %c0_76 = arith.constant 0 : index
    %c0_77 = arith.constant 0 : index
    %106 = vector.load %arg16[%105, %c0_76, %c0_77] : memref<10x8x20xf32, #tpu.memory_space<vmem>>, vector<1x8x20xf32>
    %107 = vector.shape_cast %106 : vector<1x8x20xf32> to vector<8x20xf32>
    %108 = vector.shape_cast %104 : vector<8x1xi1> to vector<8x1xi1>
    %109 = vector.broadcast %108 : vector<8x1xi1> to vector<8x20xi1>
    %110 = arith.select %109, %107, %87 : vector<8x20xi1>, vector<8x20xf32>
    %c2_i32 = arith.constant 2 : i32
    %111 = arith.index_cast %c2_i32 : i32 to index
    %c0_78 = arith.constant 0 : index
    %c0_79 = arith.constant 0 : index
    %112 = vector.load %arg15[%111, %c0_78, %c0_79] : memref<10x8x20xf32, #tpu.memory_space<vmem>>, vector<1x8x20xf32>
    %113 = vector.shape_cast %112 : vector<1x8x20xf32> to vector<8x20xf32>
    %cst_80 = arith.constant dense<0.000000e+00> : vector<8x20xf32>
    %114 = tpu.matmul %100, %62, %cst_80 {dimension_numbers = #tpu.dot_dimension_numbers<[1], [0], [0], [1], [0, 0, 1, 1], [], []>} : vector<8x20xf32>, vector<20x20xf32>, vector<8x20xf32> -> vector<8x20xf32>
    %115 = arith.addf %113, %114 : vector<8x20xf32>
    %116 = vector.broadcast %63 : vector<1x20xf32> to vector<8x20xf32>
    %117 = arith.addf %115, %116 : vector<8x20xf32>
    %118 = math.tanh %117 : vector<8x20xf32>
    %119 = vector.broadcast %c2_i32 : i32 to vector<8x1xi32>
    %120 = arith.cmpi slt, %119, %61 : vector<8x1xi32>
    %121 = vector.shape_cast %120 : vector<8x1xi1> to vector<8x1xi1>
    %122 = vector.broadcast %121 : vector<8x1xi1> to vector<8x20xi1>
    %123 = arith.select %122, %118, %100 : vector<8x20xi1>, vector<8x20xf32>
    %c1_i32_81 = arith.constant 1 : i32
    %124 = vector.broadcast %c1_i32_81 : i32 to vector<8x1xi32>
    %125 = arith.subi %61, %124 : vector<8x1xi32>
    %126 = vector.broadcast %c2_i32 : i32 to vector<8x1xi32>
    %127 = arith.cmpi eq, %126, %125 : vector<8x1xi32>
    %128 = arith.index_cast %c2_i32 : i32 to index
    %c0_82 = arith.constant 0 : index
    %c0_83 = arith.constant 0 : index
    %129 = vector.load %arg16[%128, %c0_82, %c0_83] : memref<10x8x20xf32, #tpu.memory_space<vmem>>, vector<1x8x20xf32>
    %130 = vector.shape_cast %129 : vector<1x8x20xf32> to vector<8x20xf32>
    %131 = vector.shape_cast %127 : vector<8x1xi1> to vector<8x1xi1>
    %132 = vector.broadcast %131 : vector<8x1xi1> to vector<8x20xi1>
    %133 = arith.select %132, %130, %110 : vector<8x20xi1>, vector<8x20xf32>
    %c3_i32 = arith.constant 3 : i32
    %134 = arith.index_cast %c3_i32 : i32 to index
    %c0_84 = arith.constant 0 : index
    %c0_85 = arith.constant 0 : index
    %135 = vector.load %arg15[%134, %c0_84, %c0_85] : memref<10x8x20xf32, #tpu.memory_space<vmem>>, vector<1x8x20xf32>
    %136 = vector.shape_cast %135 : vector<1x8x20xf32> to vector<8x20xf32>
    %cst_86 = arith.constant dense<0.000000e+00> : vector<8x20xf32>
    %137 = tpu.matmul %123, %62, %cst_86 {dimension_numbers = #tpu.dot_dimension_numbers<[1], [0], [0], [1], [0, 0, 1, 1], [], []>} : vector<8x20xf32>, vector<20x20xf32>, vector<8x20xf32> -> vector<8x20xf32>
    %138 = arith.addf %136, %137 : vector<8x20xf32>
    %139 = vector.broadcast %63 : vector<1x20xf32> to vector<8x20xf32>
    %140 = arith.addf %138, %139 : vector<8x20xf32>
    %141 = math.tanh %140 : vector<8x20xf32>
    %142 = vector.broadcast %c3_i32 : i32 to vector<8x1xi32>
    %143 = arith.cmpi slt, %142, %61 : vector<8x1xi32>
    %144 = vector.shape_cast %143 : vector<8x1xi1> to vector<8x1xi1>
    %145 = vector.broadcast %144 : vector<8x1xi1> to vector<8x20xi1>
    %146 = arith.select %145, %141, %123 : vector<8x20xi1>, vector<8x20xf32>
    %c1_i32_87 = arith.constant 1 : i32
    %147 = vector.broadcast %c1_i32_87 : i32 to vector<8x1xi32>
    %148 = arith.subi %61, %147 : vector<8x1xi32>
    %149 = vector.broadcast %c3_i32 : i32 to vector<8x1xi32>
    %150 = arith.cmpi eq, %149, %148 : vector<8x1xi32>
    %151 = arith.index_cast %c3_i32 : i32 to index
    %c0_88 = arith.constant 0 : index
    %c0_89 = arith.constant 0 : index
    %152 = vector.load %arg16[%151, %c0_88, %c0_89] : memref<10x8x20xf32, #tpu.memory_space<vmem>>, vector<1x8x20xf32>
    %153 = vector.shape_cast %152 : vector<1x8x20xf32> to vector<8x20xf32>
    %154 = vector.shape_cast %150 : vector<8x1xi1> to vector<8x1xi1>
    %155 = vector.broadcast %154 : vector<8x1xi1> to vector<8x20xi1>
    %156 = arith.select %155, %153, %133 : vector<8x20xi1>, vector<8x20xf32>
    %c4_i32 = arith.constant 4 : i32
    %157 = arith.index_cast %c4_i32 : i32 to index
    %c0_90 = arith.constant 0 : index
    %c0_91 = arith.constant 0 : index
    %158 = vector.load %arg15[%157, %c0_90, %c0_91] : memref<10x8x20xf32, #tpu.memory_space<vmem>>, vector<1x8x20xf32>
    %159 = vector.shape_cast %158 : vector<1x8x20xf32> to vector<8x20xf32>
    %cst_92 = arith.constant dense<0.000000e+00> : vector<8x20xf32>
    %160 = tpu.matmul %146, %62, %cst_92 {dimension_numbers = #tpu.dot_dimension_numbers<[1], [0], [0], [1], [0, 0, 1, 1], [], []>} : vector<8x20xf32>, vector<20x20xf32>, vector<8x20xf32> -> vector<8x20xf32>
    %161 = arith.addf %159, %160 : vector<8x20xf32>
    %162 = vector.broadcast %63 : vector<1x20xf32> to vector<8x20xf32>
    %163 = arith.addf %161, %162 : vector<8x20xf32>
    %164 = math.tanh %163 : vector<8x20xf32>
    %165 = vector.broadcast %c4_i32 : i32 to vector<8x1xi32>
    %166 = arith.cmpi slt, %165, %61 : vector<8x1xi32>
    %167 = vector.shape_cast %166 : vector<8x1xi1> to vector<8x1xi1>
    %168 = vector.broadcast %167 : vector<8x1xi1> to vector<8x20xi1>
    %169 = arith.select %168, %164, %146 : vector<8x20xi1>, vector<8x20xf32>
    %c1_i32_93 = arith.constant 1 : i32
    %170 = vector.broadcast %c1_i32_93 : i32 to vector<8x1xi32>
    %171 = arith.subi %61, %170 : vector<8x1xi32>
    %172 = vector.broadcast %c4_i32 : i32 to vector<8x1xi32>
    %173 = arith.cmpi eq, %172, %171 : vector<8x1xi32>
    %174 = arith.index_cast %c4_i32 : i32 to index
    %c0_94 = arith.constant 0 : index
    %c0_95 = arith.constant 0 : index
    %175 = vector.load %arg16[%174, %c0_94, %c0_95] : memref<10x8x20xf32, #tpu.memory_space<vmem>>, vector<1x8x20xf32>
    %176 = vector.shape_cast %175 : vector<1x8x20xf32> to vector<8x20xf32>
    %177 = vector.shape_cast %173 : vector<8x1xi1> to vector<8x1xi1>
    %178 = vector.broadcast %177 : vector<8x1xi1> to vector<8x20xi1>
    %179 = arith.select %178, %176, %156 : vector<8x20xi1>, vector<8x20xf32>
    %c5_i32 = arith.constant 5 : i32
    %180 = arith.index_cast %c5_i32 : i32 to index
    %c0_96 = arith.constant 0 : index
    %c0_97 = arith.constant 0 : index
    %181 = vector.load %arg15[%180, %c0_96, %c0_97] : memref<10x8x20xf32, #tpu.memory_space<vmem>>, vector<1x8x20xf32>
    %182 = vector.shape_cast %181 : vector<1x8x20xf32> to vector<8x20xf32>
    %cst_98 = arith.constant dense<0.000000e+00> : vector<8x20xf32>
    %183 = tpu.matmul %169, %62, %cst_98 {dimension_numbers = #tpu.dot_dimension_numbers<[1], [0], [0], [1], [0, 0, 1, 1], [], []>} : vector<8x20xf32>, vector<20x20xf32>, vector<8x20xf32> -> vector<8x20xf32>
    %184 = arith.addf %182, %183 : vector<8x20xf32>
    %185 = vector.broadcast %63 : vector<1x20xf32> to vector<8x20xf32>
    %186 = arith.addf %184, %185 : vector<8x20xf32>
    %187 = math.tanh %186 : vector<8x20xf32>
    %188 = vector.broadcast %c5_i32 : i32 to vector<8x1xi32>
    %189 = arith.cmpi slt, %188, %61 : vector<8x1xi32>
    %190 = vector.shape_cast %189 : vector<8x1xi1> to vector<8x1xi1>
    %191 = vector.broadcast %190 : vector<8x1xi1> to vector<8x20xi1>
    %192 = arith.select %191, %187, %169 : vector<8x20xi1>, vector<8x20xf32>
    %c1_i32_99 = arith.constant 1 : i32
    %193 = vector.broadcast %c1_i32_99 : i32 to vector<8x1xi32>
    %194 = arith.subi %61, %193 : vector<8x1xi32>
    %195 = vector.broadcast %c5_i32 : i32 to vector<8x1xi32>
    %196 = arith.cmpi eq, %195, %194 : vector<8x1xi32>
    %197 = arith.index_cast %c5_i32 : i32 to index
    %c0_100 = arith.constant 0 : index
    %c0_101 = arith.constant 0 : index
    %198 = vector.load %arg16[%197, %c0_100, %c0_101] : memref<10x8x20xf32, #tpu.memory_space<vmem>>, vector<1x8x20xf32>
    %199 = vector.shape_cast %198 : vector<1x8x20xf32> to vector<8x20xf32>
    %200 = vector.shape_cast %196 : vector<8x1xi1> to vector<8x1xi1>
    %201 = vector.broadcast %200 : vector<8x1xi1> to vector<8x20xi1>
    %202 = arith.select %201, %199, %179 : vector<8x20xi1>, vector<8x20xf32>
    %c6_i32_102 = arith.constant 6 : i32
    %203 = arith.index_cast %c6_i32_102 : i32 to index
    %c0_103 = arith.constant 0 : index
    %c0_104 = arith.constant 0 : index
    %204 = vector.load %arg15[%203, %c0_103, %c0_104] : memref<10x8x20xf32, #tpu.memory_space<vmem>>, vector<1x8x20xf32>
    %205 = vector.shape_cast %204 : vector<1x8x20xf32> to vector<8x20xf32>
    %cst_105 = arith.constant dense<0.000000e+00> : vector<8x20xf32>
    %206 = tpu.matmul %192, %62, %cst_105 {dimension_numbers = #tpu.dot_dimension_numbers<[1], [0], [0], [1], [0, 0, 1, 1], [], []>} : vector<8x20xf32>, vector<20x20xf32>, vector<8x20xf32> -> vector<8x20xf32>
    %207 = arith.addf %205, %206 : vector<8x20xf32>
    %208 = vector.broadcast %63 : vector<1x20xf32> to vector<8x20xf32>
    %209 = arith.addf %207, %208 : vector<8x20xf32>
    %210 = math.tanh %209 : vector<8x20xf32>
    %211 = vector.broadcast %c6_i32_102 : i32 to vector<8x1xi32>
    %212 = arith.cmpi slt, %211, %61 : vector<8x1xi32>
    %213 = vector.shape_cast %212 : vector<8x1xi1> to vector<8x1xi1>
    %214 = vector.broadcast %213 : vector<8x1xi1> to vector<8x20xi1>
    %215 = arith.select %214, %210, %192 : vector<8x20xi1>, vector<8x20xf32>
    %c1_i32_106 = arith.constant 1 : i32
    %216 = vector.broadcast %c1_i32_106 : i32 to vector<8x1xi32>
    %217 = arith.subi %61, %216 : vector<8x1xi32>
    %218 = vector.broadcast %c6_i32_102 : i32 to vector<8x1xi32>
    %219 = arith.cmpi eq, %218, %217 : vector<8x1xi32>
    %220 = arith.index_cast %c6_i32_102 : i32 to index
    %c0_107 = arith.constant 0 : index
    %c0_108 = arith.constant 0 : index
    %221 = vector.load %arg16[%220, %c0_107, %c0_108] : memref<10x8x20xf32, #tpu.memory_space<vmem>>, vector<1x8x20xf32>
    %222 = vector.shape_cast %221 : vector<1x8x20xf32> to vector<8x20xf32>
    %223 = vector.shape_cast %219 : vector<8x1xi1> to vector<8x1xi1>
    %224 = vector.broadcast %223 : vector<8x1xi1> to vector<8x20xi1>
    %225 = arith.select %224, %222, %202 : vector<8x20xi1>, vector<8x20xf32>
    %c7_i32 = arith.constant 7 : i32
    %226 = arith.index_cast %c7_i32 : i32 to index
    %c0_109 = arith.constant 0 : index
    %c0_110 = arith.constant 0 : index
    %227 = vector.load %arg15[%226, %c0_109, %c0_110] : memref<10x8x20xf32, #tpu.memory_space<vmem>>, vector<1x8x20xf32>
    %228 = vector.shape_cast %227 : vector<1x8x20xf32> to vector<8x20xf32>
    %cst_111 = arith.constant dense<0.000000e+00> : vector<8x20xf32>
    %229 = tpu.matmul %215, %62, %cst_111 {dimension_numbers = #tpu.dot_dimension_numbers<[1], [0], [0], [1], [0, 0, 1, 1], [], []>} : vector<8x20xf32>, vector<20x20xf32>, vector<8x20xf32> -> vector<8x20xf32>
    %230 = arith.addf %228, %229 : vector<8x20xf32>
    %231 = vector.broadcast %63 : vector<1x20xf32> to vector<8x20xf32>
    %232 = arith.addf %230, %231 : vector<8x20xf32>
    %233 = math.tanh %232 : vector<8x20xf32>
    %234 = vector.broadcast %c7_i32 : i32 to vector<8x1xi32>
    %235 = arith.cmpi slt, %234, %61 : vector<8x1xi32>
    %236 = vector.shape_cast %235 : vector<8x1xi1> to vector<8x1xi1>
    %237 = vector.broadcast %236 : vector<8x1xi1> to vector<8x20xi1>
    %238 = arith.select %237, %233, %215 : vector<8x20xi1>, vector<8x20xf32>
    %c1_i32_112 = arith.constant 1 : i32
    %239 = vector.broadcast %c1_i32_112 : i32 to vector<8x1xi32>
    %240 = arith.subi %61, %239 : vector<8x1xi32>
    %241 = vector.broadcast %c7_i32 : i32 to vector<8x1xi32>
    %242 = arith.cmpi eq, %241, %240 : vector<8x1xi32>
    %243 = arith.index_cast %c7_i32 : i32 to index
    %c0_113 = arith.constant 0 : index
    %c0_114 = arith.constant 0 : index
    %244 = vector.load %arg16[%243, %c0_113, %c0_114] : memref<10x8x20xf32, #tpu.memory_space<vmem>>, vector<1x8x20xf32>
    %245 = vector.shape_cast %244 : vector<1x8x20xf32> to vector<8x20xf32>
    %246 = vector.shape_cast %242 : vector<8x1xi1> to vector<8x1xi1>
    %247 = vector.broadcast %246 : vector<8x1xi1> to vector<8x20xi1>
    %248 = arith.select %247, %245, %225 : vector<8x20xi1>, vector<8x20xf32>
    %c8_i32 = arith.constant 8 : i32
    %249 = arith.index_cast %c8_i32 : i32 to index
    %c0_115 = arith.constant 0 : index
    %c0_116 = arith.constant 0 : index
    %250 = vector.load %arg15[%249, %c0_115, %c0_116] : memref<10x8x20xf32, #tpu.memory_space<vmem>>, vector<1x8x20xf32>
    %251 = vector.shape_cast %250 : vector<1x8x20xf32> to vector<8x20xf32>
    %cst_117 = arith.constant dense<0.000000e+00> : vector<8x20xf32>
    %252 = tpu.matmul %238, %62, %cst_117 {dimension_numbers = #tpu.dot_dimension_numbers<[1], [0], [0], [1], [0, 0, 1, 1], [], []>} : vector<8x20xf32>, vector<20x20xf32>, vector<8x20xf32> -> vector<8x20xf32>
    %253 = arith.addf %251, %252 : vector<8x20xf32>
    %254 = vector.broadcast %63 : vector<1x20xf32> to vector<8x20xf32>
    %255 = arith.addf %253, %254 : vector<8x20xf32>
    %256 = math.tanh %255 : vector<8x20xf32>
    %257 = vector.broadcast %c8_i32 : i32 to vector<8x1xi32>
    %258 = arith.cmpi slt, %257, %61 : vector<8x1xi32>
    %259 = vector.shape_cast %258 : vector<8x1xi1> to vector<8x1xi1>
    %260 = vector.broadcast %259 : vector<8x1xi1> to vector<8x20xi1>
    %261 = arith.select %260, %256, %238 : vector<8x20xi1>, vector<8x20xf32>
    %c1_i32_118 = arith.constant 1 : i32
    %262 = vector.broadcast %c1_i32_118 : i32 to vector<8x1xi32>
    %263 = arith.subi %61, %262 : vector<8x1xi32>
    %264 = vector.broadcast %c8_i32 : i32 to vector<8x1xi32>
    %265 = arith.cmpi eq, %264, %263 : vector<8x1xi32>
    %266 = arith.index_cast %c8_i32 : i32 to index
    %c0_119 = arith.constant 0 : index
    %c0_120 = arith.constant 0 : index
    %267 = vector.load %arg16[%266, %c0_119, %c0_120] : memref<10x8x20xf32, #tpu.memory_space<vmem>>, vector<1x8x20xf32>
    %268 = vector.shape_cast %267 : vector<1x8x20xf32> to vector<8x20xf32>
    %269 = vector.shape_cast %265 : vector<8x1xi1> to vector<8x1xi1>
    %270 = vector.broadcast %269 : vector<8x1xi1> to vector<8x20xi1>
    %271 = arith.select %270, %268, %248 : vector<8x20xi1>, vector<8x20xf32>
    %c9_i32 = arith.constant 9 : i32
    %272 = arith.index_cast %c9_i32 : i32 to index
    %c0_121 = arith.constant 0 : index
    %c0_122 = arith.constant 0 : index
    %273 = vector.load %arg15[%272, %c0_121, %c0_122] : memref<10x8x20xf32, #tpu.memory_space<vmem>>, vector<1x8x20xf32>
    %274 = vector.shape_cast %273 : vector<1x8x20xf32> to vector<8x20xf32>
    %cst_123 = arith.constant dense<0.000000e+00> : vector<8x20xf32>
    %275 = tpu.matmul %261, %62, %cst_123 {dimension_numbers = #tpu.dot_dimension_numbers<[1], [0], [0], [1], [0, 0, 1, 1], [], []>} : vector<8x20xf32>, vector<20x20xf32>, vector<8x20xf32> -> vector<8x20xf32>
    %276 = arith.addf %274, %275 : vector<8x20xf32>
    %277 = vector.broadcast %63 : vector<1x20xf32> to vector<8x20xf32>
    %278 = arith.addf %276, %277 : vector<8x20xf32>
    %279 = math.tanh %278 : vector<8x20xf32>
    %280 = vector.broadcast %c9_i32 : i32 to vector<8x1xi32>
    %281 = arith.cmpi slt, %280, %61 : vector<8x1xi32>
    %282 = vector.shape_cast %281 : vector<8x1xi1> to vector<8x1xi1>
    %283 = vector.broadcast %282 : vector<8x1xi1> to vector<8x20xi1>
    %284 = arith.select %283, %279, %261 : vector<8x20xi1>, vector<8x20xf32>
    %c1_i32_124 = arith.constant 1 : i32
    %285 = vector.broadcast %c1_i32_124 : i32 to vector<8x1xi32>
    %286 = arith.subi %61, %285 : vector<8x1xi32>
    %287 = vector.broadcast %c9_i32 : i32 to vector<8x1xi32>
    %288 = arith.cmpi eq, %287, %286 : vector<8x1xi32>
    %289 = arith.index_cast %c9_i32 : i32 to index
    %c0_125 = arith.constant 0 : index
    %c0_126 = arith.constant 0 : index
    %290 = vector.load %arg16[%289, %c0_125, %c0_126] : memref<10x8x20xf32, #tpu.memory_space<vmem>>, vector<1x8x20xf32>
    %291 = vector.shape_cast %290 : vector<1x8x20xf32> to vector<8x20xf32>
    %292 = vector.shape_cast %288 : vector<8x1xi1> to vector<8x1xi1>
    %293 = vector.broadcast %292 : vector<8x1xi1> to vector<8x20xi1>
    %294 = arith.select %293, %291, %271 : vector<8x20xi1>, vector<8x20xf32>
    %c10_i32 = arith.constant 10 : i32
    %295 = math.tanh %294 : vector<8x20xf32>
    %c0_127 = arith.constant 0 : index
    %c0_128 = arith.constant 0 : index
    %296 = vector.load %arg11[%c0_127, %c0_128] : memref<20x2xf32, #tpu.memory_space<vmem>>, vector<20x2xf32>
    %cst_129 = arith.constant dense<0.000000e+00> : vector<8x2xf32>
    %297 = tpu.matmul %284, %296, %cst_129 {dimension_numbers = #tpu.dot_dimension_numbers<[1], [0], [0], [1], [0, 0, 1, 1], [], []>} : vector<8x20xf32>, vector<20x2xf32>, vector<8x2xf32> -> vector<8x2xf32>
    %c0_130 = arith.constant 0 : index
    %c0_131 = arith.constant 0 : index
    %298 = vector.load %arg12[%c0_130, %c0_131] : memref<20x2xf32, #tpu.memory_space<vmem>>, vector<20x2xf32>
    %cst_132 = arith.constant dense<0.000000e+00> : vector<8x2xf32>
    %299 = tpu.matmul %295, %298, %cst_132 {dimension_numbers = #tpu.dot_dimension_numbers<[1], [0], [0], [1], [0, 0, 1, 1], [], []>} : vector<8x20xf32>, vector<20x2xf32>, vector<8x2xf32> -> vector<8x2xf32>
    %300 = arith.addf %297, %299 : vector<8x2xf32>
    %c0_133 = arith.constant 0 : index
    %c0_134 = arith.constant 0 : index
    %301 = vector.load %arg13[%c0_133, %c0_134] : memref<1x2xf32, #tpu.memory_space<vmem>>, vector<1x2xf32>
    %302 = vector.broadcast %301 : vector<1x2xf32> to vector<8x2xf32>
    %303 = arith.addf %300, %302 : vector<8x2xf32>
    %c0_135 = arith.constant 0 : index
    %c0_136 = arith.constant 0 : index
    %304 = vector.load %arg14[%c0_135, %c0_136] : memref<8x2xf32, #tpu.memory_space<vmem>>, vector<8x2xf32>
    tpu.vector_store %arg14[%c0_135, %c0_136], %303 {strides = array<i32>} : memref<8x2xf32, #tpu.memory_space<vmem>>, vector<8x2xf32>,
    return
  }
  func.func @transform_0(%arg0: i32) -> (i32, i32) {
    %c0_i32 = arith.constant 0 : i32
    %c0_i32_0 = arith.constant 0 : i32
    return %arg0, %c0_i32 : i32, i32
  }
  func.func @transform_1(%arg0: i32) -> (i32, i32, i32) {
    %c0_i32 = arith.constant 0 : i32
    %c0_i32_0 = arith.constant 0 : i32
    %c0_i32_1 = arith.constant 0 : i32
    return %c0_i32, %arg0, %c0_i32_0 : i32, i32, i32
  }
  func.func @transform_2(%arg0: i32) -> (i32, i32, i32) {
    %c0_i32 = arith.constant 0 : i32
    %c0_i32_0 = arith.constant 0 : i32
    %c0_i32_1 = arith.constant 0 : i32
    %c0_i32_2 = arith.constant 0 : i32
    return %c0_i32, %c0_i32_0, %c0_i32_1 : i32, i32, i32
  }
  func.func @transform_3(%arg0: i32) -> (i32, i32) {
    %c0_i32 = arith.constant 0 : i32
    %c0_i32_0 = arith.constant 0 : i32
    %c0_i32_1 = arith.constant 0 : i32
    return %c0_i32, %c0_i32_0 : i32, i32
  }
  func.func @transform_4(%arg0: i32) -> (i32, i32) {
    %c0_i32 = arith.constant 0 : i32
    %c0_i32_0 = arith.constant 0 : i32
    %c0_i32_1 = arith.constant 0 : i32
    return %c0_i32, %c0_i32_0 : i32, i32
  }
  func.func @transform_5(%arg0: i32) -> (i32, i32) {
    %c0_i32 = arith.constant 0 : i32
    %c0_i32_0 = arith.constant 0 : i32
    %c0_i32_1 = arith.constant 0 : i32
    return %c0_i32, %c0_i32_0 : i32, i32
  }
  func.func @transform_6(%arg0: i32) -> (i32, i32) {
    %c0_i32 = arith.constant 0 : i32
    %c0_i32_0 = arith.constant 0 : i32
    %c0_i32_1 = arith.constant 0 : i32
    return %c0_i32, %c0_i32_0 : i32, i32
  }
  func.func @transform_7(%arg0: i32) -> (i32, i32) {
    %c0_i32 = arith.constant 0 : i32
    %c0_i32_0 = arith.constant 0 : i32
    %c0_i32_1 = arith.constant 0 : i32
    return %c0_i32, %c0_i32_0 : i32, i32
  }
  func.func @transform_8(%arg0: i32) -> (i32, i32) {
    %c0_i32 = arith.constant 0 : i32
    %c0_i32_0 = arith.constant 0 : i32
    %c0_i32_1 = arith.constant 0 : i32
    return %c0_i32, %c0_i32_0 : i32, i32
  }
  func.func @transform_9(%arg0: i32) -> (i32, i32) {
    %c0_i32 = arith.constant 0 : i32
    %c0_i32_0 = arith.constant 0 : i32
    %c0_i32_1 = arith.constant 0 : i32
    return %c0_i32, %c0_i32_0 : i32, i32
  }
  func.func @transform_10(%arg0: i32) -> (i32, i32) {
    %c0_i32 = arith.constant 0 : i32
    %c0_i32_0 = arith.constant 0 : i32
    %c0_i32_1 = arith.constant 0 : i32
    return %c0_i32, %c0_i32_0 : i32, i32
  }
  func.func @transform_11(%arg0: i32) -> (i32, i32) {
    %c0_i32 = arith.constant 0 : i32
    %c0_i32_0 = arith.constant 0 : i32
    %c0_i32_1 = arith.constant 0 : i32
    return %c0_i32, %c0_i32_0 : i32, i32
  }
  func.func @transform_12(%arg0: i32) -> (i32, i32) {
    %c0_i32 = arith.constant 0 : i32
    %c0_i32_0 = arith.constant 0 : i32
    %c0_i32_1 = arith.constant 0 : i32
    return %c0_i32, %c0_i32_0 : i32, i32
  }
  func.func @transform_13(%arg0: i32) -> (i32, i32) {
    %c0_i32 = arith.constant 0 : i32
    %c0_i32_0 = arith.constant 0 : i32
    return %arg0, %c0_i32 : i32, i32
  }
}

</mosaic_0001>

<llo_original>
// kernel: model_forward.1
$region0: #{model_forward.1}
  #allocation0 [shape = 'u32[]', space=smem, size = 0x4, offset = 0x4, fixed_abs, tag = 'smem constant byte address 0x4 - core index']
  #allocation1 [shape = 'u32[144,128]{1,0:T(1,128)}', space=vmem, size = 0x12000, scoped, tag = 'internal scratch']
  #allocation2 [shape = 'f32[10,8,20]{2,1,0:T(8,128)}', space=vmem, size = 0xa000, scoped, tag = 'scratch operand']
  #allocation3 [shape = 'f32[10,8,20]{2,1,0:T(8,128)}', space=vmem, size = 0xa000, scoped, tag = 'scratch operand']
  %s0 = inlined_call_operand.vmem [shape: s32[8,1], index: 0, kind: input, shape index: {}]
  %s1 = inlined_call_operand.vmem [shape: f32[16,8,75], index: 1, kind: input, shape index: {}]
  %s2 = inlined_call_operand.vmem [shape: f32[7,75,60], index: 2, kind: input, shape index: {}]
  %s3 = inlined_call_operand.vmem [shape: f32[1,60], index: 3, kind: input, shape index: {}]
  %s4 = inlined_call_operand.vmem [shape: f32[60,20], index: 4, kind: input, shape index: {}]
  %s5 = inlined_call_operand.vmem [shape: f32[1,20], index: 5, kind: input, shape index: {}]
  %s6 = inlined_call_operand.vmem [shape: f32[20,20], index: 6, kind: input, shape index: {}]
  %s7 = inlined_call_operand.vmem [shape: f32[1,20], index: 7, kind: input, shape index: {}]
  %s8 = inlined_call_operand.vmem [shape: f32[60,20], index: 8, kind: input, shape index: {}]
  %s9 = inlined_call_operand.vmem [shape: f32[1,20], index: 9, kind: input, shape index: {}]
  %s10 = inlined_call_operand.vmem [shape: f32[20,2], index: 10, kind: input, shape index: {}]
  %s11 = inlined_call_operand.vmem [shape: f32[20,2], index: 11, kind: input, shape index: {}]
  %s12 = inlined_call_operand.vmem [shape: f32[1,2], index: 12, kind: input, shape index: {}]
  %s13 = inlined_call_operand.vmem [shape: f32[8,2], index: 13, kind: output, shape index: {}]
  %s14 = sld [smem:[#allocation0]]
  $region62: #{model_forward.1} parent=0
    _
  %s16 = ssub.s32 1, %s14
  %s17 = scalar_select 0, %s16, %s14
  // Predicated region
  $region2: #{model_forward.1} parent=0 // pred_check
    _
  $region3: #{model_forward.1} parent=0 // pred_check_branch
    %19 = sbr.rel (0) target = $region5
  $region4: #{model_forward.1} parent=0 // pred_region
    _
  $region5: #{model_forward.1} parent=0 // pred_fallthru
    _
  // Predicated region
  $region6: #{model_forward.1} parent=0 // pred_check
    _
  $region7: #{model_forward.1} parent=0 // pred_check_branch
    %21 = sbr.rel (0) target = $region9
  $region8: #{model_forward.1} parent=0 // pred_region
    _
  $region9: #{model_forward.1} parent=0 // pred_fallthru
    _
  // Predicated region
  $region10: #{model_forward.1} parent=0 // pred_check
    _
  $region11: #{model_forward.1} parent=0 // pred_check_branch
    %23 = sbr.rel (0) target = $region13
  $region12: #{model_forward.1} parent=0 // pred_region
    _
  $region13: #{model_forward.1} parent=0 // pred_fallthru
    _
  // Predicated region
  $region14: #{model_forward.1} parent=0 // pred_check
    _
  $region15: #{model_forward.1} parent=0 // pred_check_branch
    %25 = sbr.rel (0) target = $region17
  $region16: #{model_forward.1} parent=0 // pred_region
    _
  $region17: #{model_forward.1} parent=0 // pred_fallthru
    _
  // Predicated region
  $region18: #{model_forward.1} parent=0 // pred_check
    _
  $region19: #{model_forward.1} parent=0 // pred_check_branch
    %27 = sbr.rel (0) target = $region21
  $region20: #{model_forward.1} parent=0 // pred_region
    _
  $region21: #{model_forward.1} parent=0 // pred_fallthru
    _
  // Predicated region
  $region22: #{model_forward.1} parent=0 // pred_check
    _
  $region23: #{model_forward.1} parent=0 // pred_check_branch
    %29 = sbr.rel (0) target = $region25
  $region24: #{model_forward.1} parent=0 // pred_region
    _
  $region25: #{model_forward.1} parent=0 // pred_fallthru
    _
  // Predicated region
  $region26: #{model_forward.1} parent=0 // pred_check
    _
  $region27: #{model_forward.1} parent=0 // pred_check_branch
    %31 = sbr.rel (0) target = $region29
  $region28: #{model_forward.1} parent=0 // pred_region
    _
  $region29: #{model_forward.1} parent=0 // pred_fallthru
    _
  // Predicated region
  $region30: #{model_forward.1} parent=0 // pred_check
    _
  $region31: #{model_forward.1} parent=0 // pred_check_branch
    %33 = sbr.rel (0) target = $region33
  $region32: #{model_forward.1} parent=0 // pred_region
    _
  $region33: #{model_forward.1} parent=0 // pred_fallthru
    _
  // Predicated region
  $region34: #{model_forward.1} parent=0 // pred_check
    _
  $region35: #{model_forward.1} parent=0 // pred_check_branch
    %35 = sbr.rel (0) target = $region37
  $region36: #{model_forward.1} parent=0 // pred_region
    _
  $region37: #{model_forward.1} parent=0 // pred_fallthru
    _
  // Predicated region
  $region38: #{model_forward.1} parent=0 // pred_check
    _
  $region39: #{model_forward.1} parent=0 // pred_check_branch
    %37 = sbr.rel (0) target = $region41
  $region40: #{model_forward.1} parent=0 // pred_region
    _
  $region41: #{model_forward.1} parent=0 // pred_fallthru
    _
  // Predicated region
  $region42: #{model_forward.1} parent=0 // pred_check
    _
  $region43: #{model_forward.1} parent=0 // pred_check_branch
    %39 = sbr.rel (0) target = $region45
  $region44: #{model_forward.1} parent=0 // pred_region
    _
  $region45: #{model_forward.1} parent=0 // pred_fallthru
    _
  // Predicated region
  $region46: #{model_forward.1} parent=0 // pred_check
    _
  $region47: #{model_forward.1} parent=0 // pred_check_branch
    %41 = sbr.rel (0) target = $region49
  $region48: #{model_forward.1} parent=0 // pred_region
    _
  $region49: #{model_forward.1} parent=0 // pred_fallthru
    _
  // Predicated region
  $region50: #{model_forward.1} parent=0 // pred_check
    _
  $region51: #{model_forward.1} parent=0 // pred_check_branch
    %43 = sbr.rel (0) target = $region53
  $region52: #{model_forward.1} parent=0 // pred_region
    _
  $region53: #{model_forward.1} parent=0 // pred_fallthru
    _
  %v44 = vld [vmem:[%s3] sm:$0x1]
  %v46 = vlaneseq
  %v47 = vshrl.u32 %v46, 7
  %v48 = vsub.s32 0, %v47
  %v49 = vrot.slane %v44, %v48
  %v51 = vld [vmem:[%s1] sm:$0xff]
  %v52 = vld [vmem:[%s1 + $0x8] sm:$0xff]
  %v53 = vld [vmem:[%s1 + $0x10] sm:$0xff]
  %v54 = vld [vmem:[%s1 + $0x18] sm:$0xff]
  %v55 = vld [vmem:[%s1 + $0x20] sm:$0xff]
  %v56 = vld [vmem:[%s1 + $0x28] sm:$0xff]
  %v57 = vld [vmem:[%s1 + $0x30] sm:$0xff]
  %v58 = vld [vmem:[%s1 + $0x38] sm:$0xff]
  %v59 = vld [vmem:[%s1 + $0x40] sm:$0xff]
  %v60 = vld [vmem:[%s1 + $0x48] sm:$0xff]
  %v61 = vld [vmem:[%s2] sm:$0xff]
  %v62 = vld [vmem:[%s2 + $0x8] sm:$0xff]
  %v63 = vld [vmem:[%s2 + $0x10] sm:$0xff]
  %v64 = vld [vmem:[%s2 + $0x18] sm:$0xff]
  %v65 = vld [vmem:[%s2 + $0x20] sm:$0xff]
  %v66 = vld [vmem:[%s2 + $0x28] sm:$0xff]
  %v67 = vld [vmem:[%s2 + $0x30] sm:$0xff]
  %v68 = vld [vmem:[%s2 + $0x38] sm:$0xff]
  %v69 = vld [vmem:[%s2 + $0x40] sm:$0xff]
  %v70 = vld [vmem:[%s2 + $0x48] sm:$0x7]
  %vm71 = vcmask 613376
  %v73 = vsel %vm71, %v51, 0
  %v76 = vsel %vm71, %v52, 0
  %v79 = vsel %vm71, %v53, 0
  %v82 = vsel %vm71, %v54, 0
  %v85 = vsel %vm71, %v55, 0
  %v88 = vsel %vm71, %v56, 0
  %v91 = vsel %vm71, %v57, 0
  %v94 = vsel %vm71, %v58, 0
  %v97 = vsel %vm71, %v59, 0
  %v100 = vsel %vm71, %v60, 0
  %vm102 = vcmask 1042432
  %v104 = vsel %vm102, %v70, 0
  %106 = vmatprep.subr.mxu0 0.0
  %107 = vmatpush1.msra.mxu0 %v61
  %108 = vmatprep.subr.mxu0 0.0
  %109 = vmatpush1.msra.mxu0 %v62
  %110 = vmatprep.subr.mxu0 0.0
  %111 = vmatpush1.msra.mxu0 %v63
  %112 = vmatprep.subr.mxu0 0.0
  %113 = vmatpush1.msra.mxu0 %v64
  %114 = vmatprep.subr.mxu0 0.0
  %115 = vmatpush1.msra.mxu0 %v65
  %116 = vmatprep.subr.mxu0 0.0
  %117 = vmatpush1.msra.mxu0 %v66
  %118 = vmatprep.subr.mxu0 0.0
  %119 = vmatpush1.msra.mxu0 %v67
  %120 = vmatprep.subr.mxu0 0.0
  %121 = vmatpush1.msra.mxu0 %v68
  %122 = vmatprep.subr.mxu0 0.0
  %123 = vmatpush1.msra.mxu0 %v69
  %124 = vmatprep.subr.mxu0 0.0
  %125 = vmatpush1.msra.mxu0 %v104
  %126 = vmatprep.subr.mxu0 0.0
  %127 = vmatpush1.msra.mxu0 0.0
  %128 = vmatprep.subr.mxu0 0.0
  %129 = vmatpush1.msra.mxu0 0.0
  %130 = vmatprep.subr.mxu0 0.0
  %131 = vmatpush1.msra.mxu0 0.0
  %132 = vmatprep.subr.mxu0 0.0
  %133 = vmatpush1.msra.mxu0 0.0
  %134 = vmatprep.subr.mxu0 0.0
  %135 = vmatpush1.msra.mxu0 0.0
  %136 = vmatprep.subr.mxu0 0.0
  %137 = vmatpush1.msra.mxu0 0.0
  %138 = vmatprep.subr.mxu0 0.0
  %139 = vmatpush1.msra.mxu0 0.0
  %140 = vmatprep.subr.mxu0 0.0
  %141 = vmatpush1.msra.mxu0 0.0
  %142 = vmatprep.subr.mxu0 0.0
  %143 = vmatpush1.msra.mxu0 0.0
  %144 = vmatprep.subr.mxu0 0.0
  %145 = vmatpush1.msra.mxu0 0.0
  %146 = vmatprep.subr.mxu0 0.0
  %147 = vmatpush1.msra.mxu0 0.0
  %148 = vmatprep.subr.mxu0 0.0
  %149 = vmatpush1.msra.mxu0 0.0
  %150 = vmatprep.subr.mxu0 0.0
  %151 = vmatpush1.msra.mxu0 0.0
  %152 = vmatprep.subr.mxu0 0.0
  %153 = vmatpush1.msra.mxu0 0.0
  %154 = vmatprep.subr.mxu0 0.0
  %155 = vmatpush1.msra.mxu0 0.0
  %156 = vmatprep.subr.mxu0 0.0
  %157 = vmatpush1.msra.mxu0 0.0
  %158 = vmatprep.subr.mxu0 0.0
  %159 = vmatpush1.msra.mxu0 0.0
  %160 = vmatprep.subr.mxu0 0.0
  %161 = vmatpush1.msra.mxu0 0.0
  %162 = vmatprep.subr.mxu0 0.0
  %163 = vmatpush1.msra.mxu0 0.0
  %164 = vmatprep.subr.mxu0 0.0
  %165 = vmatpush1.msra.mxu0 0.0
  %166 = vmatprep.subr.mxu0 0.0
  %167 = vmatpush1.msra.mxu0 0.0
  %168 = vmatprep.subr.mxu0 0.0
  %169 = vmatpush1.msra.mxu0 0.0
  %170 = vmatprep.mubr.f32.mxu0 0.0
  %171 = vmatmul.mubr.f32.gmra.mrb[0].mxu0 %v73
  %v172 = vpop.f32.mrb[0].mxu0
  %v173 = vadd.f32 0.0, %v172
  %v174 = vpop.f32.mrb[0].mxu0
  %175 = vmatprep.mubr.f32.mxu0 0.0
  %176 = vmatmul.mubr.f32.gmra.mrb[0].mxu0 %v76
  %v177 = vpop.f32.mrb[0].mxu0
  %v178 = vadd.f32 0.0, %v177
  %v179 = vpop.f32.mrb[0].mxu0
  %180 = vmatprep.mubr.f32.mxu0 0.0
  %181 = vmatmul.mubr.f32.gmra.mrb[0].mxu0 %v79
  %v182 = vpop.f32.mrb[0].mxu0
  %v183 = vadd.f32 0.0, %v182
  %v184 = vpop.f32.mrb[0].mxu0
  %185 = vmatprep.mubr.f32.mxu0 0.0
  %186 = vmatmul.mubr.f32.gmra.mrb[0].mxu0 %v82
  %v187 = vpop.f32.mrb[0].mxu0
  %v188 = vadd.f32 0.0, %v187
  %v189 = vpop.f32.mrb[0].mxu0
  %190 = vmatprep.mubr.f32.mxu0 0.0
  %191 = vmatmul.mubr.f32.gmra.mrb[0].mxu0 %v85
  %v192 = vpop.f32.mrb[0].mxu0
  %v193 = vadd.f32 0.0, %v192
  %v194 = vpop.f32.mrb[0].mxu0
  %195 = vmatprep.mubr.f32.mxu0 0.0
  %196 = vmatmul.mubr.f32.gmra.mrb[0].mxu0 %v88
  %v197 = vpop.f32.mrb[0].mxu0
  %v198 = vadd.f32 0.0, %v197
  %v199 = vpop.f32.mrb[0].mxu0
  %200 = vmatprep.mubr.f32.mxu0 0.0
  %201 = vmatmul.mubr.f32.gmra.mrb[0].mxu0 %v91
  %v202 = vpop.f32.mrb[0].mxu0
  %v203 = vadd.f32 0.0, %v202
  %v204 = vpop.f32.mrb[0].mxu0
  %205 = vmatprep.mubr.f32.mxu0 0.0
  %206 = vmatmul.mubr.f32.gmra.mrb[0].mxu0 %v94
  %v207 = vpop.f32.mrb[0].mxu0
  %v208 = vadd.f32 0.0, %v207
  %v209 = vpop.f32.mrb[0].mxu0
  %210 = vmatprep.mubr.f32.mxu0 0.0
  %211 = vmatmul.mubr.f32.gmra.mrb[0].mxu0 %v97
  %v212 = vpop.f32.mrb[0].mxu0
  %v213 = vadd.f32 0.0, %v212
  %v214 = vpop.f32.mrb[0].mxu0
  %215 = vmatprep.mubr.f32.mxu0 0.0
  %216 = vmatmul.mubr.f32.gmra.mrb[0].mxu0 %v100
  %v217 = vpop.f32.mrb[0].mxu0
  %v218 = vadd.f32 0.0, %v217
  %v219 = vpop.f32.mrb[0].mxu0
  %220 = vdwg.mxu0
  %v221 = vadd.f32 %v49, %v173
  %v222 = vadd.f32 %v49, %v178
  %v223 = vadd.f32 %v49, %v183
  %v224 = vadd.f32 %v49, %v188
  %v225 = vadd.f32 %v49, %v193
  %v226 = vadd.f32 %v49, %v198
  %v227 = vadd.f32 %v49, %v203
  %v228 = vadd.f32 %v49, %v208
  %v229 = vadd.f32 %v49, %v213
  %v230 = vadd.f32 %v49, %v218
  %s231 = scalar_lea.vmem %s1, 8
  %v232 = vld [vmem:[%s231] sm:$0xff]
  %v233 = vld [vmem:[%s231 + $0x8] sm:$0xff]
  %v234 = vld [vmem:[%s231 + $0x10] sm:$0xff]
  %v235 = vld [vmem:[%s231 + $0x18] sm:$0xff]
  %v236 = vld [vmem:[%s231 + $0x20] sm:$0xff]
  %v237 = vld [vmem:[%s231 + $0x28] sm:$0xff]
  %v238 = vld [vmem:[%s231 + $0x30] sm:$0xff]
  %v239 = vld [vmem:[%s231 + $0x38] sm:$0xff]
  %v240 = vld [vmem:[%s231 + $0x40] sm:$0xff]
  %v241 = vld [vmem:[%s231 + $0x48] sm:$0xff]
  %s242 = scalar_lea.vmem %s2, 80
  %v243 = vld [vmem:[%s242] sm:$0xff]
  %v244 = vld [vmem:[%s242 + $0x8] sm:$0xff]
  %v245 = vld [vmem:[%s242 + $0x10] sm:$0xff]
  %v246 = vld [vmem:[%s242 + $0x18] sm:$0xff]
  %v247 = vld [vmem:[%s242 + $0x20] sm:$0xff]
  %v248 = vld [vmem:[%s242 + $0x28] sm:$0xff]
  %v249 = vld [vmem:[%s242 + $0x30] sm:$0xff]
  %v250 = vld [vmem:[%s242 + $0x38] sm:$0xff]
  %v251 = vld [vmem:[%s242 + $0x40] sm:$0xff]
  %v252 = vld [vmem:[%s242 + $0x48] sm:$0x7]
  %v254 = vsel %vm71, %v232, 0
  %v257 = vsel %vm71, %v233, 0
  %v260 = vsel %vm71, %v234, 0
  %v263 = vsel %vm71, %v235, 0
  %v266 = vsel %vm71, %v236, 0
  %v269 = vsel %vm71, %v237, 0
  %v272 = vsel %vm71, %v238, 0
  %v275 = vsel %vm71, %v239, 0
  %v278 = vsel %vm71, %v240, 0
  %v281 = vsel %vm71, %v241, 0
  %v284 = vsel %vm102, %v252, 0
  %286 = vmatprep.subr.mxu0 0.0
  %287 = vmatpush1.msra.mxu0 %v243
  %288 = vmatprep.subr.mxu0 0.0
  %289 = vmatpush1.msra.mxu0 %v244
  %290 = vmatprep.subr.mxu0 0.0
  %291 = vmatpush1.msra.mxu0 %v245
  %292 = vmatprep.subr.mxu0 0.0
  %293 = vmatpush1.msra.mxu0 %v246
  %294 = vmatprep.subr.mxu0 0.0
  %295 = vmatpush1.msra.mxu0 %v247
  %296 = vmatprep.subr.mxu0 0.0
  %297 = vmatpush1.msra.mxu0 %v248
  %298 = vmatprep.subr.mxu0 0.0
  %299 = vmatpush1.msra.mxu0 %v249
  %300 = vmatprep.subr.mxu0 0.0
  %301 = vmatpush1.msra.mxu0 %v250
  %302 = vmatprep.subr.mxu0 0.0
  %303 = vmatpush1.msra.mxu0 %v251
  %304 = vmatprep.subr.mxu0 0.0
  %305 = vmatpush1.msra.mxu0 %v284
  %306 = vmatprep.subr.mxu0 0.0
  %307 = vmatpush1.msra.mxu0 0.0
  %308 = vmatprep.subr.mxu0 0.0
  %309 = vmatpush1.msra.mxu0 0.0
  %310 = vmatprep.subr.mxu0 0.0
  %311 = vmatpush1.msra.mxu0 0.0
  %312 = vmatprep.subr.mxu0 0.0
  %313 = vmatpush1.msra.mxu0 0.0
  %314 = vmatprep.subr.mxu0 0.0
  %315 = vmatpush1.msra.mxu0 0.0
  %316 = vmatprep.subr.mxu0 0.0
  %317 = vmatpush1.msra.mxu0 0.0
  %318 = vmatprep.subr.mxu0 0.0
  %319 = vmatpush1.msra.mxu0 0.0
  %320 = vmatprep.subr.mxu0 0.0
  %321 = vmatpush1.msra.mxu0 0.0
  %322 = vmatprep.subr.mxu0 0.0
  %323 = vmatpush1.msra.mxu0 0.0
  %324 = vmatprep.subr.mxu0 0.0
  %325 = vmatpush1.msra.mxu0 0.0
  %326 = vmatprep.subr.mxu0 0.0
  %327 = vmatpush1.msra.mxu0 0.0
  %328 = vmatprep.subr.mxu0 0.0
  %329 = vmatpush1.msra.mxu0 0.0
  %330 = vmatprep.subr.mxu0 0.0
  %331 = vmatpush1.msra.mxu0 0.0
  %332 = vmatprep.subr.mxu0 0.0
  %333 = vmatpush1.msra.mxu0 0.0
  %334 = vmatprep.subr.mxu0 0.0
  %335 = vmatpush1.msra.mxu0 0.0
  %336 = vmatprep.subr.mxu0 0.0
  %337 = vmatpush1.msra.mxu0 0.0
  %338 = vmatprep.subr.mxu0 0.0
  %339 = vmatpush1.msra.mxu0 0.0
  %340 = vmatprep.subr.mxu0 0.0
  %341 = vmatpush1.msra.mxu0 0.0
  %342 = vmatprep.subr.mxu0 0.0
  %343 = vmatpush1.msra.mxu0 0.0
  %344 = vmatprep.subr.mxu0 0.0
  %345 = vmatpush1.msra.mxu0 0.0
  %346 = vmatprep.subr.mxu0 0.0
  %347 = vmatpush1.msra.mxu0 0.0
  %348 = vmatprep.subr.mxu0 0.0
  %349 = vmatpush1.msra.mxu0 0.0
  %350 = vmatprep.mubr.f32.mxu0 0.0
  %351 = vmatmul.mubr.f32.gmra.mrb[0].mxu0 %v254
  %v352 = vpop.f32.mrb[0].mxu0
  %v353 = vadd.f32 0.0, %v352
  %v354 = vpop.f32.mrb[0].mxu0
  %355 = vmatprep.mubr.f32.mxu0 0.0
  %356 = vmatmul.mubr.f32.gmra.mrb[0].mxu0 %v257
  %v357 = vpop.f32.mrb[0].mxu0
  %v358 = vadd.f32 0.0, %v357
  %v359 = vpop.f32.mrb[0].mxu0
  %360 = vmatprep.mubr.f32.mxu0 0.0
  %361 = vmatmul.mubr.f32.gmra.mrb[0].mxu0 %v260
  %v362 = vpop.f32.mrb[0].mxu0
  %v363 = vadd.f32 0.0, %v362
  %v364 = vpop.f32.mrb[0].mxu0
  %365 = vmatprep.mubr.f32.mxu0 0.0
  %366 = vmatmul.mubr.f32.gmra.mrb[0].mxu0 %v263
  %v367 = vpop.f32.mrb[0].mxu0
  %v368 = vadd.f32 0.0, %v367
  %v369 = vpop.f32.mrb[0].mxu0
  %370 = vmatprep.mubr.f32.mxu0 0.0
  %371 = vmatmul.mubr.f32.gmra.mrb[0].mxu0 %v266
  %v372 = vpop.f32.mrb[0].mxu0
  %v373 = vadd.f32 0.0, %v372
  %v374 = vpop.f32.mrb[0].mxu0
  %375 = vmatprep.mubr.f32.mxu0 0.0
  %376 = vmatmul.mubr.f32.gmra.mrb[0].mxu0 %v269
  %v377 = vpop.f32.mrb[0].mxu0
  %v378 = vadd.f32 0.0, %v377
  %v379 = vpop.f32.mrb[0].mxu0
  %380 = vmatprep.mubr.f32.mxu0 0.0
  %381 = vmatmul.mubr.f32.gmra.mrb[0].mxu0 %v272
  %v382 = vpop.f32.mrb[0].mxu0
  %v383 = vadd.f32 0.0, %v382
  %v384 = vpop.f32.mrb[0].mxu0
  %385 = vmatprep.mubr.f32.mxu0 0.0
  %386 = vmatmul.mubr.f32.gmra.mrb[0].mxu0 %v275
  %v387 = vpop.f32.mrb[0].mxu0
  %v388 = vadd.f32 0.0, %v387
  %v389 = vpop.f32.mrb[0].mxu0
  %390 = vmatprep.mubr.f32.mxu0 0.0
  %391 = vmatmul.mubr.f32.gmra.mrb[0].mxu0 %v278
  %v392 = vpop.f32.mrb[0].mxu0
  %v393 = vadd.f32 0.0, %v392
  %v394 = vpop.f32.mrb[0].mxu0
  %395 = vmatprep.mubr.f32.mxu0 0.0
  %396 = vmatmul.mubr.f32.gmra.mrb[0].mxu0 %v281
  %v397 = vpop.f32.mrb[0].mxu0
  %v398 = vadd.f32 0.0, %v397
  %v399 = vpop.f32.mrb[0].mxu0
  %400 = vdwg.mxu0
  %v401 = vadd.f32 %v221, %v353
  %v402 = vadd.f32 %v222, %v358
  %v403 = vadd.f32 %v223, %v363
  %v404 = vadd.f32 %v224, %v368
  %v405 = vadd.f32 %v225, %v373
  %v406 = vadd.f32 %v226, %v378
  %v407 = vadd.f32 %v227, %v383
  %v408 = vadd.f32 %v228, %v388
  %v409 = vadd.f32 %v229, %v393
  %v410 = vadd.f32 %v230, %v398
  %s411 = scalar_lea.vmem %s1, 16
  %v412 = vld [vmem:[%s411] sm:$0xff]
  %v413 = vld [vmem:[%s411 + $0x8] sm:$0xff]
  %v414 = vld [vmem:[%s411 + $0x10] sm:$0xff]
  %v415 = vld [vmem:[%s411 + $0x18] sm:$0xff]
  %v416 = vld [vmem:[%s411 + $0x20] sm:$0xff]
  %v417 = vld [vmem:[%s411 + $0x28] sm:$0xff]
  %v418 = vld [vmem:[%s411 + $0x30] sm:$0xff]
  %v419 = vld [vmem:[%s411 + $0x38] sm:$0xff]
  %v420 = vld [vmem:[%s411 + $0x40] sm:$0xff]
  %v421 = vld [vmem:[%s411 + $0x48] sm:$0xff]
  %s422 = scalar_lea.vmem %s2, 160
  %v423 = vld [vmem:[%s422] sm:$0xff]
  %v424 = vld [vmem:[%s422 + $0x8] sm:$0xff]
  %v425 = vld [vmem:[%s422 + $0x10] sm:$0xff]
  %v426 = vld [vmem:[%s422 + $0x18] sm:$0xff]
  %v427 = vld [vmem:[%s422 + $0x20] sm:$0xff]
  %v428 = vld [vmem:[%s422 + $0x28] sm:$0xff]
  %v429 = vld [vmem:[%s422 + $0x30] sm:$0xff]
  %v430 = vld [vmem:[%s422 + $0x38] sm:$0xff]
  %v431 = vld [vmem:[%s422 + $0x40] sm:$0xff]
  %v432 = vld [vmem:[%s422 + $0x48] sm:$0x7]
  %v434 = vsel %vm71, %v412, 0
  %v437 = vsel %vm71, %v413, 0
  %v440 = vsel %vm71, %v414, 0
  %v443 = vsel %vm71, %v415, 0
  %v446 = vsel %vm71, %v416, 0
  %v449 = vsel %vm71, %v417, 0
  %v452 = vsel %vm71, %v418, 0
  %v455 = vsel %vm71, %v419, 0
  %v458 = vsel %vm71, %v420, 0
  %v461 = vsel %vm71, %v421, 0
  %v464 = vsel %vm102, %v432, 0
  %466 = vmatprep.subr.mxu0 0.0
  %467 = vmatpush1.msra.mxu0 %v423
  %468 = vmatprep.subr.mxu0 0.0
  %469 = vmatpush1.msra.mxu0 %v424
  %470 = vmatprep.subr.mxu0 0.0
  %471 = vmatpush1.msra.mxu0 %v425
  %472 = vmatprep.subr.mxu0 0.0
  %473 = vmatpush1.msra.mxu0 %v426
  %474 = vmatprep.subr.mxu0 0.0
  %475 = vmatpush1.msra.mxu0 %v427
  %476 = vmatprep.subr.mxu0 0.0
  %477 = vmatpush1.msra.mxu0 %v428
  %478 = vmatprep.subr.mxu0 0.0
  %479 = vmatpush1.msra.mxu0 %v429
  %480 = vmatprep.subr.mxu0 0.0
  %481 = vmatpush1.msra.mxu0 %v430
  %482 = vmatprep.subr.mxu0 0.0
  %483 = vmatpush1.msra.mxu0 %v431
  %484 = vmatprep.subr.mxu0 0.0
  %485 = vmatpush1.msra.mxu0 %v464
  %486 = vmatprep.subr.mxu0 0.0
  %487 = vmatpush1.msra.mxu0 0.0
  %488 = vmatprep.subr.mxu0 0.0
  %489 = vmatpush1.msra.mxu0 0.0
  %490 = vmatprep.subr.mxu0 0.0
  %491 = vmatpush1.msra.mxu0 0.0
  %492 = vmatprep.subr.mxu0 0.0
  %493 = vmatpush1.msra.mxu0 0.0
  %494 = vmatprep.subr.mxu0 0.0
  %495 = vmatpush1.msra.mxu0 0.0
  %496 = vmatprep.subr.mxu0 0.0
  %497 = vmatpush1.msra.mxu0 0.0
  %498 = vmatprep.subr.mxu0 0.0
  %499 = vmatpush1.msra.mxu0 0.0
  %500 = vmatprep.subr.mxu0 0.0
  %501 = vmatpush1.msra.mxu0 0.0
  %502 = vmatprep.subr.mxu0 0.0
  %503 = vmatpush1.msra.mxu0 0.0
  %504 = vmatprep.subr.mxu0 0.0
  %505 = vmatpush1.msra.mxu0 0.0
  %506 = vmatprep.subr.mxu0 0.0
  %507 = vmatpush1.msra.mxu0 0.0
  %508 = vmatprep.subr.mxu0 0.0
  %509 = vmatpush1.msra.mxu0 0.0
  %510 = vmatprep.subr.mxu0 0.0
  %511 = vmatpush1.msra.mxu0 0.0
  %512 = vmatprep.subr.mxu0 0.0
  %513 = vmatpush1.msra.mxu0 0.0
  %514 = vmatprep.subr.mxu0 0.0
  %515 = vmatpush1.msra.mxu0 0.0
  %516 = vmatprep.subr.mxu0 0.0
  %517 = vmatpush1.msra.mxu0 0.0
  %518 = vmatprep.subr.mxu0 0.0
  %519 = vmatpush1.msra.mxu0 0.0
  %520 = vmatprep.subr.mxu0 0.0
  %521 = vmatpush1.msra.mxu0 0.0
  %522 = vmatprep.subr.mxu0 0.0
  %523 = vmatpush1.msra.mxu0 0.0
  %524 = vmatprep.subr.mxu0 0.0
  %525 = vmatpush1.msra.mxu0 0.0
  %526 = vmatprep.subr.mxu0 0.0
  %527 = vmatpush1.msra.mxu0 0.0
  %528 = vmatprep.subr.mxu0 0.0
  %529 = vmatpush1.msra.mxu0 0.0
  %530 = vmatprep.mubr.f32.mxu0 0.0
  %531 = vmatmul.mubr.f32.gmra.mrb[0].mxu0 %v434
  %v532 = vpop.f32.mrb[0].mxu0
  %v533 = vadd.f32 0.0, %v532
  %v534 = vpop.f32.mrb[0].mxu0
  %535 = vmatprep.mubr.f32.mxu0 0.0
  %536 = vmatmul.mubr.f32.gmra.mrb[0].mxu0 %v437
  %v537 = vpop.f32.mrb[0].mxu0
  %v538 = vadd.f32 0.0, %v537
  %v539 = vpop.f32.mrb[0].mxu0
  %540 = vmatprep.mubr.f32.mxu0 0.0
  %541 = vmatmul.mubr.f32.gmra.mrb[0].mxu0 %v440
  %v542 = vpop.f32.mrb[0].mxu0
  %v543 = vadd.f32 0.0, %v542
  %v544 = vpop.f32.mrb[0].mxu0
  %545 = vmatprep.mubr.f32.mxu0 0.0
  %546 = vmatmul.mubr.f32.gmra.mrb[0].mxu0 %v443
  %v547 = vpop.f32.mrb[0].mxu0
  %v548 = vadd.f32 0.0, %v547
  %v549 = vpop.f32.mrb[0].mxu0
  %550 = vmatprep.mubr.f32.mxu0 0.0
  %551 = vmatmul.mubr.f32.gmra.mrb[0].mxu0 %v446
  %v552 = vpop.f32.mrb[0].mxu0
  %v553 = vadd.f32 0.0, %v552
  %v554 = vpop.f32.mrb[0].mxu0
  %555 = vmatprep.mubr.f32.mxu0 0.0
  %556 = vmatmul.mubr.f32.gmra.mrb[0].mxu0 %v449
  %v557 = vpop.f32.mrb[0].mxu0
  %v558 = vadd.f32 0.0, %v557
  %v559 = vpop.f32.mrb[0].mxu0
  %560 = vmatprep.mubr.f32.mxu0 0.0
  %561 = vmatmul.mubr.f32.gmra.mrb[0].mxu0 %v452
  %v562 = vpop.f32.mrb[0].mxu0
  %v563 = vadd.f32 0.0, %v562
  %v564 = vpop.f32.mrb[0].mxu0
  %565 = vmatprep.mubr.f32.mxu0 0.0
  %566 = vmatmul.mubr.f32.gmra.mrb[0].mxu0 %v455
  %v567 = vpop.f32.mrb[0].mxu0
  %v568 = vadd.f32 0.0, %v567
  %v569 = vpop.f32.mrb[0].mxu0
  %570 = vmatprep.mubr.f32.mxu0 0.0
  %571 = vmatmul.mubr.f32.gmra.mrb[0].mxu0 %v458
  %v572 = vpop.f32.mrb[0].mxu0
  %v573 = vadd.f32 0.0, %v572
  %v574 = vpop.f32.mrb[0].mxu0
  %575 = vmatprep.mubr.f32.mxu0 0.0
  %576 = vmatmul.mubr.f32.gmra.mrb[0].mxu0 %v461
  %v577 = vpop.f32.mrb[0].mxu0
  %v578 = vadd.f32 0.0, %v577
  %v579 = vpop.f32.mrb[0].mxu0
  %580 = vdwg.mxu0
  %v581 = vadd.f32 %v401, %v533
  %v582 = vadd.f32 %v402, %v538
  %v583 = vadd.f32 %v403, %v543
  %v584 = vadd.f32 %v404, %v548
  %v585 = vadd.f32 %v405, %v553
  %v586 = vadd.f32 %v406, %v558
  %v587 = vadd.f32 %v407, %v563
  %v588 = vadd.f32 %v408, %v568
  %v589 = vadd.f32 %v409, %v573
  %v590 = vadd.f32 %v410, %v578
  %s591 = scalar_lea.vmem %s1, 24
  %v592 = vld [vmem:[%s591] sm:$0xff]
  %v593 = vld [vmem:[%s591 + $0x8] sm:$0xff]
  %v594 = vld [vmem:[%s591 + $0x10] sm:$0xff]
  %v595 = vld [vmem:[%s591 + $0x18] sm:$0xff]
  %v596 = vld [vmem:[%s591 + $0x20] sm:$0xff]
  %v597 = vld [vmem:[%s591 + $0x28] sm:$0xff]
  %v598 = vld [vmem:[%s591 + $0x30] sm:$0xff]
  %v599 = vld [vmem:[%s591 + $0x38] sm:$0xff]
  %v600 = vld [vmem:[%s591 + $0x40] sm:$0xff]
  %v601 = vld [vmem:[%s591 + $0x48] sm:$0xff]
  %s602 = scalar_lea.vmem %s2, 240
  %v603 = vld [vmem:[%s602] sm:$0xff]
  %v604 = vld [vmem:[%s602 + $0x8] sm:$0xff]
  %v605 = vld [vmem:[%s602 + $0x10] sm:$0xff]
  %v606 = vld [vmem:[%s602 + $0x18] sm:$0xff]
  %v607 = vld [vmem:[%s602 + $0x20] sm:$0xff]
  %v608 = vld [vmem:[%s602 + $0x28] sm:$0xff]
  %v609 = vld [vmem:[%s602 + $0x30] sm:$0xff]
  %v610 = vld [vmem:[%s602 + $0x38] sm:$0xff]
  %v611 = vld [vmem:[%s602 + $0x40] sm:$0xff]
  %v612 = vld [vmem:[%s602 + $0x48] sm:$0x7]
  %v614 = vsel %vm71, %v592, 0
  %v617 = vsel %vm71, %v593, 0
  %v620 = vsel %vm71, %v594, 0
  %v623 = vsel %vm71, %v595, 0
  %v626 = vsel %vm71, %v596, 0
  %v629 = vsel %vm71, %v597, 0
  %v632 = vsel %vm71, %v598, 0
  %v635 = vsel %vm71, %v599, 0
  %v638 = vsel %vm71, %v600, 0
  %v641 = vsel %vm71, %v601, 0
  %v644 = vsel %vm102, %v612, 0
  %646 = vmatprep.subr.mxu0 0.0
  %647 = vmatpush1.msra.mxu0 %v603
  %648 = vmatprep.subr.mxu0 0.0
  %649 = vmatpush1.msra.mxu0 %v604
  %650 = vmatprep.subr.mxu0 0.0
  %651 = vmatpush1.msra.mxu0 %v605
  %652 = vmatprep.subr.mxu0 0.0
  %653 = vmatpush1.msra.mxu0 %v606
  %654 = vmatprep.subr.mxu0 0.0
  %655 = vmatpush1.msra.mxu0 %v607
  %656 = vmatprep.subr.mxu0 0.0
  %657 = vmatpush1.msra.mxu0 %v608
  %658 = vmatprep.subr.mxu0 0.0
  %659 = vmatpush1.msra.mxu0 %v609
  %660 = vmatprep.subr.mxu0 0.0
  %661 = vmatpush1.msra.mxu0 %v610
  %662 = vmatprep.subr.mxu0 0.0
  %663 = vmatpush1.msra.mxu0 %v611
  %664 = vmatprep.subr.mxu0 0.0
  %665 = vmatpush1.msra.mxu0 %v644
  %666 = vmatprep.subr.mxu0 0.0
  %667 = vmatpush1.msra.mxu0 0.0
  %668 = vmatprep.subr.mxu0 0.0
  %669 = vmatpush1.msra.mxu0 0.0
  %670 = vmatprep.subr.mxu0 0.0
  %671 = vmatpush1.msra.mxu0 0.0
  %672 = vmatprep.subr.mxu0 0.0
  %673 = vmatpush1.msra.mxu0 0.0
  %674 = vmatprep.subr.mxu0 0.0
  %675 = vmatpush1.msra.mxu0 0.0
  %676 = vmatprep.subr.mxu0 0.0
  %677 = vmatpush1.msra.mxu0 0.0
  %678 = vmatprep.subr.mxu0 0.0
  %679 = vmatpush1.msra.mxu0 0.0
  %680 = vmatprep.subr.mxu0 0.0
  %681 = vmatpush1.msra.mxu0 0.0
  %682 = vmatprep.subr.mxu0 0.0
  %683 = vmatpush1.msra.mxu0 0.0
  %684 = vmatprep.subr.mxu0 0.0
  %685 = vmatpush1.msra.mxu0 0.0
  %686 = vmatprep.subr.mxu0 0.0
  %687 = vmatpush1.msra.mxu0 0.0
  %688 = vmatprep.subr.mxu0 0.0
  %689 = vmatpush1.msra.mxu0 0.0
  %690 = vmatprep.subr.mxu0 0.0
  %691 = vmatpush1.msra.mxu0 0.0
  %692 = vmatprep.subr.mxu0 0.0
  %693 = vmatpush1.msra.mxu0 0.0
  %694 = vmatprep.subr.mxu0 0.0
  %695 = vmatpush1.msra.mxu0 0.0
  %696 = vmatprep.subr.mxu0 0.0
  %697 = vmatpush1.msra.mxu0 0.0
  %698 = vmatprep.subr.mxu0 0.0
  %699 = vmatpush1.msra.mxu0 0.0
  %700 = vmatprep.subr.mxu0 0.0
  %701 = vmatpush1.msra.mxu0 0.0
  %702 = vmatprep.subr.mxu0 0.0
  %703 = vmatpush1.msra.mxu0 0.0
  %704 = vmatprep.subr.mxu0 0.0
  %705 = vmatpush1.msra.mxu0 0.0
  %706 = vmatprep.subr.mxu0 0.0
  %707 = vmatpush1.msra.mxu0 0.0
  %708 = vmatprep.subr.mxu0 0.0
  %709 = vmatpush1.msra.mxu0 0.0
  %710 = vmatprep.mubr.f32.mxu0 0.0
  %711 = vmatmul.mubr.f32.gmra.mrb[0].mxu0 %v614
  %v712 = vpop.f32.mrb[0].mxu0
  %v713 = vadd.f32 0.0, %v712
  %v714 = vpop.f32.mrb[0].mxu0
  %715 = vmatprep.mubr.f32.mxu0 0.0
  %716 = vmatmul.mubr.f32.gmra.mrb[0].mxu0 %v617
  %v717 = vpop.f32.mrb[0].mxu0
  %v718 = vadd.f32 0.0, %v717
  %v719 = vpop.f32.mrb[0].mxu0
  %720 = vmatprep.mubr.f32.mxu0 0.0
  %721 = vmatmul.mubr.f32.gmra.mrb[0].mxu0 %v620
  %v722 = vpop.f32.mrb[0].mxu0
  %v723 = vadd.f32 0.0, %v722
  %v724 = vpop.f32.mrb[0].mxu0
  %725 = vmatprep.mubr.f32.mxu0 0.0
  %726 = vmatmul.mubr.f32.gmra.mrb[0].mxu0 %v623
  %v727 = vpop.f32.mrb[0].mxu0
  %v728 = vadd.f32 0.0, %v727
  %v729 = vpop.f32.mrb[0].mxu0
  %730 = vmatprep.mubr.f32.mxu0 0.0
  %731 = vmatmul.mubr.f32.gmra.mrb[0].mxu0 %v626
  %v732 = vpop.f32.mrb[0].mxu0
  %v733 = vadd.f32 0.0, %v732
  %v734 = vpop.f32.mrb[0].mxu0
  %735 = vmatprep.mubr.f32.mxu0 0.0
  %736 = vmatmul.mubr.f32.gmra.mrb[0].mxu0 %v629
  %v737 = vpop.f32.mrb[0].mxu0
  %v738 = vadd.f32 0.0, %v737
  %v739 = vpop.f32.mrb[0].mxu0
  %740 = vmatprep.mubr.f32.mxu0 0.0
  %741 = vmatmul.mubr.f32.gmra.mrb[0].mxu0 %v632
  %v742 = vpop.f32.mrb[0].mxu0
  %v743 = vadd.f32 0.0, %v742
  %v744 = vpop.f32.mrb[0].mxu0
  %745 = vmatprep.mubr.f32.mxu0 0.0
  %746 = vmatmul.mubr.f32.gmra.mrb[0].mxu0 %v635
  %v747 = vpop.f32.mrb[0].mxu0
  %v748 = vadd.f32 0.0, %v747
  %v749 = vpop.f32.mrb[0].mxu0
  %750 = vmatprep.mubr.f32.mxu0 0.0
  %751 = vmatmul.mubr.f32.gmra.mrb[0].mxu0 %v638
  %v752 = vpop.f32.mrb[0].mxu0
  %v753 = vadd.f32 0.0, %v752
  %v754 = vpop.f32.mrb[0].mxu0
  %755 = vmatprep.mubr.f32.mxu0 0.0
  %756 = vmatmul.mubr.f32.gmra.mrb[0].mxu0 %v641
  %v757 = vpop.f32.mrb[0].mxu0
  %v758 = vadd.f32 0.0, %v757
  %v759 = vpop.f32.mrb[0].mxu0
  %760 = vdwg.mxu0
  %v761 = vadd.f32 %v581, %v713
  %v762 = vadd.f32 %v582, %v718
  %v763 = vadd.f32 %v583, %v723
  %v764 = vadd.f32 %v584, %v728
  %v765 = vadd.f32 %v585, %v733
  %v766 = vadd.f32 %v586, %v738
  %v767 = vadd.f32 %v587, %v743
  %v768 = vadd.f32 %v588, %v748
  %v769 = vadd.f32 %v589, %v753
  %v770 = vadd.f32 %v590, %v758
  %s771 = scalar_lea.vmem %s1, 32
  %v772 = vld [vmem:[%s771] sm:$0xff]
  %v773 = vld [vmem:[%s771 + $0x8] sm:$0xff]
  %v774 = vld [vmem:[%s771 + $0x10] sm:$0xff]
  %v775 = vld [vmem:[%s771 + $0x18] sm:$0xff]
  %v776 = vld [vmem:[%s771 + $0x20] sm:$0xff]
  %v777 = vld [vmem:[%s771 + $0x28] sm:$0xff]
  %v778 = vld [vmem:[%s771 + $0x30] sm:$0xff]
  %v779 = vld [vmem:[%s771 + $0x38] sm:$0xff]
  %v780 = vld [vmem:[%s771 + $0x40] sm:$0xff]
  %v781 = vld [vmem:[%s771 + $0x48] sm:$0xff]
  %s782 = scalar_lea.vmem %s2, 320
  %v783 = vld [vmem:[%s782] sm:$0xff]
  %v784 = vld [vmem:[%s782 + $0x8] sm:$0xff]
  %v785 = vld [vmem:[%s782 + $0x10] sm:$0xff]
  %v786 = vld [vmem:[%s782 + $0x18] sm:$0xff]
  %v787 = vld [vmem:[%s782 + $0x20] sm:$0xff]
  %v788 = vld [vmem:[%s782 + $0x28] sm:$0xff]
  %v789 = vld [vmem:[%s782 + $0x30] sm:$0xff]
  %v790 = vld [vmem:[%s782 + $0x38] sm:$0xff]
  %v791 = vld [vmem:[%s782 + $0x40] sm:$0xff]
  %v792 = vld [vmem:[%s782 + $0x48] sm:$0x7]
  %v794 = vsel %vm71, %v772, 0
  %v797 = vsel %vm71, %v773, 0
  %v800 = vsel %vm71, %v774, 0
  %v803 = vsel %vm71, %v775, 0
  %v806 = vsel %vm71, %v776, 0
  %v809 = vsel %vm71, %v777, 0
  %v812 = vsel %vm71, %v778, 0
  %v815 = vsel %vm71, %v779, 0
  %v818 = vsel %vm71, %v780, 0
  %v821 = vsel %vm71, %v781, 0
  %v824 = vsel %vm102, %v792, 0
  %826 = vmatprep.subr.mxu0 0.0
  %827 = vmatpush1.msra.mxu0 %v783
  %828 = vmatprep.subr.mxu0 0.0
  %829 = vmatpush1.msra.mxu0 %v784
  %830 = vmatprep.subr.mxu0 0.0
  %831 = vmatpush1.msra.mxu0 %v785
  %832 = vmatprep.subr.mxu0 0.0
  %833 = vmatpush1.msra.mxu0 %v786
  %834 = vmatprep.subr.mxu0 0.0
  %835 = vmatpush1.msra.mxu0 %v787
  %836 = vmatprep.subr.mxu0 0.0
  %837 = vmatpush1.msra.mxu0 %v788
  %838 = vmatprep.subr.mxu0 0.0
  %839 = vmatpush1.msra.mxu0 %v789
  %840 = vmatprep.subr.mxu0 0.0
  %841 = vmatpush1.msra.mxu0 %v790
  %842 = vmatprep.subr.mxu0 0.0
  %843 = vmatpush1.msra.mxu0 %v791
  %844 = vmatprep.subr.mxu0 0.0
  %845 = vmatpush1.msra.mxu0 %v824
  %846 = vmatprep.subr.mxu0 0.0
  %847 = vmatpush1.msra.mxu0 0.0
  %848 = vmatprep.subr.mxu0 0.0
  %849 = vmatpush1.msra.mxu0 0.0
  %850 = vmatprep.subr.mxu0 0.0
  %851 = vmatpush1.msra.mxu0 0.0
  %852 = vmatprep.subr.mxu0 0.0
  %853 = vmatpush1.msra.mxu0 0.0
  %854 = vmatprep.subr.mxu0 0.0
  %855 = vmatpush1.msra.mxu0 0.0
  %856 = vmatprep.subr.mxu0 0.0
  %857 = vmatpush1.msra.mxu0 0.0
  %858 = vmatprep.subr.mxu0 0.0
  %859 = vmatpush1.msra.mxu0 0.0
  %860 = vmatprep.subr.mxu0 0.0
  %861 = vmatpush1.msra.mxu0 0.0
  %862 = vmatprep.subr.mxu0 0.0
  %863 = vmatpush1.msra.mxu0 0.0
  %864 = vmatprep.subr.mxu0 0.0
  %865 = vmatpush1.msra.mxu0 0.0
  %866 = vmatprep.subr.mxu0 0.0
  %867 = vmatpush1.msra.mxu0 0.0
  %868 = vmatprep.subr.mxu0 0.0
  %869 = vmatpush1.msra.mxu0 0.0
  %870 = vmatprep.subr.mxu0 0.0
  %871 = vmatpush1.msra.mxu0 0.0
  %872 = vmatprep.subr.mxu0 0.0
  %873 = vmatpush1.msra.mxu0 0.0
  %874 = vmatprep.subr.mxu0 0.0
  %875 = vmatpush1.msra.mxu0 0.0
  %876 = vmatprep.subr.mxu0 0.0
  %877 = vmatpush1.msra.mxu0 0.0
  %878 = vmatprep.subr.mxu0 0.0
  %879 = vmatpush1.msra.mxu0 0.0
  %880 = vmatprep.subr.mxu0 0.0
  %881 = vmatpush1.msra.mxu0 0.0
  %882 = vmatprep.subr.mxu0 0.0
  %883 = vmatpush1.msra.mxu0 0.0
  %884 = vmatprep.subr.mxu0 0.0
  %885 = vmatpush1.msra.mxu0 0.0
  %886 = vmatprep.subr.mxu0 0.0
  %887 = vmatpush1.msra.mxu0 0.0
  %888 = vmatprep.subr.mxu0 0.0
  %889 = vmatpush1.msra.mxu0 0.0
  %890 = vmatprep.mubr.f32.mxu0 0.0
  %891 = vmatmul.mubr.f32.gmra.mrb[0].mxu0 %v794
  %v892 = vpop.f32.mrb[0].mxu0
  %v893 = vadd.f32 0.0, %v892
  %v894 = vpop.f32.mrb[0].mxu0
  %895 = vmatprep.mubr.f32.mxu0 0.0
  %896 = vmatmul.mubr.f32.gmra.mrb[0].mxu0 %v797
  %v897 = vpop.f32.mrb[0].mxu0
  %v898 = vadd.f32 0.0, %v897
  %v899 = vpop.f32.mrb[0].mxu0
  %900 = vmatprep.mubr.f32.mxu0 0.0
  %901 = vmatmul.mubr.f32.gmra.mrb[0].mxu0 %v800
  %v902 = vpop.f32.mrb[0].mxu0
  %v903 = vadd.f32 0.0, %v902
  %v904 = vpop.f32.mrb[0].mxu0
  %905 = vmatprep.mubr.f32.mxu0 0.0
  %906 = vmatmul.mubr.f32.gmra.mrb[0].mxu0 %v803
  %v907 = vpop.f32.mrb[0].mxu0
  %v908 = vadd.f32 0.0, %v907
  %v909 = vpop.f32.mrb[0].mxu0
  %910 = vmatprep.mubr.f32.mxu0 0.0
  %911 = vmatmul.mubr.f32.gmra.mrb[0].mxu0 %v806
  %v912 = vpop.f32.mrb[0].mxu0
  %v913 = vadd.f32 0.0, %v912
  %v914 = vpop.f32.mrb[0].mxu0
  %915 = vmatprep.mubr.f32.mxu0 0.0
  %916 = vmatmul.mubr.f32.gmra.mrb[0].mxu0 %v809
  %v917 = vpop.f32.mrb[0].mxu0
  %v918 = vadd.f32 0.0, %v917
  %v919 = vpop.f32.mrb[0].mxu0
  %920 = vmatprep.mubr.f32.mxu0 0.0
  %921 = vmatmul.mubr.f32.gmra.mrb[0].mxu0 %v812
  %v922 = vpop.f32.mrb[0].mxu0
  %v923 = vadd.f32 0.0, %v922
  %v924 = vpop.f32.mrb[0].mxu0
  %925 = vmatprep.mubr.f32.mxu0 0.0
  %926 = vmatmul.mubr.f32.gmra.mrb[0].mxu0 %v815
  %v927 = vpop.f32.mrb[0].mxu0
  %v928 = vadd.f32 0.0, %v927
  %v929 = vpop.f32.mrb[0].mxu0
  %930 = vmatprep.mubr.f32.mxu0 0.0
  %931 = vmatmul.mubr.f32.gmra.mrb[0].mxu0 %v818
  %v932 = vpop.f32.mrb[0].mxu0
  %v933 = vadd.f32 0.0, %v932
  %v934 = vpop.f32.mrb[0].mxu0
  %935 = vmatprep.mubr.f32.mxu0 0.0
  %936 = vmatmul.mubr.f32.gmra.mrb[0].mxu0 %v821
  %v937 = vpop.f32.mrb[0].mxu0
  %v938 = vadd.f32 0.0, %v937
  %v939 = vpop.f32.mrb[0].mxu0
  %940 = vdwg.mxu0
  %v941 = vadd.f32 %v761, %v893
  %v942 = vadd.f32 %v762, %v898
  %v943 = vadd.f32 %v763, %v903
  %v944 = vadd.f32 %v764, %v908
  %v945 = vadd.f32 %v765, %v913
  %v946 = vadd.f32 %v766, %v918
  %v947 = vadd.f32 %v767, %v923
  %v948 = vadd.f32 %v768, %v928
  %v949 = vadd.f32 %v769, %v933
  %v950 = vadd.f32 %v770, %v938
  %s951 = scalar_lea.vmem %s1, 40
  %v952 = vld [vmem:[%s951] sm:$0xff]
  %v953 = vld [vmem:[%s951 + $0x8] sm:$0xff]
  %v954 = vld [vmem:[%s951 + $0x10] sm:$0xff]
  %v955 = vld [vmem:[%s951 + $0x18] sm:$0xff]
  %v956 = vld [vmem:[%s951 + $0x20] sm:$0xff]
  %v957 = vld [vmem:[%s951 + $0x28] sm:$0xff]
  %v958 = vld [vmem:[%s951 + $0x30] sm:$0xff]
  %v959 = vld [vmem:[%s951 + $0x38] sm:$0xff]
  %v960 = vld [vmem:[%s951 + $0x40] sm:$0xff]
  %v961 = vld [vmem:[%s951 + $0x48] sm:$0xff]
  %s962 = scalar_lea.vmem %s2, 400
  %v963 = vld [vmem:[%s962] sm:$0xff]
  %v964 = vld [vmem:[%s962 + $0x8] sm:$0xff]
  %v965 = vld [vmem:[%s962 + $0x10] sm:$0xff]
  %v966 = vld [vmem:[%s962 + $0x18] sm:$0xff]
  %v967 = vld [vmem:[%s962 + $0x20] sm:$0xff]
  %v968 = vld [vmem:[%s962 + $0x28] sm:$0xff]
  %v969 = vld [vmem:[%s962 + $0x30] sm:$0xff]
  %v970 = vld [vmem:[%s962 + $0x38] sm:$0xff]
  %v971 = vld [vmem:[%s962 + $0x40] sm:$0xff]
  %v972 = vld [vmem:[%s962 + $0x48] sm:$0x7]
  %v974 = vsel %vm71, %v952, 0
  %v977 = vsel %vm71, %v953, 0
  %v980 = vsel %vm71, %v954, 0
  %v983 = vsel %vm71, %v955, 0
  %v986 = vsel %vm71, %v956, 0
  %v989 = vsel %vm71, %v957, 0
  %v992 = vsel %vm71, %v958, 0
  %v995 = vsel %vm71, %v959, 0
  %v998 = vsel %vm71, %v960, 0
  %v1001 = vsel %vm71, %v961, 0
  %v1004 = vsel %vm102, %v972, 0
  %1006 = vmatprep.subr.mxu0 0.0
  %1007 = vmatpush1.msra.mxu0 %v963
  %1008 = vmatprep.subr.mxu0 0.0
  %1009 = vmatpush1.msra.mxu0 %v964
  %1010 = vmatprep.subr.mxu0 0.0
  %1011 = vmatpush1.msra.mxu0 %v965
  %1012 = vmatprep.subr.mxu0 0.0
  %1013 = vmatpush1.msra.mxu0 %v966
  %1014 = vmatprep.subr.mxu0 0.0
  %1015 = vmatpush1.msra.mxu0 %v967
  %1016 = vmatprep.subr.mxu0 0.0
  %1017 = vmatpush1.msra.mxu0 %v968
  %1018 = vmatprep.subr.mxu0 0.0
  %1019 = vmatpush1.msra.mxu0 %v969
  %1020 = vmatprep.subr.mxu0 0.0
  %1021 = vmatpush1.msra.mxu0 %v970
  %1022 = vmatprep.subr.mxu0 0.0
  %1023 = vmatpush1.msra.mxu0 %v971
  %1024 = vmatprep.subr.mxu0 0.0
  %1025 = vmatpush1.msra.mxu0 %v1004
  %1026 = vmatprep.subr.mxu0 0.0
  %1027 = vmatpush1.msra.mxu0 0.0
  %1028 = vmatprep.subr.mxu0 0.0
  %1029 = vmatpush1.msra.mxu0 0.0
  %1030 = vmatprep.subr.mxu0 0.0
  %1031 = vmatpush1.msra.mxu0 0.0
  %1032 = vmatprep.subr.mxu0 0.0
  %1033 = vmatpush1.msra.mxu0 0.0
  %1034 = vmatprep.subr.mxu0 0.0
  %1035 = vmatpush1.msra.mxu0 0.0
  %1036 = vmatprep.subr.mxu0 0.0
  %1037 = vmatpush1.msra.mxu0 0.0
  %1038 = vmatprep.subr.mxu0 0.0
  %1039 = vmatpush1.msra.mxu0 0.0
  %1040 = vmatprep.subr.mxu0 0.0
  %1041 = vmatpush1.msra.mxu0 0.0
  %1042 = vmatprep.subr.mxu0 0.0
  %1043 = vmatpush1.msra.mxu0 0.0
  %1044 = vmatprep.subr.mxu0 0.0
  %1045 = vmatpush1.msra.mxu0 0.0
  %1046 = vmatprep.subr.mxu0 0.0
  %1047 = vmatpush1.msra.mxu0 0.0
  %1048 = vmatprep.subr.mxu0 0.0
  %1049 = vmatpush1.msra.mxu0 0.0
  %1050 = vmatprep.subr.mxu0 0.0
  %1051 = vmatpush1.msra.mxu0 0.0
  %1052 = vmatprep.subr.mxu0 0.0
  %1053 = vmatpush1.msra.mxu0 0.0
  %1054 = vmatprep.subr.mxu0 0.0
  %1055 = vmatpush1.msra.mxu0 0.0
  %1056 = vmatprep.subr.mxu0 0.0
  %1057 = vmatpush1.msra.mxu0 0.0
  %1058 = vmatprep.subr.mxu0 0.0
  %1059 = vmatpush1.msra.mxu0 0.0
  %1060 = vmatprep.subr.mxu0 0.0
  %1061 = vmatpush1.msra.mxu0 0.0
  %1062 = vmatprep.subr.mxu0 0.0
  %1063 = vmatpush1.msra.mxu0 0.0
  %1064 = vmatprep.subr.mxu0 0.0
  %1065 = vmatpush1.msra.mxu0 0.0
  %1066 = vmatprep.subr.mxu0 0.0
  %1067 = vmatpush1.msra.mxu0 0.0
  %1068 = vmatprep.subr.mxu0 0.0
  %1069 = vmatpush1.msra.mxu0 0.0
  %1070 = vmatprep.mubr.f32.mxu0 0.0
  %1071 = vmatmul.mubr.f32.gmra.mrb[0].mxu0 %v974
  %v1072 = vpop.f32.mrb[0].mxu0
  %v1073 = vadd.f32 0.0, %v1072
  %v1074 = vpop.f32.mrb[0].mxu0
  %1075 = vmatprep.mubr.f32.mxu0 0.0
  %1076 = vmatmul.mubr.f32.gmra.mrb[0].mxu0 %v977
  %v1077 = vpop.f32.mrb[0].mxu0
  %v1078 = vadd.f32 0.0, %v1077
  %v1079 = vpop.f32.mrb[0].mxu0
  %1080 = vmatprep.mubr.f32.mxu0 0.0
  %1081 = vmatmul.mubr.f32.gmra.mrb[0].mxu0 %v980
  %v1082 = vpop.f32.mrb[0].mxu0
  %v1083 = vadd.f32 0.0, %v1082
  %v1084 = vpop.f32.mrb[0].mxu0
  %1085 = vmatprep.mubr.f32.mxu0 0.0
  %1086 = vmatmul.mubr.f32.gmra.mrb[0].mxu0 %v983
  %v1087 = vpop.f32.mrb[0].mxu0
  %v1088 = vadd.f32 0.0, %v1087
  %v1089 = vpop.f32.mrb[0].mxu0
  %1090 = vmatprep.mubr.f32.mxu0 0.0
  %1091 = vmatmul.mubr.f32.gmra.mrb[0].mxu0 %v986
  %v1092 = vpop.f32.mrb[0].mxu0
  %v1093 = vadd.f32 0.0, %v1092
  %v1094 = vpop.f32.mrb[0].mxu0
  %1095 = vmatprep.mubr.f32.mxu0 0.0
  %1096 = vmatmul.mubr.f32.gmra.mrb[0].mxu0 %v989
  %v1097 = vpop.f32.mrb[0].mxu0
  %v1098 = vadd.f32 0.0, %v1097
  %v1099 = vpop.f32.mrb[0].mxu0
  %1100 = vmatprep.mubr.f32.mxu0 0.0
  %1101 = vmatmul.mubr.f32.gmra.mrb[0].mxu0 %v992
  %v1102 = vpop.f32.mrb[0].mxu0
  %v1103 = vadd.f32 0.0, %v1102
  %v1104 = vpop.f32.mrb[0].mxu0
  %1105 = vmatprep.mubr.f32.mxu0 0.0
  %1106 = vmatmul.mubr.f32.gmra.mrb[0].mxu0 %v995
  %v1107 = vpop.f32.mrb[0].mxu0
  %v1108 = vadd.f32 0.0, %v1107
  %v1109 = vpop.f32.mrb[0].mxu0
  %1110 = vmatprep.mubr.f32.mxu0 0.0
  %1111 = vmatmul.mubr.f32.gmra.mrb[0].mxu0 %v998
  %v1112 = vpop.f32.mrb[0].mxu0
  %v1113 = vadd.f32 0.0, %v1112
  %v1114 = vpop.f32.mrb[0].mxu0
  %1115 = vmatprep.mubr.f32.mxu0 0.0
  %1116 = vmatmul.mubr.f32.gmra.mrb[0].mxu0 %v1001
  %v1117 = vpop.f32.mrb[0].mxu0
  %v1118 = vadd.f32 0.0, %v1117
  %v1119 = vpop.f32.mrb[0].mxu0
  %1120 = vdwg.mxu0
  %v1121 = vadd.f32 %v941, %v1073
  %v1122 = vadd.f32 %v942, %v1078
  %v1123 = vadd.f32 %v943, %v1083
  %v1124 = vadd.f32 %v944, %v1088
  %v1125 = vadd.f32 %v945, %v1093
  %v1126 = vadd.f32 %v946, %v1098
  %v1127 = vadd.f32 %v947, %v1103
  %v1128 = vadd.f32 %v948, %v1108
  %v1129 = vadd.f32 %v949, %v1113
  %v1130 = vadd.f32 %v950, %v1118
  %s1131 = scalar_lea.vmem %s1, 48
  %v1132 = vld [vmem:[%s1131] sm:$0xff]
  %v1133 = vld [vmem:[%s1131 + $0x8] sm:$0xff]
  %v1134 = vld [vmem:[%s1131 + $0x10] sm:$0xff]
  %v1135 = vld [vmem:[%s1131 + $0x18] sm:$0xff]
  %v1136 = vld [vmem:[%s1131 + $0x20] sm:$0xff]
  %v1137 = vld [vmem:[%s1131 + $0x28] sm:$0xff]
  %v1138 = vld [vmem:[%s1131 + $0x30] sm:$0xff]
  %v1139 = vld [vmem:[%s1131 + $0x38] sm:$0xff]
  %v1140 = vld [vmem:[%s1131 + $0x40] sm:$0xff]
  %v1141 = vld [vmem:[%s1131 + $0x48] sm:$0xff]
  %s1142 = scalar_lea.vmem %s2, 480
  %v1143 = vld [vmem:[%s1142] sm:$0xff]
  %v1144 = vld [vmem:[%s1142 + $0x8] sm:$0xff]
  %v1145 = vld [vmem:[%s1142 + $0x10] sm:$0xff]
  %v1146 = vld [vmem:[%s1142 + $0x18] sm:$0xff]
  %v1147 = vld [vmem:[%s1142 + $0x20] sm:$0xff]
  %v1148 = vld [vmem:[%s1142 + $0x28] sm:$0xff]
  %v1149 = vld [vmem:[%s1142 + $0x30] sm:$0xff]
  %v1150 = vld [vmem:[%s1142 + $0x38] sm:$0xff]
  %v1151 = vld [vmem:[%s1142 + $0x40] sm:$0xff]
  %v1152 = vld [vmem:[%s1142 + $0x48] sm:$0x7]
  %v1154 = vsel %vm71, %v1132, 0
  %v1157 = vsel %vm71, %v1133, 0
  %v1160 = vsel %vm71, %v1134, 0
  %v1163 = vsel %vm71, %v1135, 0
  %v1166 = vsel %vm71, %v1136, 0
  %v1169 = vsel %vm71, %v1137, 0
  %v1172 = vsel %vm71, %v1138, 0
  %v1175 = vsel %vm71, %v1139, 0
  %v1178 = vsel %vm71, %v1140, 0
  %v1181 = vsel %vm71, %v1141, 0
  %v1184 = vsel %vm102, %v1152, 0
  %1186 = vmatprep.subr.mxu0 0.0
  %1187 = vmatpush1.msra.mxu0 %v1143
  %1188 = vmatprep.subr.mxu0 0.0
  %1189 = vmatpush1.msra.mxu0 %v1144
  %1190 = vmatprep.subr.mxu0 0.0
  %1191 = vmatpush1.msra.mxu0 %v1145
  %1192 = vmatprep.subr.mxu0 0.0
  %1193 = vmatpush1.msra.mxu0 %v1146
  %1194 = vmatprep.subr.mxu0 0.0
  %1195 = vmatpush1.msra.mxu0 %v1147
  %1196 = vmatprep.subr.mxu0 0.0
  %1197 = vmatpush1.msra.mxu0 %v1148
  %1198 = vmatprep.subr.mxu0 0.0
  %1199 = vmatpush1.msra.mxu0 %v1149
  %1200 = vmatprep.subr.mxu0 0.0
  %1201 = vmatpush1.msra.mxu0 %v1150
  %1202 = vmatprep.subr.mxu0 0.0
  %1203 = vmatpush1.msra.mxu0 %v1151
  %1204 = vmatprep.subr.mxu0 0.0
  %1205 = vmatpush1.msra.mxu0 %v1184
  %1206 = vmatprep.subr.mxu0 0.0
  %1207 = vmatpush1.msra.mxu0 0.0
  %1208 = vmatprep.subr.mxu0 0.0
  %1209 = vmatpush1.msra.mxu0 0.0
  %1210 = vmatprep.subr.mxu0 0.0
  %1211 = vmatpush1.msra.mxu0 0.0
  %1212 = vmatprep.subr.mxu0 0.0
  %1213 = vmatpush1.msra.mxu0 0.0
  %1214 = vmatprep.subr.mxu0 0.0
  %1215 = vmatpush1.msra.mxu0 0.0
  %1216 = vmatprep.subr.mxu0 0.0
  %1217 = vmatpush1.msra.mxu0 0.0
  %1218 = vmatprep.subr.mxu0 0.0
  %1219 = vmatpush1.msra.mxu0 0.0
  %1220 = vmatprep.subr.mxu0 0.0
  %1221 = vmatpush1.msra.mxu0 0.0
  %1222 = vmatprep.subr.mxu0 0.0
  %1223 = vmatpush1.msra.mxu0 0.0
  %1224 = vmatprep.subr.mxu0 0.0
  %1225 = vmatpush1.msra.mxu0 0.0
  %1226 = vmatprep.subr.mxu0 0.0
  %1227 = vmatpush1.msra.mxu0 0.0
  %1228 = vmatprep.subr.mxu0 0.0
  %1229 = vmatpush1.msra.mxu0 0.0
  %1230 = vmatprep.subr.mxu0 0.0
  %1231 = vmatpush1.msra.mxu0 0.0
  %1232 = vmatprep.subr.mxu0 0.0
  %1233 = vmatpush1.msra.mxu0 0.0
  %1234 = vmatprep.subr.mxu0 0.0
  %1235 = vmatpush1.msra.mxu0 0.0
  %1236 = vmatprep.subr.mxu0 0.0
  %1237 = vmatpush1.msra.mxu0 0.0
  %1238 = vmatprep.subr.mxu0 0.0
  %1239 = vmatpush1.msra.mxu0 0.0
  %1240 = vmatprep.subr.mxu0 0.0
  %1241 = vmatpush1.msra.mxu0 0.0
  %1242 = vmatprep.subr.mxu0 0.0
  %1243 = vmatpush1.msra.mxu0 0.0
  %1244 = vmatprep.subr.mxu0 0.0
  %1245 = vmatpush1.msra.mxu0 0.0
  %1246 = vmatprep.subr.mxu0 0.0
  %1247 = vmatpush1.msra.mxu0 0.0
  %1248 = vmatprep.subr.mxu0 0.0
  %1249 = vmatpush1.msra.mxu0 0.0
  %1250 = vmatprep.mubr.f32.mxu0 0.0
  %1251 = vmatmul.mubr.f32.gmra.mrb[0].mxu0 %v1154
  %v1252 = vpop.f32.mrb[0].mxu0
  %v1253 = vadd.f32 0.0, %v1252
  %v1254 = vpop.f32.mrb[0].mxu0
  %1255 = vmatprep.mubr.f32.mxu0 0.0
  %1256 = vmatmul.mubr.f32.gmra.mrb[0].mxu0 %v1157
  %v1257 = vpop.f32.mrb[0].mxu0
  %v1258 = vadd.f32 0.0, %v1257
  %v1259 = vpop.f32.mrb[0].mxu0
  %1260 = vmatprep.mubr.f32.mxu0 0.0
  %1261 = vmatmul.mubr.f32.gmra.mrb[0].mxu0 %v1160
  %v1262 = vpop.f32.mrb[0].mxu0
  %v1263 = vadd.f32 0.0, %v1262
  %v1264 = vpop.f32.mrb[0].mxu0
  %1265 = vmatprep.mubr.f32.mxu0 0.0
  %1266 = vmatmul.mubr.f32.gmra.mrb[0].mxu0 %v1163
  %v1267 = vpop.f32.mrb[0].mxu0
  %v1268 = vadd.f32 0.0, %v1267
  %v1269 = vpop.f32.mrb[0].mxu0
  %1270 = vmatprep.mubr.f32.mxu0 0.0
  %1271 = vmatmul.mubr.f32.gmra.mrb[0].mxu0 %v1166
  %v1272 = vpop.f32.mrb[0].mxu0
  %v1273 = vadd.f32 0.0, %v1272
  %v1274 = vpop.f32.mrb[0].mxu0
  %1275 = vmatprep.mubr.f32.mxu0 0.0
  %1276 = vmatmul.mubr.f32.gmra.mrb[0].mxu0 %v1169
  %v1277 = vpop.f32.mrb[0].mxu0
  %v1278 = vadd.f32 0.0, %v1277
  %v1279 = vpop.f32.mrb[0].mxu0
  %1280 = vmatprep.mubr.f32.mxu0 0.0
  %1281 = vmatmul.mubr.f32.gmra.mrb[0].mxu0 %v1172
  %v1282 = vpop.f32.mrb[0].mxu0
  %v1283 = vadd.f32 0.0, %v1282
  %v1284 = vpop.f32.mrb[0].mxu0
  %1285 = vmatprep.mubr.f32.mxu0 0.0
  %1286 = vmatmul.mubr.f32.gmra.mrb[0].mxu0 %v1175
  %v1287 = vpop.f32.mrb[0].mxu0
  %v1288 = vadd.f32 0.0, %v1287
  %v1289 = vpop.f32.mrb[0].mxu0
  %1290 = vmatprep.mubr.f32.mxu0 0.0
  %1291 = vmatmul.mubr.f32.gmra.mrb[0].mxu0 %v1178
  %v1292 = vpop.f32.mrb[0].mxu0
  %v1293 = vadd.f32 0.0, %v1292
  %v1294 = vpop.f32.mrb[0].mxu0
  %1295 = vmatprep.mubr.f32.mxu0 0.0
  %1296 = vmatmul.mubr.f32.gmra.mrb[0].mxu0 %v1181
  %v1297 = vpop.f32.mrb[0].mxu0
  %v1298 = vadd.f32 0.0, %v1297
  %v1299 = vpop.f32.mrb[0].mxu0
  %1300 = vdwg.mxu0
  %v1301 = vadd.f32 %v1121, %v1253
  %v1302 = vadd.f32 %v1122, %v1258
  %v1303 = vadd.f32 %v1123, %v1263
  %v1304 = vadd.f32 %v1124, %v1268
  %v1305 = vadd.f32 %v1125, %v1273
  %v1306 = vadd.f32 %v1126, %v1278
  %v1307 = vadd.f32 %v1127, %v1283
  %v1308 = vadd.f32 %v1128, %v1288
  %v1309 = vadd.f32 %v1129, %v1293
  %v1310 = vadd.f32 %v1130, %v1298
  %v1311 = vld [vmem:[%s4] sm:$0xff]
  %v1312 = vld [vmem:[%s4 + $0x8] sm:$0xff]
  %v1313 = vld [vmem:[%s4 + $0x10] sm:$0xff]
  %v1314 = vld [vmem:[%s4 + $0x18] sm:$0xff]
  %v1315 = vld [vmem:[%s4 + $0x20] sm:$0xff]
  %v1316 = vld [vmem:[%s4 + $0x28] sm:$0xff]
  %v1317 = vld [vmem:[%s4 + $0x30] sm:$0xff]
  %v1318 = vld [vmem:[%s4 + $0x38] sm:$0xf]
  %v1319 = vld [vmem:[%s5] sm:$0x1]
  %v1321 = vlaneseq
  %v1322 = vshrl.u32 %v1321, 7
  %v1323 = vsub.s32 0, %v1322
  %v1324 = vrot.slane %v1319, %v1323
  %vm1326 = vcmask 490496
  %v1328 = vsel %vm1326, %v1301, 0
  %v1331 = vsel %vm1326, %v1302, 0
  %v1334 = vsel %vm1326, %v1303, 0
  %v1337 = vsel %vm1326, %v1304, 0
  %v1340 = vsel %vm1326, %v1305, 0
  %v1343 = vsel %vm1326, %v1306, 0
  %v1346 = vsel %vm1326, %v1307, 0
  %v1349 = vsel %vm1326, %v1308, 0
  %v1352 = vsel %vm1326, %v1309, 0
  %v1355 = vsel %vm1326, %v1310, 0
  %vm1357 = vcmask 1043456
  %v1359 = vsel %vm1357, %v1318, 0
  %1361 = vmatprep.subr.mxu0 0.0
  %1362 = vmatpush1.msra.mxu0 %v1311
  %1363 = vmatprep.subr.mxu0 0.0
  %1364 = vmatpush1.msra.mxu0 %v1312
  %1365 = vmatprep.subr.mxu0 0.0
  %1366 = vmatpush1.msra.mxu0 %v1313
  %1367 = vmatprep.subr.mxu0 0.0
  %1368 = vmatpush1.msra.mxu0 %v1314
  %1369 = vmatprep.subr.mxu0 0.0
  %1370 = vmatpush1.msra.mxu0 %v1315
  %1371 = vmatprep.subr.mxu0 0.0
  %1372 = vmatpush1.msra.mxu0 %v1316
  %1373 = vmatprep.subr.mxu0 0.0
  %1374 = vmatpush1.msra.mxu0 %v1317
  %1375 = vmatprep.subr.mxu0 0.0
  %1376 = vmatpush1.msra.mxu0 %v1359
  %1377 = vmatprep.subr.mxu0 0.0
  %1378 = vmatpush1.msra.mxu0 0.0
  %1379 = vmatprep.subr.mxu0 0.0
  %1380 = vmatpush1.msra.mxu0 0.0
  %1381 = vmatprep.subr.mxu0 0.0
  %1382 = vmatpush1.msra.mxu0 0.0
  %1383 = vmatprep.subr.mxu0 0.0
  %1384 = vmatpush1.msra.mxu0 0.0
  %1385 = vmatprep.subr.mxu0 0.0
  %1386 = vmatpush1.msra.mxu0 0.0
  %1387 = vmatprep.subr.mxu0 0.0
  %1388 = vmatpush1.msra.mxu0 0.0
  %1389 = vmatprep.subr.mxu0 0.0
  %1390 = vmatpush1.msra.mxu0 0.0
  %1391 = vmatprep.subr.mxu0 0.0
  %1392 = vmatpush1.msra.mxu0 0.0
  %1393 = vmatprep.subr.mxu0 0.0
  %1394 = vmatpush1.msra.mxu0 0.0
  %1395 = vmatprep.subr.mxu0 0.0
  %1396 = vmatpush1.msra.mxu0 0.0
  %1397 = vmatprep.subr.mxu0 0.0
  %1398 = vmatpush1.msra.mxu0 0.0
  %1399 = vmatprep.subr.mxu0 0.0
  %1400 = vmatpush1.msra.mxu0 0.0
  %1401 = vmatprep.subr.mxu0 0.0
  %1402 = vmatpush1.msra.mxu0 0.0
  %1403 = vmatprep.subr.mxu0 0.0
  %1404 = vmatpush1.msra.mxu0 0.0
  %1405 = vmatprep.subr.mxu0 0.0
  %1406 = vmatpush1.msra.mxu0 0.0
  %1407 = vmatprep.subr.mxu0 0.0
  %1408 = vmatpush1.msra.mxu0 0.0
  %1409 = vmatprep.subr.mxu0 0.0
  %1410 = vmatpush1.msra.mxu0 0.0
  %1411 = vmatprep.subr.mxu0 0.0
  %1412 = vmatpush1.msra.mxu0 0.0
  %1413 = vmatprep.subr.mxu0 0.0
  %1414 = vmatpush1.msra.mxu0 0.0
  %1415 = vmatprep.subr.mxu0 0.0
  %1416 = vmatpush1.msra.mxu0 0.0
  %1417 = vmatprep.subr.mxu0 0.0
  %1418 = vmatpush1.msra.mxu0 0.0
  %1419 = vmatprep.subr.mxu0 0.0
  %1420 = vmatpush1.msra.mxu0 0.0
  %1421 = vmatprep.subr.mxu0 0.0
  %1422 = vmatpush1.msra.mxu0 0.0
  %1423 = vmatprep.subr.mxu0 0.0
  %1424 = vmatpush1.msra.mxu0 0.0
  %1425 = vmatprep.mubr.f32.mxu0 0.0
  %1426 = vmatmul.mubr.f32.gmra.mrb[0].mxu0 %v1328
  %v1427 = vpop.f32.mrb[0].mxu0
  %v1428 = vadd.f32 %v1324, %v1427
  %v1429 = vpop.f32.mrb[0].mxu0
  %1430 = vmatprep.mubr.f32.mxu0 0.0
  %1431 = vmatmul.mubr.f32.gmra.mrb[0].mxu0 %v1331
  %v1432 = vpop.f32.mrb[0].mxu0
  %v1433 = vadd.f32 %v1324, %v1432
  %v1434 = vpop.f32.mrb[0].mxu0
  %1435 = vmatprep.mubr.f32.mxu0 0.0
  %1436 = vmatmul.mubr.f32.gmra.mrb[0].mxu0 %v1334
  %v1437 = vpop.f32.mrb[0].mxu0
  %v1438 = vadd.f32 %v1324, %v1437
  %v1439 = vpop.f32.mrb[0].mxu0
  %1440 = vmatprep.mubr.f32.mxu0 0.0
  %1441 = vmatmul.mubr.f32.gmra.mrb[0].mxu0 %v1337
  %v1442 = vpop.f32.mrb[0].mxu0
  %v1443 = vadd.f32 %v1324, %v1442
  %v1444 = vpop.f32.mrb[0].mxu0
  %1445 = vmatprep.mubr.f32.mxu0 0.0
  %1446 = vmatmul.mubr.f32.gmra.mrb[0].mxu0 %v1340
  %v1447 = vpop.f32.mrb[0].mxu0
  %v1448 = vadd.f32 %v1324, %v1447
  %v1449 = vpop.f32.mrb[0].mxu0
  %1450 = vmatprep.mubr.f32.mxu0 0.0
  %1451 = vmatmul.mubr.f32.gmra.mrb[0].mxu0 %v1343
  %v1452 = vpop.f32.mrb[0].mxu0
  %v1453 = vadd.f32 %v1324, %v1452
  %v1454 = vpop.f32.mrb[0].mxu0
  %1455 = vmatprep.mubr.f32.mxu0 0.0
  %1456 = vmatmul.mubr.f32.gmra.mrb[0].mxu0 %v1346
  %v1457 = vpop.f32.mrb[0].mxu0
  %v1458 = vadd.f32 %v1324, %v1457
  %v1459 = vpop.f32.mrb[0].mxu0
  %1460 = vmatprep.mubr.f32.mxu0 0.0
  %1461 = vmatmul.mubr.f32.gmra.mrb[0].mxu0 %v1349
  %v1462 = vpop.f32.mrb[0].mxu0
  %v1463 = vadd.f32 %v1324, %v1462
  %v1464 = vpop.f32.mrb[0].mxu0
  %1465 = vmatprep.mubr.f32.mxu0 0.0
  %1466 = vmatmul.mubr.f32.gmra.mrb[0].mxu0 %v1352
  %v1467 = vpop.f32.mrb[0].mxu0
  %v1468 = vadd.f32 %v1324, %v1467
  %v1469 = vpop.f32.mrb[0].mxu0
  %1470 = vmatprep.mubr.f32.mxu0 0.0
  %1471 = vmatmul.mubr.f32.gmra.mrb[0].mxu0 %v1355
  %v1472 = vpop.f32.mrb[0].mxu0
  %v1473 = vadd.f32 %v1324, %v1472
  %v1474 = vpop.f32.mrb[0].mxu0
  %1475 = vdwg.mxu0
  %v1476 = vld [vmem:[%s8] sm:$0xff]
  %v1477 = vld [vmem:[%s8 + $0x8] sm:$0xff]
  %v1478 = vld [vmem:[%s8 + $0x10] sm:$0xff]
  %v1479 = vld [vmem:[%s8 + $0x18] sm:$0xff]
  %v1480 = vld [vmem:[%s8 + $0x20] sm:$0xff]
  %v1481 = vld [vmem:[%s8 + $0x28] sm:$0xff]
  %v1482 = vld [vmem:[%s8 + $0x30] sm:$0xff]
  %v1483 = vld [vmem:[%s8 + $0x38] sm:$0xf]
  %v1484 = vld [vmem:[%s9] sm:$0x1]
  %v1486 = vlaneseq
  %v1487 = vshrl.u32 %v1486, 7
  %v1488 = vsub.s32 0, %v1487
  %v1489 = vrot.slane %v1484, %v1488
  %v1492 = vsel %vm1357, %v1483, 0
  %1494 = vmatprep.subr.mxu0 0.0
  %1495 = vmatpush1.msra.mxu0 %v1476
  %1496 = vmatprep.subr.mxu0 0.0
  %1497 = vmatpush1.msra.mxu0 %v1477
  %1498 = vmatprep.subr.mxu0 0.0
  %1499 = vmatpush1.msra.mxu0 %v1478
  %1500 = vmatprep.subr.mxu0 0.0
  %1501 = vmatpush1.msra.mxu0 %v1479
  %1502 = vmatprep.subr.mxu0 0.0
  %1503 = vmatpush1.msra.mxu0 %v1480
  %1504 = vmatprep.subr.mxu0 0.0
  %1505 = vmatpush1.msra.mxu0 %v1481
  %1506 = vmatprep.subr.mxu0 0.0
  %1507 = vmatpush1.msra.mxu0 %v1482
  %1508 = vmatprep.subr.mxu0 0.0
  %1509 = vmatpush1.msra.mxu0 %v1492
  %1510 = vmatprep.subr.mxu0 0.0
  %1511 = vmatpush1.msra.mxu0 0.0
  %1512 = vmatprep.subr.mxu0 0.0
  %1513 = vmatpush1.msra.mxu0 0.0
  %1514 = vmatprep.subr.mxu0 0.0
  %1515 = vmatpush1.msra.mxu0 0.0
  %1516 = vmatprep.subr.mxu0 0.0
  %1517 = vmatpush1.msra.mxu0 0.0
  %1518 = vmatprep.subr.mxu0 0.0
  %1519 = vmatpush1.msra.mxu0 0.0
  %1520 = vmatprep.subr.mxu0 0.0
  %1521 = vmatpush1.msra.mxu0 0.0
  %1522 = vmatprep.subr.mxu0 0.0
  %1523 = vmatpush1.msra.mxu0 0.0
  %1524 = vmatprep.subr.mxu0 0.0
  %1525 = vmatpush1.msra.mxu0 0.0
  %1526 = vmatprep.subr.mxu0 0.0
  %1527 = vmatpush1.msra.mxu0 0.0
  %1528 = vmatprep.subr.mxu0 0.0
  %1529 = vmatpush1.msra.mxu0 0.0
  %1530 = vmatprep.subr.mxu0 0.0
  %1531 = vmatpush1.msra.mxu0 0.0
  %1532 = vmatprep.subr.mxu0 0.0
  %1533 = vmatpush1.msra.mxu0 0.0
  %1534 = vmatprep.subr.mxu0 0.0
  %1535 = vmatpush1.msra.mxu0 0.0
  %1536 = vmatprep.subr.mxu0 0.0
  %1537 = vmatpush1.msra.mxu0 0.0
  %1538 = vmatprep.subr.mxu0 0.0
  %1539 = vmatpush1.msra.mxu0 0.0
  %1540 = vmatprep.subr.mxu0 0.0
  %1541 = vmatpush1.msra.mxu0 0.0
  %1542 = vmatprep.subr.mxu0 0.0
  %1543 = vmatpush1.msra.mxu0 0.0
  %1544 = vmatprep.subr.mxu0 0.0
  %1545 = vmatpush1.msra.mxu0 0.0
  %1546 = vmatprep.subr.mxu0 0.0
  %1547 = vmatpush1.msra.mxu0 0.0
  %1548 = vmatprep.subr.mxu0 0.0
  %1549 = vmatpush1.msra.mxu0 0.0
  %1550 = vmatprep.subr.mxu0 0.0
  %1551 = vmatpush1.msra.mxu0 0.0
  %1552 = vmatprep.subr.mxu0 0.0
  %1553 = vmatpush1.msra.mxu0 0.0
  %1554 = vmatprep.subr.mxu0 0.0
  %1555 = vmatpush1.msra.mxu0 0.0
  %1556 = vmatprep.subr.mxu0 0.0
  %1557 = vmatpush1.msra.mxu0 0.0
  %1558 = vmatprep.mubr.f32.mxu0 0.0
  %1559 = vmatmul.mubr.f32.gmra.mrb[0].mxu0 %v1328
  %v1560 = vpop.f32.mrb[0].mxu0
  %v1561 = vadd.f32 %v1489, %v1560
  %v1562 = vpop.f32.mrb[0].mxu0
  %1563 = vmatprep.mubr.f32.mxu0 0.0
  %1564 = vmatmul.mubr.f32.gmra.mrb[0].mxu0 %v1331
  %v1565 = vpop.f32.mrb[0].mxu0
  %v1566 = vadd.f32 %v1489, %v1565
  %v1567 = vpop.f32.mrb[0].mxu0
  %1568 = vmatprep.mubr.f32.mxu0 0.0
  %1569 = vmatmul.mubr.f32.gmra.mrb[0].mxu0 %v1334
  %v1570 = vpop.f32.mrb[0].mxu0
  %v1571 = vadd.f32 %v1489, %v1570
  %v1572 = vpop.f32.mrb[0].mxu0
  %1573 = vmatprep.mubr.f32.mxu0 0.0
  %1574 = vmatmul.mubr.f32.gmra.mrb[0].mxu0 %v1337
  %v1575 = vpop.f32.mrb[0].mxu0
  %v1576 = vadd.f32 %v1489, %v1575
  %v1577 = vpop.f32.mrb[0].mxu0
  %1578 = vmatprep.mubr.f32.mxu0 0.0
  %1579 = vmatmul.mubr.f32.gmra.mrb[0].mxu0 %v1340
  %v1580 = vpop.f32.mrb[0].mxu0
  %v1581 = vadd.f32 %v1489, %v1580
  %v1582 = vpop.f32.mrb[0].mxu0
  %1583 = vmatprep.mubr.f32.mxu0 0.0
  %1584 = vmatmul.mubr.f32.gmra.mrb[0].mxu0 %v1343
  %v1585 = vpop.f32.mrb[0].mxu0
  %v1586 = vadd.f32 %v1489, %v1585
  %v1587 = vpop.f32.mrb[0].mxu0
  %1588 = vmatprep.mubr.f32.mxu0 0.0
  %1589 = vmatmul.mubr.f32.gmra.mrb[0].mxu0 %v1346
  %v1590 = vpop.f32.mrb[0].mxu0
  %v1591 = vadd.f32 %v1489, %v1590
  %v1592 = vpop.f32.mrb[0].mxu0
  %1593 = vmatprep.mubr.f32.mxu0 0.0
  %1594 = vmatmul.mubr.f32.gmra.mrb[0].mxu0 %v1349
  %v1595 = vpop.f32.mrb[0].mxu0
  %v1596 = vadd.f32 %v1489, %v1595
  %v1597 = vpop.f32.mrb[0].mxu0
  %1598 = vmatprep.mubr.f32.mxu0 0.0
  %1599 = vmatmul.mubr.f32.gmra.mrb[0].mxu0 %v1352
  %v1600 = vpop.f32.mrb[0].mxu0
  %v1601 = vadd.f32 %v1489, %v1600
  %v1602 = vpop.f32.mrb[0].mxu0
  %1603 = vmatprep.mubr.f32.mxu0 0.0
  %1604 = vmatmul.mubr.f32.gmra.mrb[0].mxu0 %v1355
  %v1605 = vpop.f32.mrb[0].mxu0
  %v1606 = vadd.f32 %v1489, %v1605
  %v1607 = vpop.f32.mrb[0].mxu0
  %1608 = vdwg.mxu0
  %vm1609 = vcmask 162816
  %1610 = vst.msk [vmem:[#allocation2] sm:$0xff] %vm1609, %v1428
  %1611 = vst.msk [vmem:[#allocation2 + $0x8] sm:$0xff] %vm1609, %v1433
  %1612 = vst.msk [vmem:[#allocation2 + $0x10] sm:$0xff] %vm1609, %v1438
  %1613 = vst.msk [vmem:[#allocation2 + $0x18] sm:$0xff] %vm1609, %v1443
  %1614 = vst.msk [vmem:[#allocation2 + $0x20] sm:$0xff] %vm1609, %v1448
  %1615 = vst.msk [vmem:[#allocation2 + $0x28] sm:$0xff] %vm1609, %v1453
  %1616 = vst.msk [vmem:[#allocation2 + $0x30] sm:$0xff] %vm1609, %v1458
  %1617 = vst.msk [vmem:[#allocation2 + $0x38] sm:$0xff] %vm1609, %v1463
  %1618 = vst.msk [vmem:[#allocation2 + $0x40] sm:$0xff] %vm1609, %v1468
  %1619 = vst.msk [vmem:[#allocation2 + $0x48] sm:$0xff] %vm1609, %v1473
  %1620 = vst.msk [vmem:[#allocation3] sm:$0xff] %vm1609, %v1561
  %1621 = vst.msk [vmem:[#allocation3 + $0x8] sm:$0xff] %vm1609, %v1566
  %1622 = vst.msk [vmem:[#allocation3 + $0x10] sm:$0xff] %vm1609, %v1571
  %1623 = vst.msk [vmem:[#allocation3 + $0x18] sm:$0xff] %vm1609, %v1576
  %1624 = vst.msk [vmem:[#allocation3 + $0x20] sm:$0xff] %vm1609, %v1581
  %1625 = vst.msk [vmem:[#allocation3 + $0x28] sm:$0xff] %vm1609, %v1586
  %1626 = vst.msk [vmem:[#allocation3 + $0x30] sm:$0xff] %vm1609, %v1591
  %1627 = vst.msk [vmem:[#allocation3 + $0x38] sm:$0xff] %vm1609, %v1596
  %1628 = vst.msk [vmem:[#allocation3 + $0x40] sm:$0xff] %vm1609, %v1601
  %1629 = vst.msk [vmem:[#allocation3 + $0x48] sm:$0xff] %vm1609, %v1606
  %v1630 = vld [vmem:[%s0] sm:$0xff]
  %v1631 = vsub.s32 %v1630, 6
  %v1632 = vld [vmem:[%s6] sm:$0xff]
  %v1633 = vld [vmem:[%s6 + $0x8] sm:$0xff]
  %v1634 = vld [vmem:[%s6 + $0x10] sm:$0xf]
  %v1635 = vld [vmem:[%s7] sm:$0x1]
  %v1636 = vld [vmem:[#allocation2] sm:$0xff]
  %v1638 = vsel %vm1609, 0.0, 0
  %v1641 = vsel %vm1357, %v1634, 0
  %1643 = vmatprep.subr.mxu0 0.0
  %1644 = vmatpush1.msra.mxu0 %v1632
  %1645 = vmatprep.subr.mxu0 0.0
  %1646 = vmatpush1.msra.mxu0 %v1633
  %1647 = vmatprep.subr.mxu0 0.0
  %1648 = vmatpush1.msra.mxu0 %v1641
  %1649 = vmatprep.subr.mxu0 0.0
  %1650 = vmatpush1.msra.mxu0 0.0
  %1651 = vmatprep.subr.mxu0 0.0
  %1652 = vmatpush1.msra.mxu0 0.0
  %1653 = vmatprep.subr.mxu0 0.0
  %1654 = vmatpush1.msra.mxu0 0.0
  %1655 = vmatprep.subr.mxu0 0.0
  %1656 = vmatpush1.msra.mxu0 0.0
  %1657 = vmatprep.subr.mxu0 0.0
  %1658 = vmatpush1.msra.mxu0 0.0
  %1659 = vmatprep.subr.mxu0 0.0
  %1660 = vmatpush1.msra.mxu0 0.0
  %1661 = vmatprep.subr.mxu0 0.0
  %1662 = vmatpush1.msra.mxu0 0.0
  %1663 = vmatprep.subr.mxu0 0.0
  %1664 = vmatpush1.msra.mxu0 0.0
  %1665 = vmatprep.subr.mxu0 0.0
  %1666 = vmatpush1.msra.mxu0 0.0
  %1667 = vmatprep.subr.mxu0 0.0
  %1668 = vmatpush1.msra.mxu0 0.0
  %1669 = vmatprep.subr.mxu0 0.0
  %1670 = vmatpush1.msra.mxu0 0.0
  %1671 = vmatprep.subr.mxu0 0.0
  %1672 = vmatpush1.msra.mxu0 0.0
  %1673 = vmatprep.subr.mxu0 0.0
  %1674 = vmatpush1.msra.mxu0 0.0
  %1675 = vmatprep.subr.mxu0 0.0
  %1676 = vmatpush1.msra.mxu0 0.0
  %1677 = vmatprep.subr.mxu0 0.0
  %1678 = vmatpush1.msra.mxu0 0.0
  %1679 = vmatprep.subr.mxu0 0.0
  %1680 = vmatpush1.msra.mxu0 0.0
  %1681 = vmatprep.subr.mxu0 0.0
  %1682 = vmatpush1.msra.mxu0 0.0
  %1683 = vmatprep.subr.mxu0 0.0
  %1684 = vmatpush1.msra.mxu0 0.0
  %1685 = vmatprep.subr.mxu0 0.0
  %1686 = vmatpush1.msra.mxu0 0.0
  %1687 = vmatprep.subr.mxu0 0.0
  %1688 = vmatpush1.msra.mxu0 0.0
  %1689 = vmatprep.subr.mxu0 0.0
  %1690 = vmatpush1.msra.mxu0 0.0
  %1691 = vmatprep.subr.mxu0 0.0
  %1692 = vmatpush1.msra.mxu0 0.0
  %1693 = vmatprep.subr.mxu0 0.0
  %1694 = vmatpush1.msra.mxu0 0.0
  %1695 = vmatprep.subr.mxu0 0.0
  %1696 = vmatpush1.msra.mxu0 0.0
  %1697 = vmatprep.subr.mxu0 0.0
  %1698 = vmatpush1.msra.mxu0 0.0
  %1699 = vmatprep.subr.mxu0 0.0
  %1700 = vmatpush1.msra.mxu0 0.0
  %1701 = vmatprep.subr.mxu0 0.0
  %1702 = vmatpush1.msra.mxu0 0.0
  %1703 = vmatprep.subr.mxu0 0.0
  %1704 = vmatpush1.msra.mxu0 0.0
  %1705 = vmatprep.subr.mxu0 0.0
  %1706 = vmatpush1.msra.mxu0 0.0
  %1707 = vmatprep.mubr.f32.mxu0 0.0
  %1708 = vmatmul.mubr.f32.gmra.mrb[0].mxu0 %v1638
  %v1709 = vpop.f32.mrb[0].mxu0
  %v1710 = vadd.f32 0.0, %v1709
  %v1711 = vpop.f32.mrb[0].mxu0
  %1712 = vdwg.mxu0
  %v1713 = vadd.f32 %v1636, %v1710
  %v1715 = vlaneseq
  %v1716 = vshrl.u32 %v1715, 7
  %v1717 = vsub.s32 0, %v1716
  %v1718 = vrot.slane %v1635, %v1717
  %v1720 = vadd.f32 %v1713, %v1718
  %v1721 = vtanh.pop %v1720
  %vm1722 = vcmp.gt.s32.totalorder %v1631, 0
  %v1723 = vsel %vm1722, 1, 0
  %1724 = vset.pattern.permute.xlu0 0
  %1725 = vperm.xlu0 %1724, %v1723
  %v1726 = vpop.permute.xlu0 %1725
  %vm1727 = vcmp.eq.s32.totalorder %v1726, 1
  %v1728 = vsel %vm1727, %v1721, 0.0
  %v1729 = vsub.s32 %v1631, 1
  %vm1730 = vcmp.eq.s32.totalorder %v1729, 0
  %v1731 = vld [vmem:[#allocation3] sm:$0xff]
  %v1732 = vsel %vm1730, 1, 0
  %1733 = vset.pattern.permute.xlu0 0
  %1734 = vperm.xlu0 %1733, %v1732
  %v1735 = vpop.permute.xlu0 %1734
  %vm1736 = vcmp.eq.s32.totalorder %v1735, 1
  %v1737 = vsel %vm1736, %v1731, 0.0
  %s1738 = scalar_lea.vmem [#allocation2], 8
  %v1739 = vld [vmem:[%s1738] sm:$0xff]
  %v1741 = vsel %vm1609, %v1728, 0
  %1743 = vmatprep.subr.mxu0 0.0
  %1744 = vmatpush1.msra.mxu0 %v1632
  %1745 = vmatprep.subr.mxu0 0.0
  %1746 = vmatpush1.msra.mxu0 %v1633
  %1747 = vmatprep.subr.mxu0 0.0
  %1748 = vmatpush1.msra.mxu0 %v1641
  %1749 = vmatprep.subr.mxu0 0.0
  %1750 = vmatpush1.msra.mxu0 0.0
  %1751 = vmatprep.subr.mxu0 0.0
  %1752 = vmatpush1.msra.mxu0 0.0
  %1753 = vmatprep.subr.mxu0 0.0
  %1754 = vmatpush1.msra.mxu0 0.0
  %1755 = vmatprep.subr.mxu0 0.0
  %1756 = vmatpush1.msra.mxu0 0.0
  %1757 = vmatprep.subr.mxu0 0.0
  %1758 = vmatpush1.msra.mxu0 0.0
  %1759 = vmatprep.subr.mxu0 0.0
  %1760 = vmatpush1.msra.mxu0 0.0
  %1761 = vmatprep.subr.mxu0 0.0
  %1762 = vmatpush1.msra.mxu0 0.0
  %1763 = vmatprep.subr.mxu0 0.0
  %1764 = vmatpush1.msra.mxu0 0.0
  %1765 = vmatprep.subr.mxu0 0.0
  %1766 = vmatpush1.msra.mxu0 0.0
  %1767 = vmatprep.subr.mxu0 0.0
  %1768 = vmatpush1.msra.mxu0 0.0
  %1769 = vmatprep.subr.mxu0 0.0
  %1770 = vmatpush1.msra.mxu0 0.0
  %1771 = vmatprep.subr.mxu0 0.0
  %1772 = vmatpush1.msra.mxu0 0.0
  %1773 = vmatprep.subr.mxu0 0.0
  %1774 = vmatpush1.msra.mxu0 0.0
  %1775 = vmatprep.subr.mxu0 0.0
  %1776 = vmatpush1.msra.mxu0 0.0
  %1777 = vmatprep.subr.mxu0 0.0
  %1778 = vmatpush1.msra.mxu0 0.0
  %1779 = vmatprep.subr.mxu0 0.0
  %1780 = vmatpush1.msra.mxu0 0.0
  %1781 = vmatprep.subr.mxu0 0.0
  %1782 = vmatpush1.msra.mxu0 0.0
  %1783 = vmatprep.subr.mxu0 0.0
  %1784 = vmatpush1.msra.mxu0 0.0
  %1785 = vmatprep.subr.mxu0 0.0
  %1786 = vmatpush1.msra.mxu0 0.0
  %1787 = vmatprep.subr.mxu0 0.0
  %1788 = vmatpush1.msra.mxu0 0.0
  %1789 = vmatprep.subr.mxu0 0.0
  %1790 = vmatpush1.msra.mxu0 0.0
  %1791 = vmatprep.subr.mxu0 0.0
  %1792 = vmatpush1.msra.mxu0 0.0
  %1793 = vmatprep.subr.mxu0 0.0
  %1794 = vmatpush1.msra.mxu0 0.0
  %1795 = vmatprep.subr.mxu0 0.0
  %1796 = vmatpush1.msra.mxu0 0.0
  %1797 = vmatprep.subr.mxu0 0.0
  %1798 = vmatpush1.msra.mxu0 0.0
  %1799 = vmatprep.subr.mxu0 0.0
  %1800 = vmatpush1.msra.mxu0 0.0
  %1801 = vmatprep.subr.mxu0 0.0
  %1802 = vmatpush1.msra.mxu0 0.0
  %1803 = vmatprep.subr.mxu0 0.0
  %1804 = vmatpush1.msra.mxu0 0.0
  %1805 = vmatprep.subr.mxu0 0.0
  %1806 = vmatpush1.msra.mxu0 0.0
  %1807 = vmatprep.mubr.f32.mxu0 0.0
  %1808 = vmatmul.mubr.f32.gmra.mrb[0].mxu0 %v1741
  %v1809 = vpop.f32.mrb[0].mxu0
  %v1810 = vadd.f32 0.0, %v1809
  %v1811 = vpop.f32.mrb[0].mxu0
  %1812 = vdwg.mxu0
  %v1813 = vadd.f32 %v1739, %v1810
  %v1814 = vadd.f32 %v1813, %v1718
  %v1815 = vtanh.pop %v1814
  %vm1816 = vcmp.gt.s32.totalorder %v1631, 1
  %v1817 = vsel %vm1816, 1, 0
  %1818 = vset.pattern.permute.xlu0 0
  %1819 = vperm.xlu0 %1818, %v1817
  %v1820 = vpop.permute.xlu0 %1819
  %vm1821 = vcmp.eq.s32.totalorder %v1820, 1
  %v1822 = vsel %vm1821, %v1815, %v1728
  %vm1823 = vcmp.eq.s32.totalorder %v1729, 1
  %s1824 = scalar_lea.vmem [#allocation3], 8
  %v1825 = vld [vmem:[%s1824] sm:$0xff]
  %v1826 = vsel %vm1823, 1, 0
  %1827 = vset.pattern.permute.xlu0 0
  %1828 = vperm.xlu0 %1827, %v1826
  %v1829 = vpop.permute.xlu0 %1828
  %vm1830 = vcmp.eq.s32.totalorder %v1829, 1
  %v1831 = vsel %vm1830, %v1825, %v1737
  %s1832 = scalar_lea.vmem [#allocation2], 16
  %v1833 = vld [vmem:[%s1832] sm:$0xff]
  %v1835 = vsel %vm1609, %v1822, 0
  %1837 = vmatprep.subr.mxu0 0.0
  %1838 = vmatpush1.msra.mxu0 %v1632
  %1839 = vmatprep.subr.mxu0 0.0
  %1840 = vmatpush1.msra.mxu0 %v1633
  %1841 = vmatprep.subr.mxu0 0.0
  %1842 = vmatpush1.msra.mxu0 %v1641
  %1843 = vmatprep.subr.mxu0 0.0
  %1844 = vmatpush1.msra.mxu0 0.0
  %1845 = vmatprep.subr.mxu0 0.0
  %1846 = vmatpush1.msra.mxu0 0.0
  %1847 = vmatprep.subr.mxu0 0.0
  %1848 = vmatpush1.msra.mxu0 0.0
  %1849 = vmatprep.subr.mxu0 0.0
  %1850 = vmatpush1.msra.mxu0 0.0
  %1851 = vmatprep.subr.mxu0 0.0
  %1852 = vmatpush1.msra.mxu0 0.0
  %1853 = vmatprep.subr.mxu0 0.0
  %1854 = vmatpush1.msra.mxu0 0.0
  %1855 = vmatprep.subr.mxu0 0.0
  %1856 = vmatpush1.msra.mxu0 0.0
  %1857 = vmatprep.subr.mxu0 0.0
  %1858 = vmatpush1.msra.mxu0 0.0
  %1859 = vmatprep.subr.mxu0 0.0
  %1860 = vmatpush1.msra.mxu0 0.0
  %1861 = vmatprep.subr.mxu0 0.0
  %1862 = vmatpush1.msra.mxu0 0.0
  %1863 = vmatprep.subr.mxu0 0.0
  %1864 = vmatpush1.msra.mxu0 0.0
  %1865 = vmatprep.subr.mxu0 0.0
  %1866 = vmatpush1.msra.mxu0 0.0
  %1867 = vmatprep.subr.mxu0 0.0
  %1868 = vmatpush1.msra.mxu0 0.0
  %1869 = vmatprep.subr.mxu0 0.0
  %1870 = vmatpush1.msra.mxu0 0.0
  %1871 = vmatprep.subr.mxu0 0.0
  %1872 = vmatpush1.msra.mxu0 0.0
  %1873 = vmatprep.subr.mxu0 0.0
  %1874 = vmatpush1.msra.mxu0 0.0
  %1875 = vmatprep.subr.mxu0 0.0
  %1876 = vmatpush1.msra.mxu0 0.0
  %1877 = vmatprep.subr.mxu0 0.0
  %1878 = vmatpush1.msra.mxu0 0.0
  %1879 = vmatprep.subr.mxu0 0.0
  %1880 = vmatpush1.msra.mxu0 0.0
  %1881 = vmatprep.subr.mxu0 0.0
  %1882 = vmatpush1.msra.mxu0 0.0
  %1883 = vmatprep.subr.mxu0 0.0
  %1884 = vmatpush1.msra.mxu0 0.0
  %1885 = vmatprep.subr.mxu0 0.0
  %1886 = vmatpush1.msra.mxu0 0.0
  %1887 = vmatprep.subr.mxu0 0.0
  %1888 = vmatpush1.msra.mxu0 0.0
  %1889 = vmatprep.subr.mxu0 0.0
  %1890 = vmatpush1.msra.mxu0 0.0
  %1891 = vmatprep.subr.mxu0 0.0
  %1892 = vmatpush1.msra.mxu0 0.0
  %1893 = vmatprep.subr.mxu0 0.0
  %1894 = vmatpush1.msra.mxu0 0.0
  %1895 = vmatprep.subr.mxu0 0.0
  %1896 = vmatpush1.msra.mxu0 0.0
  %1897 = vmatprep.subr.mxu0 0.0
  %1898 = vmatpush1.msra.mxu0 0.0
  %1899 = vmatprep.subr.mxu0 0.0
  %1900 = vmatpush1.msra.mxu0 0.0
  %1901 = vmatprep.mubr.f32.mxu0 0.0
  %1902 = vmatmul.mubr.f32.gmra.mrb[0].mxu0 %v1835
  %v1903 = vpop.f32.mrb[0].mxu0
  %v1904 = vadd.f32 0.0, %v1903
  %v1905 = vpop.f32.mrb[0].mxu0
  %1906 = vdwg.mxu0
  %v1907 = vadd.f32 %v1833, %v1904
  %v1908 = vadd.f32 %v1907, %v1718
  %v1909 = vtanh.pop %v1908
  %vm1910 = vcmp.gt.s32.totalorder %v1631, 2
  %v1911 = vsel %vm1910, 1, 0
  %1912 = vset.pattern.permute.xlu0 0
  %1913 = vperm.xlu0 %1912, %v1911
  %v1914 = vpop.permute.xlu0 %1913
  %vm1915 = vcmp.eq.s32.totalorder %v1914, 1
  %v1916 = vsel %vm1915, %v1909, %v1822
  %vm1917 = vcmp.eq.s32.totalorder %v1729, 2
  %s1918 = scalar_lea.vmem [#allocation3], 16
  %v1919 = vld [vmem:[%s1918] sm:$0xff]
  %v1920 = vsel %vm1917, 1, 0
  %1921 = vset.pattern.permute.xlu0 0
  %1922 = vperm.xlu0 %1921, %v1920
  %v1923 = vpop.permute.xlu0 %1922
  %vm1924 = vcmp.eq.s32.totalorder %v1923, 1
  %v1925 = vsel %vm1924, %v1919, %v1831
  %s1926 = scalar_lea.vmem [#allocation2], 24
  %v1927 = vld [vmem:[%s1926] sm:$0xff]
  %v1929 = vsel %vm1609, %v1916, 0
  %1931 = vmatprep.subr.mxu0 0.0
  %1932 = vmatpush1.msra.mxu0 %v1632
  %1933 = vmatprep.subr.mxu0 0.0
  %1934 = vmatpush1.msra.mxu0 %v1633
  %1935 = vmatprep.subr.mxu0 0.0
  %1936 = vmatpush1.msra.mxu0 %v1641
  %1937 = vmatprep.subr.mxu0 0.0
  %1938 = vmatpush1.msra.mxu0 0.0
  %1939 = vmatprep.subr.mxu0 0.0
  %1940 = vmatpush1.msra.mxu0 0.0
  %1941 = vmatprep.subr.mxu0 0.0
  %1942 = vmatpush1.msra.mxu0 0.0
  %1943 = vmatprep.subr.mxu0 0.0
  %1944 = vmatpush1.msra.mxu0 0.0
  %1945 = vmatprep.subr.mxu0 0.0
  %1946 = vmatpush1.msra.mxu0 0.0
  %1947 = vmatprep.subr.mxu0 0.0
  %1948 = vmatpush1.msra.mxu0 0.0
  %1949 = vmatprep.subr.mxu0 0.0
  %1950 = vmatpush1.msra.mxu0 0.0
  %1951 = vmatprep.subr.mxu0 0.0
  %1952 = vmatpush1.msra.mxu0 0.0
  %1953 = vmatprep.subr.mxu0 0.0
  %1954 = vmatpush1.msra.mxu0 0.0
  %1955 = vmatprep.subr.mxu0 0.0
  %1956 = vmatpush1.msra.mxu0 0.0
  %1957 = vmatprep.subr.mxu0 0.0
  %1958 = vmatpush1.msra.mxu0 0.0
  %1959 = vmatprep.subr.mxu0 0.0
  %1960 = vmatpush1.msra.mxu0 0.0
  %1961 = vmatprep.subr.mxu0 0.0
  %1962 = vmatpush1.msra.mxu0 0.0
  %1963 = vmatprep.subr.mxu0 0.0
  %1964 = vmatpush1.msra.mxu0 0.0
  %1965 = vmatprep.subr.mxu0 0.0
  %1966 = vmatpush1.msra.mxu0 0.0
  %1967 = vmatprep.subr.mxu0 0.0
  %1968 = vmatpush1.msra.mxu0 0.0
  %1969 = vmatprep.subr.mxu0 0.0
  %1970 = vmatpush1.msra.mxu0 0.0
  %1971 = vmatprep.subr.mxu0 0.0
  %1972 = vmatpush1.msra.mxu0 0.0
  %1973 = vmatprep.subr.mxu0 0.0
  %1974 = vmatpush1.msra.mxu0 0.0
  %1975 = vmatprep.subr.mxu0 0.0
  %1976 = vmatpush1.msra.mxu0 0.0
  %1977 = vmatprep.subr.mxu0 0.0
  %1978 = vmatpush1.msra.mxu0 0.0
  %1979 = vmatprep.subr.mxu0 0.0
  %1980 = vmatpush1.msra.mxu0 0.0
  %1981 = vmatprep.subr.mxu0 0.0
  %1982 = vmatpush1.msra.mxu0 0.0
  %1983 = vmatprep.subr.mxu0 0.0
  %1984 = vmatpush1.msra.mxu0 0.0
  %1985 = vmatprep.subr.mxu0 0.0
  %1986 = vmatpush1.msra.mxu0 0.0
  %1987 = vmatprep.subr.mxu0 0.0
  %1988 = vmatpush1.msra.mxu0 0.0
  %1989 = vmatprep.subr.mxu0 0.0
  %1990 = vmatpush1.msra.mxu0 0.0
  %1991 = vmatprep.subr.mxu0 0.0
  %1992 = vmatpush1.msra.mxu0 0.0
  %1993 = vmatprep.subr.mxu0 0.0
  %1994 = vmatpush1.msra.mxu0 0.0
  %1995 = vmatprep.mubr.f32.mxu0 0.0
  %1996 = vmatmul.mubr.f32.gmra.mrb[0].mxu0 %v1929
  %v1997 = vpop.f32.mrb[0].mxu0
  %v1998 = vadd.f32 0.0, %v1997
  %v1999 = vpop.f32.mrb[0].mxu0
  %2000 = vdwg.mxu0
  %v2001 = vadd.f32 %v1927, %v1998
  %v2002 = vadd.f32 %v2001, %v1718
  %v2003 = vtanh.pop %v2002
  %vm2004 = vcmp.gt.s32.totalorder %v1631, 3
  %v2005 = vsel %vm2004, 1, 0
  %2006 = vset.pattern.permute.xlu0 0
  %2007 = vperm.xlu0 %2006, %v2005
  %v2008 = vpop.permute.xlu0 %2007
  %vm2009 = vcmp.eq.s32.totalorder %v2008, 1
  %v2010 = vsel %vm2009, %v2003, %v1916
  %vm2011 = vcmp.eq.s32.totalorder %v1729, 3
  %s2012 = scalar_lea.vmem [#allocation3], 24
  %v2013 = vld [vmem:[%s2012] sm:$0xff]
  %v2014 = vsel %vm2011, 1, 0
  %2015 = vset.pattern.permute.xlu0 0
  %2016 = vperm.xlu0 %2015, %v2014
  %v2017 = vpop.permute.xlu0 %2016
  %vm2018 = vcmp.eq.s32.totalorder %v2017, 1
  %v2019 = vsel %vm2018, %v2013, %v1925
  %s2020 = scalar_lea.vmem [#allocation2], 32
  %v2021 = vld [vmem:[%s2020] sm:$0xff]
  %v2023 = vsel %vm1609, %v2010, 0
  %2025 = vmatprep.subr.mxu0 0.0
  %2026 = vmatpush1.msra.mxu0 %v1632
  %2027 = vmatprep.subr.mxu0 0.0
  %2028 = vmatpush1.msra.mxu0 %v1633
  %2029 = vmatprep.subr.mxu0 0.0
  %2030 = vmatpush1.msra.mxu0 %v1641
  %2031 = vmatprep.subr.mxu0 0.0
  %2032 = vmatpush1.msra.mxu0 0.0
  %2033 = vmatprep.subr.mxu0 0.0
  %2034 = vmatpush1.msra.mxu0 0.0
  %2035 = vmatprep.subr.mxu0 0.0
  %2036 = vmatpush1.msra.mxu0 0.0
  %2037 = vmatprep.subr.mxu0 0.0
  %2038 = vmatpush1.msra.mxu0 0.0
  %2039 = vmatprep.subr.mxu0 0.0
  %2040 = vmatpush1.msra.mxu0 0.0
  %2041 = vmatprep.subr.mxu0 0.0
  %2042 = vmatpush1.msra.mxu0 0.0
  %2043 = vmatprep.subr.mxu0 0.0
  %2044 = vmatpush1.msra.mxu0 0.0
  %2045 = vmatprep.subr.mxu0 0.0
  %2046 = vmatpush1.msra.mxu0 0.0
  %2047 = vmatprep.subr.mxu0 0.0
  %2048 = vmatpush1.msra.mxu0 0.0
  %2049 = vmatprep.subr.mxu0 0.0
  %2050 = vmatpush1.msra.mxu0 0.0
  %2051 = vmatprep.subr.mxu0 0.0
  %2052 = vmatpush1.msra.mxu0 0.0
  %2053 = vmatprep.subr.mxu0 0.0
  %2054 = vmatpush1.msra.mxu0 0.0
  %2055 = vmatprep.subr.mxu0 0.0
  %2056 = vmatpush1.msra.mxu0 0.0
  %2057 = vmatprep.subr.mxu0 0.0
  %2058 = vmatpush1.msra.mxu0 0.0
  %2059 = vmatprep.subr.mxu0 0.0
  %2060 = vmatpush1.msra.mxu0 0.0
  %2061 = vmatprep.subr.mxu0 0.0
  %2062 = vmatpush1.msra.mxu0 0.0
  %2063 = vmatprep.subr.mxu0 0.0
  %2064 = vmatpush1.msra.mxu0 0.0
  %2065 = vmatprep.subr.mxu0 0.0
  %2066 = vmatpush1.msra.mxu0 0.0
  %2067 = vmatprep.subr.mxu0 0.0
  %2068 = vmatpush1.msra.mxu0 0.0
  %2069 = vmatprep.subr.mxu0 0.0
  %2070 = vmatpush1.msra.mxu0 0.0
  %2071 = vmatprep.subr.mxu0 0.0
  %2072 = vmatpush1.msra.mxu0 0.0
  %2073 = vmatprep.subr.mxu0 0.0
  %2074 = vmatpush1.msra.mxu0 0.0
  %2075 = vmatprep.subr.mxu0 0.0
  %2076 = vmatpush1.msra.mxu0 0.0
  %2077 = vmatprep.subr.mxu0 0.0
  %2078 = vmatpush1.msra.mxu0 0.0
  %2079 = vmatprep.subr.mxu0 0.0
  %2080 = vmatpush1.msra.mxu0 0.0
  %2081 = vmatprep.subr.mxu0 0.0
  %2082 = vmatpush1.msra.mxu0 0.0
  %2083 = vmatprep.subr.mxu0 0.0
  %2084 = vmatpush1.msra.mxu0 0.0
  %2085 = vmatprep.subr.mxu0 0.0
  %2086 = vmatpush1.msra.mxu0 0.0
  %2087 = vmatprep.subr.mxu0 0.0
  %2088 = vmatpush1.msra.mxu0 0.0
  %2089 = vmatprep.mubr.f32.mxu0 0.0
  %2090 = vmatmul.mubr.f32.gmra.mrb[0].mxu0 %v2023
  %v2091 = vpop.f32.mrb[0].mxu0
  %v2092 = vadd.f32 0.0, %v2091
  %v2093 = vpop.f32.mrb[0].mxu0
  %2094 = vdwg.mxu0
  %v2095 = vadd.f32 %v2021, %v2092
  %v2096 = vadd.f32 %v2095, %v1718
  %v2097 = vtanh.pop %v2096
  %vm2098 = vcmp.gt.s32.totalorder %v1631, 4
  %v2099 = vsel %vm2098, 1, 0
  %2100 = vset.pattern.permute.xlu0 0
  %2101 = vperm.xlu0 %2100, %v2099
  %v2102 = vpop.permute.xlu0 %2101
  %vm2103 = vcmp.eq.s32.totalorder %v2102, 1
  %v2104 = vsel %vm2103, %v2097, %v2010
  %vm2105 = vcmp.eq.s32.totalorder %v1729, 4
  %s2106 = scalar_lea.vmem [#allocation3], 32
  %v2107 = vld [vmem:[%s2106] sm:$0xff]
  %v2108 = vsel %vm2105, 1, 0
  %2109 = vset.pattern.permute.xlu0 0
  %2110 = vperm.xlu0 %2109, %v2108
  %v2111 = vpop.permute.xlu0 %2110
  %vm2112 = vcmp.eq.s32.totalorder %v2111, 1
  %v2113 = vsel %vm2112, %v2107, %v2019
  %s2114 = scalar_lea.vmem [#allocation2], 40
  %v2115 = vld [vmem:[%s2114] sm:$0xff]
  %v2117 = vsel %vm1609, %v2104, 0
  %2119 = vmatprep.subr.mxu0 0.0
  %2120 = vmatpush1.msra.mxu0 %v1632
  %2121 = vmatprep.subr.mxu0 0.0
  %2122 = vmatpush1.msra.mxu0 %v1633
  %2123 = vmatprep.subr.mxu0 0.0
  %2124 = vmatpush1.msra.mxu0 %v1641
  %2125 = vmatprep.subr.mxu0 0.0
  %2126 = vmatpush1.msra.mxu0 0.0
  %2127 = vmatprep.subr.mxu0 0.0
  %2128 = vmatpush1.msra.mxu0 0.0
  %2129 = vmatprep.subr.mxu0 0.0
  %2130 = vmatpush1.msra.mxu0 0.0
  %2131 = vmatprep.subr.mxu0 0.0
  %2132 = vmatpush1.msra.mxu0 0.0
  %2133 = vmatprep.subr.mxu0 0.0
  %2134 = vmatpush1.msra.mxu0 0.0
  %2135 = vmatprep.subr.mxu0 0.0
  %2136 = vmatpush1.msra.mxu0 0.0
  %2137 = vmatprep.subr.mxu0 0.0
  %2138 = vmatpush1.msra.mxu0 0.0
  %2139 = vmatprep.subr.mxu0 0.0
  %2140 = vmatpush1.msra.mxu0 0.0
  %2141 = vmatprep.subr.mxu0 0.0
  %2142 = vmatpush1.msra.mxu0 0.0
  %2143 = vmatprep.subr.mxu0 0.0
  %2144 = vmatpush1.msra.mxu0 0.0
  %2145 = vmatprep.subr.mxu0 0.0
  %2146 = vmatpush1.msra.mxu0 0.0
  %2147 = vmatprep.subr.mxu0 0.0
  %2148 = vmatpush1.msra.mxu0 0.0
  %2149 = vmatprep.subr.mxu0 0.0
  %2150 = vmatpush1.msra.mxu0 0.0
  %2151 = vmatprep.subr.mxu0 0.0
  %2152 = vmatpush1.msra.mxu0 0.0
  %2153 = vmatprep.subr.mxu0 0.0
  %2154 = vmatpush1.msra.mxu0 0.0
  %2155 = vmatprep.subr.mxu0 0.0
  %2156 = vmatpush1.msra.mxu0 0.0
  %2157 = vmatprep.subr.mxu0 0.0
  %2158 = vmatpush1.msra.mxu0 0.0
  %2159 = vmatprep.subr.mxu0 0.0
  %2160 = vmatpush1.msra.mxu0 0.0
  %2161 = vmatprep.subr.mxu0 0.0
  %2162 = vmatpush1.msra.mxu0 0.0
  %2163 = vmatprep.subr.mxu0 0.0
  %2164 = vmatpush1.msra.mxu0 0.0
  %2165 = vmatprep.subr.mxu0 0.0
  %2166 = vmatpush1.msra.mxu0 0.0
  %2167 = vmatprep.subr.mxu0 0.0
  %2168 = vmatpush1.msra.mxu0 0.0
  %2169 = vmatprep.subr.mxu0 0.0
  %2170 = vmatpush1.msra.mxu0 0.0
  %2171 = vmatprep.subr.mxu0 0.0
  %2172 = vmatpush1.msra.mxu0 0.0
  %2173 = vmatprep.subr.mxu0 0.0
  %2174 = vmatpush1.msra.mxu0 0.0
  %2175 = vmatprep.subr.mxu0 0.0
  %2176 = vmatpush1.msra.mxu0 0.0
  %2177 = vmatprep.subr.mxu0 0.0
  %2178 = vmatpush1.msra.mxu0 0.0
  %2179 = vmatprep.subr.mxu0 0.0
  %2180 = vmatpush1.msra.mxu0 0.0
  %2181 = vmatprep.subr.mxu0 0.0
  %2182 = vmatpush1.msra.mxu0 0.0
  %2183 = vmatprep.mubr.f32.mxu0 0.0
  %2184 = vmatmul.mubr.f32.gmra.mrb[0].mxu0 %v2117
  %v2185 = vpop.f32.mrb[0].mxu0
  %v2186 = vadd.f32 0.0, %v2185
  %v2187 = vpop.f32.mrb[0].mxu0
  %2188 = vdwg.mxu0
  %v2189 = vadd.f32 %v2115, %v2186
  %v2190 = vadd.f32 %v2189, %v1718
  %v2191 = vtanh.pop %v2190
  %vm2192 = vcmp.gt.s32.totalorder %v1631, 5
  %v2193 = vsel %vm2192, 1, 0
  %2194 = vset.pattern.permute.xlu0 0
  %2195 = vperm.xlu0 %2194, %v2193
  %v2196 = vpop.permute.xlu0 %2195
  %vm2197 = vcmp.eq.s32.totalorder %v2196, 1
  %v2198 = vsel %vm2197, %v2191, %v2104
  %vm2199 = vcmp.eq.s32.totalorder %v1729, 5
  %s2200 = scalar_lea.vmem [#allocation3], 40
  %v2201 = vld [vmem:[%s2200] sm:$0xff]
  %v2202 = vsel %vm2199, 1, 0
  %2203 = vset.pattern.permute.xlu0 0
  %2204 = vperm.xlu0 %2203, %v2202
  %v2205 = vpop.permute.xlu0 %2204
  %vm2206 = vcmp.eq.s32.totalorder %v2205, 1
  %v2207 = vsel %vm2206, %v2201, %v2113
  %s2208 = scalar_lea.vmem [#allocation2], 48
  %v2209 = vld [vmem:[%s2208] sm:$0xff]
  %v2211 = vsel %vm1609, %v2198, 0
  %2213 = vmatprep.subr.mxu0 0.0
  %2214 = vmatpush1.msra.mxu0 %v1632
  %2215 = vmatprep.subr.mxu0 0.0
  %2216 = vmatpush1.msra.mxu0 %v1633
  %2217 = vmatprep.subr.mxu0 0.0
  %2218 = vmatpush1.msra.mxu0 %v1641
  %2219 = vmatprep.subr.mxu0 0.0
  %2220 = vmatpush1.msra.mxu0 0.0
  %2221 = vmatprep.subr.mxu0 0.0
  %2222 = vmatpush1.msra.mxu0 0.0
  %2223 = vmatprep.subr.mxu0 0.0
  %2224 = vmatpush1.msra.mxu0 0.0
  %2225 = vmatprep.subr.mxu0 0.0
  %2226 = vmatpush1.msra.mxu0 0.0
  %2227 = vmatprep.subr.mxu0 0.0
  %2228 = vmatpush1.msra.mxu0 0.0
  %2229 = vmatprep.subr.mxu0 0.0
  %2230 = vmatpush1.msra.mxu0 0.0
  %2231 = vmatprep.subr.mxu0 0.0
  %2232 = vmatpush1.msra.mxu0 0.0
  %2233 = vmatprep.subr.mxu0 0.0
  %2234 = vmatpush1.msra.mxu0 0.0
  %2235 = vmatprep.subr.mxu0 0.0
  %2236 = vmatpush1.msra.mxu0 0.0
  %2237 = vmatprep.subr.mxu0 0.0
  %2238 = vmatpush1.msra.mxu0 0.0
  %2239 = vmatprep.subr.mxu0 0.0
  %2240 = vmatpush1.msra.mxu0 0.0
  %2241 = vmatprep.subr.mxu0 0.0
  %2242 = vmatpush1.msra.mxu0 0.0
  %2243 = vmatprep.subr.mxu0 0.0
  %2244 = vmatpush1.msra.mxu0 0.0
  %2245 = vmatprep.subr.mxu0 0.0
  %2246 = vmatpush1.msra.mxu0 0.0
  %2247 = vmatprep.subr.mxu0 0.0
  %2248 = vmatpush1.msra.mxu0 0.0
  %2249 = vmatprep.subr.mxu0 0.0
  %2250 = vmatpush1.msra.mxu0 0.0
  %2251 = vmatprep.subr.mxu0 0.0
  %2252 = vmatpush1.msra.mxu0 0.0
  %2253 = vmatprep.subr.mxu0 0.0
  %2254 = vmatpush1.msra.mxu0 0.0
  %2255 = vmatprep.subr.mxu0 0.0
  %2256 = vmatpush1.msra.mxu0 0.0
  %2257 = vmatprep.subr.mxu0 0.0
  %2258 = vmatpush1.msra.mxu0 0.0
  %2259 = vmatprep.subr.mxu0 0.0
  %2260 = vmatpush1.msra.mxu0 0.0
  %2261 = vmatprep.subr.mxu0 0.0
  %2262 = vmatpush1.msra.mxu0 0.0
  %2263 = vmatprep.subr.mxu0 0.0
  %2264 = vmatpush1.msra.mxu0 0.0
  %2265 = vmatprep.subr.mxu0 0.0
  %2266 = vmatpush1.msra.mxu0 0.0
  %2267 = vmatprep.subr.mxu0 0.0
  %2268 = vmatpush1.msra.mxu0 0.0
  %2269 = vmatprep.subr.mxu0 0.0
  %2270 = vmatpush1.msra.mxu0 0.0
  %2271 = vmatprep.subr.mxu0 0.0
  %2272 = vmatpush1.msra.mxu0 0.0
  %2273 = vmatprep.subr.mxu0 0.0
  %2274 = vmatpush1.msra.mxu0 0.0
  %2275 = vmatprep.subr.mxu0 0.0
  %2276 = vmatpush1.msra.mxu0 0.0
  %2277 = vmatprep.mubr.f32.mxu0 0.0
  %2278 = vmatmul.mubr.f32.gmra.mrb[0].mxu0 %v2211
  %v2279 = vpop.f32.mrb[0].mxu0
  %v2280 = vadd.f32 0.0, %v2279
  %v2281 = vpop.f32.mrb[0].mxu0
  %2282 = vdwg.mxu0
  %v2283 = vadd.f32 %v2209, %v2280
  %v2284 = vadd.f32 %v2283, %v1718
  %v2285 = vtanh.pop %v2284
  %vm2286 = vcmp.gt.s32.totalorder %v1631, 6
  %v2287 = vsel %vm2286, 1, 0
  %2288 = vset.pattern.permute.xlu0 0
  %2289 = vperm.xlu0 %2288, %v2287
  %v2290 = vpop.permute.xlu0 %2289
  %vm2291 = vcmp.eq.s32.totalorder %v2290, 1
  %v2292 = vsel %vm2291, %v2285, %v2198
  %vm2293 = vcmp.eq.s32.totalorder %v1729, 6
  %s2294 = scalar_lea.vmem [#allocation3], 48
  %v2295 = vld [vmem:[%s2294] sm:$0xff]
  %v2296 = vsel %vm2293, 1, 0
  %2297 = vset.pattern.permute.xlu0 0
  %2298 = vperm.xlu0 %2297, %v2296
  %v2299 = vpop.permute.xlu0 %2298
  %vm2300 = vcmp.eq.s32.totalorder %v2299, 1
  %v2301 = vsel %vm2300, %v2295, %v2207
  %s2302 = scalar_lea.vmem [#allocation2], 56
  %v2303 = vld [vmem:[%s2302] sm:$0xff]
  %v2305 = vsel %vm1609, %v2292, 0
  %2307 = vmatprep.subr.mxu0 0.0
  %2308 = vmatpush1.msra.mxu0 %v1632
  %2309 = vmatprep.subr.mxu0 0.0
  %2310 = vmatpush1.msra.mxu0 %v1633
  %2311 = vmatprep.subr.mxu0 0.0
  %2312 = vmatpush1.msra.mxu0 %v1641
  %2313 = vmatprep.subr.mxu0 0.0
  %2314 = vmatpush1.msra.mxu0 0.0
  %2315 = vmatprep.subr.mxu0 0.0
  %2316 = vmatpush1.msra.mxu0 0.0
  %2317 = vmatprep.subr.mxu0 0.0
  %2318 = vmatpush1.msra.mxu0 0.0
  %2319 = vmatprep.subr.mxu0 0.0
  %2320 = vmatpush1.msra.mxu0 0.0
  %2321 = vmatprep.subr.mxu0 0.0
  %2322 = vmatpush1.msra.mxu0 0.0
  %2323 = vmatprep.subr.mxu0 0.0
  %2324 = vmatpush1.msra.mxu0 0.0
  %2325 = vmatprep.subr.mxu0 0.0
  %2326 = vmatpush1.msra.mxu0 0.0
  %2327 = vmatprep.subr.mxu0 0.0
  %2328 = vmatpush1.msra.mxu0 0.0
  %2329 = vmatprep.subr.mxu0 0.0
  %2330 = vmatpush1.msra.mxu0 0.0
  %2331 = vmatprep.subr.mxu0 0.0
  %2332 = vmatpush1.msra.mxu0 0.0
  %2333 = vmatprep.subr.mxu0 0.0
  %2334 = vmatpush1.msra.mxu0 0.0
  %2335 = vmatprep.subr.mxu0 0.0
  %2336 = vmatpush1.msra.mxu0 0.0
  %2337 = vmatprep.subr.mxu0 0.0
  %2338 = vmatpush1.msra.mxu0 0.0
  %2339 = vmatprep.subr.mxu0 0.0
  %2340 = vmatpush1.msra.mxu0 0.0
  %2341 = vmatprep.subr.mxu0 0.0
  %2342 = vmatpush1.msra.mxu0 0.0
  %2343 = vmatprep.subr.mxu0 0.0
  %2344 = vmatpush1.msra.mxu0 0.0
  %2345 = vmatprep.subr.mxu0 0.0
  %2346 = vmatpush1.msra.mxu0 0.0
  %2347 = vmatprep.subr.mxu0 0.0
  %2348 = vmatpush1.msra.mxu0 0.0
  %2349 = vmatprep.subr.mxu0 0.0
  %2350 = vmatpush1.msra.mxu0 0.0
  %2351 = vmatprep.subr.mxu0 0.0
  %2352 = vmatpush1.msra.mxu0 0.0
  %2353 = vmatprep.subr.mxu0 0.0
  %2354 = vmatpush1.msra.mxu0 0.0
  %2355 = vmatprep.subr.mxu0 0.0
  %2356 = vmatpush1.msra.mxu0 0.0
  %2357 = vmatprep.subr.mxu0 0.0
  %2358 = vmatpush1.msra.mxu0 0.0
  %2359 = vmatprep.subr.mxu0 0.0
  %2360 = vmatpush1.msra.mxu0 0.0
  %2361 = vmatprep.subr.mxu0 0.0
  %2362 = vmatpush1.msra.mxu0 0.0
  %2363 = vmatprep.subr.mxu0 0.0
  %2364 = vmatpush1.msra.mxu0 0.0
  %2365 = vmatprep.subr.mxu0 0.0
  %2366 = vmatpush1.msra.mxu0 0.0
  %2367 = vmatprep.subr.mxu0 0.0
  %2368 = vmatpush1.msra.mxu0 0.0
  %2369 = vmatprep.subr.mxu0 0.0
  %2370 = vmatpush1.msra.mxu0 0.0
  %2371 = vmatprep.mubr.f32.mxu0 0.0
  %2372 = vmatmul.mubr.f32.gmra.mrb[0].mxu0 %v2305
  %v2373 = vpop.f32.mrb[0].mxu0
  %v2374 = vadd.f32 0.0, %v2373
  %v2375 = vpop.f32.mrb[0].mxu0
  %2376 = vdwg.mxu0
  %v2377 = vadd.f32 %v2303, %v2374
  %v2378 = vadd.f32 %v2377, %v1718
  %v2379 = vtanh.pop %v2378
  %vm2380 = vcmp.gt.s32.totalorder %v1631, 7
  %v2381 = vsel %vm2380, 1, 0
  %2382 = vset.pattern.permute.xlu0 0
  %2383 = vperm.xlu0 %2382, %v2381
  %v2384 = vpop.permute.xlu0 %2383
  %vm2385 = vcmp.eq.s32.totalorder %v2384, 1
  %v2386 = vsel %vm2385, %v2379, %v2292
  %vm2387 = vcmp.eq.s32.totalorder %v1729, 7
  %s2388 = scalar_lea.vmem [#allocation3], 56
  %v2389 = vld [vmem:[%s2388] sm:$0xff]
  %v2390 = vsel %vm2387, 1, 0
  %2391 = vset.pattern.permute.xlu0 0
  %2392 = vperm.xlu0 %2391, %v2390
  %v2393 = vpop.permute.xlu0 %2392
  %vm2394 = vcmp.eq.s32.totalorder %v2393, 1
  %v2395 = vsel %vm2394, %v2389, %v2301
  %s2396 = scalar_lea.vmem [#allocation2], 64
  %v2397 = vld [vmem:[%s2396] sm:$0xff]
  %v2399 = vsel %vm1609, %v2386, 0
  %2401 = vmatprep.subr.mxu0 0.0
  %2402 = vmatpush1.msra.mxu0 %v1632
  %2403 = vmatprep.subr.mxu0 0.0
  %2404 = vmatpush1.msra.mxu0 %v1633
  %2405 = vmatprep.subr.mxu0 0.0
  %2406 = vmatpush1.msra.mxu0 %v1641
  %2407 = vmatprep.subr.mxu0 0.0
  %2408 = vmatpush1.msra.mxu0 0.0
  %2409 = vmatprep.subr.mxu0 0.0
  %2410 = vmatpush1.msra.mxu0 0.0
  %2411 = vmatprep.subr.mxu0 0.0
  %2412 = vmatpush1.msra.mxu0 0.0
  %2413 = vmatprep.subr.mxu0 0.0
  %2414 = vmatpush1.msra.mxu0 0.0
  %2415 = vmatprep.subr.mxu0 0.0
  %2416 = vmatpush1.msra.mxu0 0.0
  %2417 = vmatprep.subr.mxu0 0.0
  %2418 = vmatpush1.msra.mxu0 0.0
  %2419 = vmatprep.subr.mxu0 0.0
  %2420 = vmatpush1.msra.mxu0 0.0
  %2421 = vmatprep.subr.mxu0 0.0
  %2422 = vmatpush1.msra.mxu0 0.0
  %2423 = vmatprep.subr.mxu0 0.0
  %2424 = vmatpush1.msra.mxu0 0.0
  %2425 = vmatprep.subr.mxu0 0.0
  %2426 = vmatpush1.msra.mxu0 0.0
  %2427 = vmatprep.subr.mxu0 0.0
  %2428 = vmatpush1.msra.mxu0 0.0
  %2429 = vmatprep.subr.mxu0 0.0
  %2430 = vmatpush1.msra.mxu0 0.0
  %2431 = vmatprep.subr.mxu0 0.0
  %2432 = vmatpush1.msra.mxu0 0.0
  %2433 = vmatprep.subr.mxu0 0.0
  %2434 = vmatpush1.msra.mxu0 0.0
  %2435 = vmatprep.subr.mxu0 0.0
  %2436 = vmatpush1.msra.mxu0 0.0
  %2437 = vmatprep.subr.mxu0 0.0
  %2438 = vmatpush1.msra.mxu0 0.0
  %2439 = vmatprep.subr.mxu0 0.0
  %2440 = vmatpush1.msra.mxu0 0.0
  %2441 = vmatprep.subr.mxu0 0.0
  %2442 = vmatpush1.msra.mxu0 0.0
  %2443 = vmatprep.subr.mxu0 0.0
  %2444 = vmatpush1.msra.mxu0 0.0
  %2445 = vmatprep.subr.mxu0 0.0
  %2446 = vmatpush1.msra.mxu0 0.0
  %2447 = vmatprep.subr.mxu0 0.0
  %2448 = vmatpush1.msra.mxu0 0.0
  %2449 = vmatprep.subr.mxu0 0.0
  %2450 = vmatpush1.msra.mxu0 0.0
  %2451 = vmatprep.subr.mxu0 0.0
  %2452 = vmatpush1.msra.mxu0 0.0
  %2453 = vmatprep.subr.mxu0 0.0
  %2454 = vmatpush1.msra.mxu0 0.0
  %2455 = vmatprep.subr.mxu0 0.0
  %2456 = vmatpush1.msra.mxu0 0.0
  %2457 = vmatprep.subr.mxu0 0.0
  %2458 = vmatpush1.msra.mxu0 0.0
  %2459 = vmatprep.subr.mxu0 0.0
  %2460 = vmatpush1.msra.mxu0 0.0
  %2461 = vmatprep.subr.mxu0 0.0
  %2462 = vmatpush1.msra.mxu0 0.0
  %2463 = vmatprep.subr.mxu0 0.0
  %2464 = vmatpush1.msra.mxu0 0.0
  %2465 = vmatprep.mubr.f32.mxu0 0.0
  %2466 = vmatmul.mubr.f32.gmra.mrb[0].mxu0 %v2399
  %v2467 = vpop.f32.mrb[0].mxu0
  %v2468 = vadd.f32 0.0, %v2467
  %v2469 = vpop.f32.mrb[0].mxu0
  %2470 = vdwg.mxu0
  %v2471 = vadd.f32 %v2397, %v2468
  %v2472 = vadd.f32 %v2471, %v1718
  %v2473 = vtanh.pop %v2472
  %vm2474 = vcmp.gt.s32.totalorder %v1631, 8
  %v2475 = vsel %vm2474, 1, 0
  %2476 = vset.pattern.permute.xlu0 0
  %2477 = vperm.xlu0 %2476, %v2475
  %v2478 = vpop.permute.xlu0 %2477
  %vm2479 = vcmp.eq.s32.totalorder %v2478, 1
  %v2480 = vsel %vm2479, %v2473, %v2386
  %vm2481 = vcmp.eq.s32.totalorder %v1729, 8
  %s2482 = scalar_lea.vmem [#allocation3], 64
  %v2483 = vld [vmem:[%s2482] sm:$0xff]
  %v2484 = vsel %vm2481, 1, 0
  %2485 = vset.pattern.permute.xlu0 0
  %2486 = vperm.xlu0 %2485, %v2484
  %v2487 = vpop.permute.xlu0 %2486
  %vm2488 = vcmp.eq.s32.totalorder %v2487, 1
  %v2489 = vsel %vm2488, %v2483, %v2395
  %s2490 = scalar_lea.vmem [#allocation2], 72
  %v2491 = vld [vmem:[%s2490] sm:$0xff]
  %v2493 = vsel %vm1609, %v2480, 0
  %2495 = vmatprep.subr.mxu0 0.0
  %2496 = vmatpush1.msra.mxu0 %v1632
  %2497 = vmatprep.subr.mxu0 0.0
  %2498 = vmatpush1.msra.mxu0 %v1633
  %2499 = vmatprep.subr.mxu0 0.0
  %2500 = vmatpush1.msra.mxu0 %v1641
  %2501 = vmatprep.subr.mxu0 0.0
  %2502 = vmatpush1.msra.mxu0 0.0
  %2503 = vmatprep.subr.mxu0 0.0
  %2504 = vmatpush1.msra.mxu0 0.0
  %2505 = vmatprep.subr.mxu0 0.0
  %2506 = vmatpush1.msra.mxu0 0.0
  %2507 = vmatprep.subr.mxu0 0.0
  %2508 = vmatpush1.msra.mxu0 0.0
  %2509 = vmatprep.subr.mxu0 0.0
  %2510 = vmatpush1.msra.mxu0 0.0
  %2511 = vmatprep.subr.mxu0 0.0
  %2512 = vmatpush1.msra.mxu0 0.0
  %2513 = vmatprep.subr.mxu0 0.0
  %2514 = vmatpush1.msra.mxu0 0.0
  %2515 = vmatprep.subr.mxu0 0.0
  %2516 = vmatpush1.msra.mxu0 0.0
  %2517 = vmatprep.subr.mxu0 0.0
  %2518 = vmatpush1.msra.mxu0 0.0
  %2519 = vmatprep.subr.mxu0 0.0
  %2520 = vmatpush1.msra.mxu0 0.0
  %2521 = vmatprep.subr.mxu0 0.0
  %2522 = vmatpush1.msra.mxu0 0.0
  %2523 = vmatprep.subr.mxu0 0.0
  %2524 = vmatpush1.msra.mxu0 0.0
  %2525 = vmatprep.subr.mxu0 0.0
  %2526 = vmatpush1.msra.mxu0 0.0
  %2527 = vmatprep.subr.mxu0 0.0
  %2528 = vmatpush1.msra.mxu0 0.0
  %2529 = vmatprep.subr.mxu0 0.0
  %2530 = vmatpush1.msra.mxu0 0.0
  %2531 = vmatprep.subr.mxu0 0.0
  %2532 = vmatpush1.msra.mxu0 0.0
  %2533 = vmatprep.subr.mxu0 0.0
  %2534 = vmatpush1.msra.mxu0 0.0
  %2535 = vmatprep.subr.mxu0 0.0
  %2536 = vmatpush1.msra.mxu0 0.0
  %2537 = vmatprep.subr.mxu0 0.0
  %2538 = vmatpush1.msra.mxu0 0.0
  %2539 = vmatprep.subr.mxu0 0.0
  %2540 = vmatpush1.msra.mxu0 0.0
  %2541 = vmatprep.subr.mxu0 0.0
  %2542 = vmatpush1.msra.mxu0 0.0
  %2543 = vmatprep.subr.mxu0 0.0
  %2544 = vmatpush1.msra.mxu0 0.0
  %2545 = vmatprep.subr.mxu0 0.0
  %2546 = vmatpush1.msra.mxu0 0.0
  %2547 = vmatprep.subr.mxu0 0.0
  %2548 = vmatpush1.msra.mxu0 0.0
  %2549 = vmatprep.subr.mxu0 0.0
  %2550 = vmatpush1.msra.mxu0 0.0
  %2551 = vmatprep.subr.mxu0 0.0
  %2552 = vmatpush1.msra.mxu0 0.0
  %2553 = vmatprep.subr.mxu0 0.0
  %2554 = vmatpush1.msra.mxu0 0.0
  %2555 = vmatprep.subr.mxu0 0.0
  %2556 = vmatpush1.msra.mxu0 0.0
  %2557 = vmatprep.subr.mxu0 0.0
  %2558 = vmatpush1.msra.mxu0 0.0
  %2559 = vmatprep.mubr.f32.mxu0 0.0
  %2560 = vmatmul.mubr.f32.gmra.mrb[0].mxu0 %v2493
  %v2561 = vpop.f32.mrb[0].mxu0
  %v2562 = vadd.f32 0.0, %v2561
  %v2563 = vpop.f32.mrb[0].mxu0
  %2564 = vdwg.mxu0
  %v2565 = vadd.f32 %v2491, %v2562
  %v2566 = vadd.f32 %v2565, %v1718
  %v2567 = vtanh.pop %v2566
  %vm2568 = vcmp.gt.s32.totalorder %v1631, 9
  %v2569 = vsel %vm2568, 1, 0
  %2570 = vset.pattern.permute.xlu0 0
  %2571 = vperm.xlu0 %2570, %v2569
  %v2572 = vpop.permute.xlu0 %2571
  %vm2573 = vcmp.eq.s32.totalorder %v2572, 1
  %v2574 = vsel %vm2573, %v2567, %v2480
  %vm2575 = vcmp.eq.s32.totalorder %v1729, 9
  %s2576 = scalar_lea.vmem [#allocation3], 72
  %v2577 = vld [vmem:[%s2576] sm:$0xff]
  %v2578 = vsel %vm2575, 1, 0
  %2579 = vset.pattern.permute.xlu0 0
  %2580 = vperm.xlu0 %2579, %v2578
  %v2581 = vpop.permute.xlu0 %2580
  %vm2582 = vcmp.eq.s32.totalorder %v2581, 1
  %v2583 = vsel %vm2582, %v2577, %v2489
  %v2584 = vtanh.pop %v2583
  %v2585 = vld [vmem:[%s10] sm:$0xff]
  %v2586 = vld [vmem:[%s10 + $0x8] sm:$0xff]
  %v2587 = vld [vmem:[%s10 + $0x10] sm:$0xf]
  %v2588 = vld [vmem:[%s11] sm:$0xff]
  %v2589 = vld [vmem:[%s11 + $0x8] sm:$0xff]
  %v2590 = vld [vmem:[%s11 + $0x10] sm:$0xf]
  %v2592 = vsel %vm1609, %v2584, 0
  %v2595 = vsel %vm1357, %v2590, 0
  %2597 = vmatprep.subr.mxu0 0.0
  %2598 = vmatpush1.msra.mxu0 %v2588
  %2599 = vmatprep.subr.mxu0 0.0
  %2600 = vmatpush1.msra.mxu0 %v2589
  %2601 = vmatprep.subr.mxu0 0.0
  %2602 = vmatpush1.msra.mxu0 %v2595
  %2603 = vmatprep.subr.mxu0 0.0
  %2604 = vmatpush1.msra.mxu0 0.0
  %2605 = vmatprep.subr.mxu0 0.0
  %2606 = vmatpush1.msra.mxu0 0.0
  %2607 = vmatprep.subr.mxu0 0.0
  %2608 = vmatpush1.msra.mxu0 0.0
  %2609 = vmatprep.subr.mxu0 0.0
  %2610 = vmatpush1.msra.mxu0 0.0
  %2611 = vmatprep.subr.mxu0 0.0
  %2612 = vmatpush1.msra.mxu0 0.0
  %2613 = vmatprep.subr.mxu0 0.0
  %2614 = vmatpush1.msra.mxu0 0.0
  %2615 = vmatprep.subr.mxu0 0.0
  %2616 = vmatpush1.msra.mxu0 0.0
  %2617 = vmatprep.subr.mxu0 0.0
  %2618 = vmatpush1.msra.mxu0 0.0
  %2619 = vmatprep.subr.mxu0 0.0
  %2620 = vmatpush1.msra.mxu0 0.0
  %2621 = vmatprep.subr.mxu0 0.0
  %2622 = vmatpush1.msra.mxu0 0.0
  %2623 = vmatprep.subr.mxu0 0.0
  %2624 = vmatpush1.msra.mxu0 0.0
  %2625 = vmatprep.subr.mxu0 0.0
  %2626 = vmatpush1.msra.mxu0 0.0
  %2627 = vmatprep.subr.mxu0 0.0
  %2628 = vmatpush1.msra.mxu0 0.0
  %2629 = vmatprep.subr.mxu0 0.0
  %2630 = vmatpush1.msra.mxu0 0.0
  %2631 = vmatprep.subr.mxu0 0.0
  %2632 = vmatpush1.msra.mxu0 0.0
  %2633 = vmatprep.subr.mxu0 0.0
  %2634 = vmatpush1.msra.mxu0 0.0
  %2635 = vmatprep.subr.mxu0 0.0
  %2636 = vmatpush1.msra.mxu0 0.0
  %2637 = vmatprep.subr.mxu0 0.0
  %2638 = vmatpush1.msra.mxu0 0.0
  %2639 = vmatprep.subr.mxu0 0.0
  %2640 = vmatpush1.msra.mxu0 0.0
  %2641 = vmatprep.subr.mxu0 0.0
  %2642 = vmatpush1.msra.mxu0 0.0
  %2643 = vmatprep.subr.mxu0 0.0
  %2644 = vmatpush1.msra.mxu0 0.0
  %2645 = vmatprep.subr.mxu0 0.0
  %2646 = vmatpush1.msra.mxu0 0.0
  %2647 = vmatprep.subr.mxu0 0.0
  %2648 = vmatpush1.msra.mxu0 0.0
  %2649 = vmatprep.subr.mxu0 0.0
  %2650 = vmatpush1.msra.mxu0 0.0
  %2651 = vmatprep.subr.mxu0 0.0
  %2652 = vmatpush1.msra.mxu0 0.0
  %2653 = vmatprep.subr.mxu0 0.0
  %2654 = vmatpush1.msra.mxu0 0.0
  %2655 = vmatprep.subr.mxu0 0.0
  %2656 = vmatpush1.msra.mxu0 0.0
  %2657 = vmatprep.subr.mxu0 0.0
  %2658 = vmatpush1.msra.mxu0 0.0
  %2659 = vmatprep.subr.mxu0 0.0
  %2660 = vmatpush1.msra.mxu0 0.0
  %2661 = vmatprep.mubr.f32.mxu0 0.0
  %2662 = vmatmul.mubr.f32.gmra.mrb[0].mxu0 %v2592
  %v2663 = vpop.f32.mrb[0].mxu0
  %v2664 = vadd.f32 0.0, %v2663
  %v2665 = vpop.f32.mrb[0].mxu0
  %2666 = vdwg.mxu0
  %v2668 = vsel %vm1609, %v2574, 0
  %v2671 = vsel %vm1357, %v2587, 0
  %2673 = vmatprep.subr.mxu0 0.0
  %2674 = vmatpush1.msra.mxu0 %v2585
  %2675 = vmatprep.subr.mxu0 0.0
  %2676 = vmatpush1.msra.mxu0 %v2586
  %2677 = vmatprep.subr.mxu0 0.0
  %2678 = vmatpush1.msra.mxu0 %v2671
  %2679 = vmatprep.subr.mxu0 0.0
  %2680 = vmatpush1.msra.mxu0 0.0
  %2681 = vmatprep.subr.mxu0 0.0
  %2682 = vmatpush1.msra.mxu0 0.0
  %2683 = vmatprep.subr.mxu0 0.0
  %2684 = vmatpush1.msra.mxu0 0.0
  %2685 = vmatprep.subr.mxu0 0.0
  %2686 = vmatpush1.msra.mxu0 0.0
  %2687 = vmatprep.subr.mxu0 0.0
  %2688 = vmatpush1.msra.mxu0 0.0
  %2689 = vmatprep.subr.mxu0 0.0
  %2690 = vmatpush1.msra.mxu0 0.0
  %2691 = vmatprep.subr.mxu0 0.0
  %2692 = vmatpush1.msra.mxu0 0.0
  %2693 = vmatprep.subr.mxu0 0.0
  %2694 = vmatpush1.msra.mxu0 0.0
  %2695 = vmatprep.subr.mxu0 0.0
  %2696 = vmatpush1.msra.mxu0 0.0
  %2697 = vmatprep.subr.mxu0 0.0
  %2698 = vmatpush1.msra.mxu0 0.0
  %2699 = vmatprep.subr.mxu0 0.0
  %2700 = vmatpush1.msra.mxu0 0.0
  %2701 = vmatprep.subr.mxu0 0.0
  %2702 = vmatpush1.msra.mxu0 0.0
  %2703 = vmatprep.subr.mxu0 0.0
  %2704 = vmatpush1.msra.mxu0 0.0
  %2705 = vmatprep.subr.mxu0 0.0
  %2706 = vmatpush1.msra.mxu0 0.0
  %2707 = vmatprep.subr.mxu0 0.0
  %2708 = vmatpush1.msra.mxu0 0.0
  %2709 = vmatprep.subr.mxu0 0.0
  %2710 = vmatpush1.msra.mxu0 0.0
  %2711 = vmatprep.subr.mxu0 0.0
  %2712 = vmatpush1.msra.mxu0 0.0
  %2713 = vmatprep.subr.mxu0 0.0
  %2714 = vmatpush1.msra.mxu0 0.0
  %2715 = vmatprep.subr.mxu0 0.0
  %2716 = vmatpush1.msra.mxu0 0.0
  %2717 = vmatprep.subr.mxu0 0.0
  %2718 = vmatpush1.msra.mxu0 0.0
  %2719 = vmatprep.subr.mxu0 0.0
  %2720 = vmatpush1.msra.mxu0 0.0
  %2721 = vmatprep.subr.mxu0 0.0
  %2722 = vmatpush1.msra.mxu0 0.0
  %2723 = vmatprep.subr.mxu0 0.0
  %2724 = vmatpush1.msra.mxu0 0.0
  %2725 = vmatprep.subr.mxu0 0.0
  %2726 = vmatpush1.msra.mxu0 0.0
  %2727 = vmatprep.subr.mxu0 0.0
  %2728 = vmatpush1.msra.mxu0 0.0
  %2729 = vmatprep.subr.mxu0 0.0
  %2730 = vmatpush1.msra.mxu0 0.0
  %2731 = vmatprep.subr.mxu0 0.0
  %2732 = vmatpush1.msra.mxu0 0.0
  %2733 = vmatprep.subr.mxu0 0.0
  %2734 = vmatpush1.msra.mxu0 0.0
  %2735 = vmatprep.subr.mxu0 0.0
  %2736 = vmatpush1.msra.mxu0 0.0
  %2737 = vmatprep.mubr.f32.mxu0 0.0
  %2738 = vmatmul.mubr.f32.gmra.mrb[0].mxu0 %v2668
  %v2739 = vpop.f32.mrb[0].mxu0
  %v2740 = vadd.f32 %v2664, %v2739
  %v2741 = vpop.f32.mrb[0].mxu0
  %2742 = vdwg.mxu0
  %v2743 = vld [vmem:[%s12] sm:$0x1]
  %v2745 = vlaneseq
  %v2746 = vshrl.u32 %v2745, 7
  %v2747 = vsub.s32 0, %v2746
  %v2748 = vrot.slane %v2743, %v2747
  %v2750 = vadd.f32 %v2740, %v2748
  %vm2751 = vcmask 15360
  %2752 = vst.msk [vmem:[%s13] sm:$0xff] %vm2751, %v2750
  // Predicated region
  $region54: #{model_forward.1} parent=0 // pred_check
    _
  $region55: #{model_forward.1} parent=0 // pred_check_branch
    %2754 = sbr.rel (0) target = $region57
  $region56: #{model_forward.1} parent=0 // pred_region
    _
  $region57: #{model_forward.1} parent=0 // pred_fallthru
    _
  // Predicated region
  $region58: #{model_forward.1} parent=0 // pred_check
    _
  $region59: #{model_forward.1} parent=0 // pred_check_branch
    %2756 = sbr.rel (0) target = $region61
  $region60: #{model_forward.1} parent=0 // pred_region
    _
  $region61: #{model_forward.1} parent=0 // pred_fallthru
    _

</llo_original>
